<compile_context>
chip_gen: v5e
topology: v5e:2x2
jax: 0.10.0
libtpu: 0.0.40
codegen_flags: <defaults>
</compile_context>

<pallas_src>
import functools

import jax
import jax.numpy as jnp
from jax.experimental import pallas as pl
from jax.experimental.pallas import tpu as pltpu


def _leaky(x, slope):
    # leaky_relu(x, slope) == max(x, slope*x) for slope < 1.
    return jnp.maximum(x, slope * x)


# ----------------------------- fused Pallas kernel ---------------------------


def gat_fused_kernel(x_ref, proj_ref, misc_ref, hmask_ref, bias_ref, fcw_ref,
                     out_ref, *, n_nodes, heads, f_out, n_cat, num_layers,
                     out_dim, att_slope, act_slope):
    n = n_nodes
    hf = heads * f_out          # 256
    nh = n_nodes * heads        # 64   (flat attention column = j*H + h)

    # Packed f32 constants (all 64-lane wide, sublane-aligned slices).
    neg_mask = misc_ref[0:n, :]                            # [N, NH]  0 / -1e30
    place = misc_ref[n:2 * n, :]                           # [N, NH]  d(i == j)
    seg = misc_ref[2 * n:2 * n + nh, :]                    # [NH, NH] d(h == h')
    rep = misc_ref[2 * n + nh:2 * n + 2 * nh, 0:n]         # [NH, N]  d(j == j')
    hmask = hmask_ref[...]                                 # [NH, HF] d(h == h')
    ones_nn = jnp.ones((n, n), jnp.float32)

    h = x_ref[...]                                         # [N, HF] bf16
    for l in range(num_layers):
        # One fused bf16 projection matmul: [ W | W@att_dst_exp | 0 | W@att_src_exp | 0 ]
        xdt = jnp.dot(h, proj_ref[l], preferred_element_type=jnp.float32)
        xp = xdt[:, :hf]                                   # x' = h @ W   [N, HF]
        d_log = xdt[:, hf:hf + nh]                         # a_dst_h(i) per col  [N, NH]
        t_log = xdt[:, hf + 2 * nh:hf + 3 * nh]            # a_src_h(i) per col  [N, NH]

        # src term: S[i, j*H+h] = a_src_h(j)  (place-mask + ones matmul, no transpose)
        s_log = jnp.dot(ones_nn, t_log * place,
                        preferred_element_type=jnp.float32)

        # attention logits -> masked softmax over neighbors j (per head h).
        e = _leaky(d_log + s_log, att_slope) + neg_mask
        m = jnp.max(e, axis=-1, keepdims=True)             # per-row max (shift-invariant)
        p = jnp.exp(e - m)
        denom = jnp.dot(p, seg, preferred_element_type=jnp.float32)
        alpha = p / denom                                  # [N, NH]

        # aggregation: out[i, h*F+f] = sum_j alpha[i, j*H+h] * xp[j, h*F+f]
        xp_big = jnp.dot(rep, xp, preferred_element_type=jnp.float32)   # [NH, HF]
        xp_big = xp_big * hmask
        agg = jnp.dot(alpha, xp_big, preferred_element_type=jnp.float32)

        # GATConv bias + fused model-level leaky_relu, cast once for next layer.
        act = _leaky(agg + bias_ref[l], act_slope)
        h = act.astype(jnp.bfloat16)

    # y = Linear(cat(x[0..n_cat-1]))  — lane-aligned concat + ONE matmul.
    hrow = jnp.concatenate([h[i:i + 1, :] for i in range(n_cat)], axis=1)
    y = jnp.dot(hrow, fcw_ref[...], preferred_element_type=jnp.float32)
    y = y + bias_ref[num_layers][:, :out_dim]
    out_ref[...] = y


# --------------------------------- wrappers -----------------------------------


def build_adj(edge_index, n):
    """edge_index [2,E] (row0=src j, row1=dst i) -> dense mask [N,N] + self-loops."""
    src, dst = edge_index[0], edge_index[1]
    adj = jnp.zeros((n, n), jnp.float32).at[dst, src].set(1.0)
    return jnp.maximum(adj, jnp.eye(n, dtype=jnp.float32))


def init_params(key, input_dim, hidden_dim, output_dim, num_heads, n_cat=5,
                num_layers=4):
    hf = hidden_dim * num_heads
    dims_in = [input_dim] + [hf] * (num_layers - 1)
    keys = jax.random.split(key, 4 * num_layers + 2)
    ki = 0
    convs = []
    for fin in dims_in:
        w = 0.1 * jax.random.normal(keys[ki], (fin, hf), jnp.float32); ki += 1
        att_src = 0.1 * jax.random.normal(
            keys[ki], (num_heads, hidden_dim), jnp.float32); ki += 1
        att_dst = 0.1 * jax.random.normal(
            keys[ki], (num_heads, hidden_dim), jnp.float32); ki += 1
        bias = 0.1 * jax.random.normal(keys[ki], (hf,), jnp.float32); ki += 1
        convs.append(dict(w=w, att_src=att_src, att_dst=att_dst, bias=bias))
    fc_in = n_cat * hf  # == 1280 for hidden_dim=32, heads=8, n_cat=5
    fc_w = 0.05 * jax.random.normal(keys[ki], (fc_in, output_dim), jnp.float32); ki += 1
    fc_b = 0.05 * jax.random.normal(keys[ki], (output_dim,), jnp.float32)
    return dict(convs=convs, fc_w=fc_w, fc_b=fc_b)


def pack_inputs(params, x, edge_index, *, hidden_dim, num_heads, n_cat):
    """Pack weights + graph into 6 launch-time arrays (was ~18 tiny DMAs)."""
    n = x.shape[0]
    f = hidden_dim
    hds = num_heads
    hf = hds * f
    nh = n * hds

    xcol_head = jnp.arange(hf) // f      # head owning each x' column
    fcol_head = jnp.arange(nh) % hds     # head of flat attention column j*H+h
    fcol_node = jnp.arange(nh) // hds    # node j of flat attention column

    # Per-layer fused projection [ W | W@attd_exp | 0 | W@atts_exp | 0 ]  (bf16)
    sel = (xcol_head[:, None] == fcol_head[None, :]).astype(jnp.float32)  # [HF,NH]
    proj_blocks, bias_rows = [], []
    for conv in params["convs"]:
        w = conv["w"].astype(jnp.float32)
        w_pad = jnp.zeros((hf, hf), jnp.float32).at[:w.shape[0], :].set(w)
        attd_exp = conv["att_dst"].reshape(-1)[:, None] * sel
        atts_exp = conv["att_src"].reshape(-1)[:, None] * sel
        z = jnp.zeros((hf, nh), jnp.float32)
        proj_blocks.append(jnp.concatenate(
            [w_pad, w_pad @ attd_exp, z, w_pad @ atts_exp, z], axis=1))
        bias_rows.append(conv["bias"].reshape(1, hf))
    proj_all = jnp.stack(proj_blocks).astype(jnp.bfloat16)        # [L, 256, 512]

    fc_b_row = jnp.zeros((1, hf), jnp.float32).at[0, :params["fc_b"].shape[0]].set(
        params["fc_b"])
    bias_all = jnp.stack(bias_rows + [fc_b_row])                  # [L+1, 1, 256]

    # Graph-dependent additive mask + small constant 0/1 matrices, one f32 pack.
    adj = build_adj(edge_index, n)
    neg_flat = jnp.repeat(jnp.where(adj > 0, 0.0, -1e30), hds, axis=1)        # [N,NH]
    place = (jnp.arange(n)[:, None] == fcol_node[None, :]).astype(jnp.float32)  # [N,NH]
    seg = (fcol_head[:, None] == fcol_head[None, :]).astype(jnp.float32)        # [NH,NH]
    rep = (fcol_node[:, None] == jnp.arange(n)[None, :]).astype(jnp.float32)    # [NH,N]
    rep_pad = jnp.zeros((nh, nh), jnp.float32).at[:, :n].set(rep)
    misc = jnp.concatenate([neg_flat, place, seg, rep_pad], axis=0)  # [2N+2NH, NH]

    hmask = (fcol_head[:, None] == xcol_head[None, :]).astype(jnp.float32)  # [NH,HF]

    x_pad = jnp.zeros((n, hf), jnp.float32).at[:, :x.shape[1]].set(x)
    return dict(x=x_pad.astype(jnp.bfloat16),
                proj=proj_all,
                misc=misc,
                hmask=hmask,
                bias=bias_all,
                fcw=params["fc_w"].astype(jnp.bfloat16))


def gat_forward(packed, *, n_nodes, hidden_dim, num_heads, n_cat, num_layers,
                out_dim):
    kernel = functools.partial(
        gat_fused_kernel, n_nodes=n_nodes, heads=num_heads, f_out=hidden_dim,
        n_cat=n_cat, num_layers=num_layers, out_dim=out_dim,
        att_slope=0.2, act_slope=0.2)
    vmem = pl.BlockSpec(memory_space=pltpu.MemorySpace.VMEM)
    inputs = [packed["x"], packed["proj"], packed["misc"], packed["hmask"],
              packed["bias"], packed["fcw"]]
    out = pl.pallas_call(
        kernel,
        out_shape=jax.ShapeDtypeStruct((1, out_dim), jnp.float32),
        in_specs=[vmem] * len(inputs),
        out_specs=vmem,
    )(*inputs)
    return out[0]  # [output_dim], matching the 1-D torch result


# Pure-JAX f32 reference (straight transcription of the PyTorch module).
def gat_reference(params, x, edge_index, *, hidden_dim, num_heads, n_cat):
    n = x.shape[0]
    f = hidden_dim
    adj = build_adj(edge_index, n)
    h = x.astype(jnp.float32)
    for conv in params["convs"]:
        xp = h @ conv["w"]
        outs = []
        for k in range(num_heads):
            xph = xp[:, k * f:(k + 1) * f]
            a_d = xph @ conv["att_dst"][k]
            a_s = xph @ conv["att_src"][k]
            e = a_s[None, :] + a_d[:, None]
            e = jnp.where(e >= 0, e, 0.2 * e)
            e = jnp.where(adj > 0, e, -1e30)
            e = e - jnp.max(e, axis=1, keepdims=True)
            p = jnp.exp(e)
            outs.append((p / jnp.sum(p, axis=1, keepdims=True)) @ xph)
        out = jnp.concatenate(outs, axis=1) + conv["bias"][None, :]
        h = jnp.where(out >= 0, out, 0.2 * out)
    hrow = jnp.concatenate([h[i] for i in range(n_cat)])
    return hrow @ params["fc_w"] + params["fc_b"]


# ----------------------------------- main -------------------------------------


if __name__ == "__main__":
    INPUT_DIM = 16
    HIDDEN_DIM = 32     # hidden_dim * num_heads * 5 must equal 1280 (fc input)
    NUM_HEADS = 8
    OUTPUT_DIM = 4
    N_NODES = 8
    N_CAT = 5
    NUM_LAYERS = 4

    key = jax.random.PRNGKey(0)
    k_param, k_x = jax.random.split(key)

    params = init_params(k_param, INPUT_DIM, HIDDEN_DIM, OUTPUT_DIM, NUM_HEADS,
                         n_cat=N_CAT, num_layers=NUM_LAYERS)
    x = jax.random.normal(k_x, (N_NODES, INPUT_DIM), jnp.float32)

    # Deterministic bidirectional ring graph on 8 nodes (GATConv adds self-loops).
    src = jnp.array([0, 1, 2, 3, 4, 5, 6, 7, 1, 2, 3, 4, 5, 6, 7, 0], jnp.int32)
    dst = jnp.array([1, 2, 3, 4, 5, 6, 7, 0, 0, 1, 2, 3, 4, 5, 6, 7], jnp.int32)
    edge_index = jnp.stack([src, dst])

    packed = pack_inputs(params, x, edge_index, hidden_dim=HIDDEN_DIM,
                         num_heads=NUM_HEADS, n_cat=N_CAT)
    out = gat_forward(packed, n_nodes=N_NODES, hidden_dim=HIDDEN_DIM,
                      num_heads=NUM_HEADS, n_cat=N_CAT, num_layers=NUM_LAYERS,
                      out_dim=OUTPUT_DIM)
    out = jax.block_until_ready(out)

    assert out.shape == (OUTPUT_DIM,)
    assert bool(jnp.all(jnp.isfinite(out)))

    # Loose tolerance: kernel uses bf16 operands for the projection matmuls.
    ref = gat_reference(params, x, edge_index, hidden_dim=HIDDEN_DIM,
                        num_heads=NUM_HEADS, n_cat=N_CAT)
    rel = float(jnp.linalg.norm(out - ref) / (jnp.linalg.norm(ref) + 1e-6))
    assert rel < 0.1, f"kernel/reference mismatch: rel={rel}"

    print("KERNEL_OK")
</pallas_src>

<mosaic_0001>
module attributes {stable_mosaic.version = 11 : i64} {
  func.func @gat_fused_kernel(%arg0: memref<8x256xbf16, #tpu.memory_space<vmem>>, %arg1: memref<4x256x512xbf16, #tpu.memory_space<vmem>>, %arg2: memref<144x64xf32, #tpu.memory_space<vmem>>, %arg3: memref<64x256xf32, #tpu.memory_space<vmem>>, %arg4: memref<5x1x256xf32, #tpu.memory_space<vmem>>, %arg5: memref<1280x4xbf16, #tpu.memory_space<vmem>>, %arg6: memref<1x4xf32, #tpu.memory_space<vmem>>) attributes {dimension_semantics = [], scalar_prefetch = 0 : i64, scratch_operands = 0 : i64, tpu.core_type = #tpu.core_type<tc>} {
    %c0 = arith.constant 0 : index
    %c0_0 = arith.constant 0 : index
    %0 = vector.load %arg2[%c0, %c0_0] : memref<144x64xf32, #tpu.memory_space<vmem>>, vector<8x64xf32>
    %c8 = arith.constant 8 : index
    %c0_1 = arith.constant 0 : index
    %1 = vector.load %arg2[%c8, %c0_1] : memref<144x64xf32, #tpu.memory_space<vmem>>, vector<8x64xf32>
    %c16 = arith.constant 16 : index
    %c0_2 = arith.constant 0 : index
    %2 = vector.load %arg2[%c16, %c0_2] : memref<144x64xf32, #tpu.memory_space<vmem>>, vector<64x64xf32>
    %c80 = arith.constant 80 : index
    %c0_3 = arith.constant 0 : index
    %3 = vector.load %arg2[%c80, %c0_3] : memref<144x64xf32, #tpu.memory_space<vmem>>, vector<64x8xf32>
    %c0_4 = arith.constant 0 : index
    %c0_5 = arith.constant 0 : index
    %4 = vector.load %arg3[%c0_4, %c0_5] : memref<64x256xf32, #tpu.memory_space<vmem>>, vector<64x256xf32>
    %cst = arith.constant 1.000000e+00 : f32
    %5 = vector.broadcast %cst : f32 to vector<8x8xf32>
    %c0_6 = arith.constant 0 : index
    %c0_7 = arith.constant 0 : index
    %6 = vector.load %arg0[%c0_6, %c0_7] : memref<8x256xbf16, #tpu.memory_space<vmem>>, vector<8x256xbf16>
    %c0_8 = arith.constant 0 : index
    %c0_9 = arith.constant 0 : index
    %c0_10 = arith.constant 0 : index
    %7 = vector.load %arg1[%c0_8, %c0_9, %c0_10] : memref<4x256x512xbf16, #tpu.memory_space<vmem>>, vector<1x256x512xbf16>
    %8 = vector.shape_cast %7 : vector<1x256x512xbf16> to vector<256x512xbf16>
    %cst_11 = arith.constant dense<0.000000e+00> : vector<8x512xf32>
    %9 = tpu.matmul %6, %8, %cst_11 {dimension_numbers = #tpu.dot_dimension_numbers<[1], [0], [0], [1], [0, 0, 1, 1], [], []>} : vector<8x256xbf16>, vector<256x512xbf16>, vector<8x512xf32> -> vector<8x512xf32>
    %10 = vector.extract_strided_slice %9 {offsets = [0, 0], sizes = [8, 256], strides = [1, 1]} : vector<8x512xf32> to vector<8x256xf32>
    %11 = vector.extract_strided_slice %9 {offsets = [0, 256], sizes = [8, 64], strides = [1, 1]} : vector<8x512xf32> to vector<8x64xf32>
    %12 = vector.extract_strided_slice %9 {offsets = [0, 384], sizes = [8, 64], strides = [1, 1]} : vector<8x512xf32> to vector<8x64xf32>
    %13 = arith.mulf %12, %1 : vector<8x64xf32>
    %cst_12 = arith.constant dense<0.000000e+00> : vector<8x64xf32>
    %14 = tpu.matmul %5, %13, %cst_12 {dimension_numbers = #tpu.dot_dimension_numbers<[1], [0], [0], [1], [0, 0, 1, 1], [], []>} : vector<8x8xf32>, vector<8x64xf32>, vector<8x64xf32> -> vector<8x64xf32>
    %15 = arith.addf %11, %14 : vector<8x64xf32>
    %cst_13 = arith.constant 2.000000e-01 : f32
    %16 = vector.broadcast %cst_13 : f32 to vector<8x64xf32>
    %17 = arith.mulf %16, %15 : vector<8x64xf32>
    %18 = arith.maximumf %15, %17 : vector<8x64xf32>
    %19 = arith.addf %18, %0 : vector<8x64xf32>
    %cst_14 = arith.constant dense<0xFF800000> : vector<8xf32>
    %20 = vector.multi_reduction <maximumf>, %19, %cst_14 [1] : vector<8x64xf32> to vector<8xf32>
    %21 = vector.shape_cast %20 : vector<8xf32> to vector<8x1xf32>
    %22 = vector.broadcast %21 : vector<8x1xf32> to vector<8x64xf32>
    %23 = arith.subf %19, %22 : vector<8x64xf32>
    %24 = math.exp %23 : vector<8x64xf32>
    %cst_15 = arith.constant dense<0.000000e+00> : vector<8x64xf32>
    %25 = tpu.matmul %24, %2, %cst_15 {dimension_numbers = #tpu.dot_dimension_numbers<[1], [0], [0], [1], [0, 0, 1, 1], [], []>} : vector<8x64xf32>, vector<64x64xf32>, vector<8x64xf32> -> vector<8x64xf32>
    %26 = arith.divf %24, %25 : vector<8x64xf32>
    %cst_16 = arith.constant dense<0.000000e+00> : vector<64x256xf32>
    %27 = tpu.matmul %3, %10, %cst_16 {dimension_numbers = #tpu.dot_dimension_numbers<[1], [0], [0], [1], [0, 0, 1, 1], [], []>} : vector<64x8xf32>, vector<8x256xf32>, vector<64x256xf32> -> vector<64x256xf32>
    %28 = arith.mulf %27, %4 : vector<64x256xf32>
    %cst_17 = arith.constant dense<0.000000e+00> : vector<8x256xf32>
    %29 = tpu.matmul %26, %28, %cst_17 {dimension_numbers = #tpu.dot_dimension_numbers<[1], [0], [0], [1], [0, 0, 1, 1], [], []>} : vector<8x64xf32>, vector<64x256xf32>, vector<8x256xf32> -> vector<8x256xf32>
    %c0_18 = arith.constant 0 : index
    %c0_19 = arith.constant 0 : index
    %c0_20 = arith.constant 0 : index
    %30 = vector.load %arg4[%c0_18, %c0_19, %c0_20] : memref<5x1x256xf32, #tpu.memory_space<vmem>>, vector<1x1x256xf32>
    %31 = vector.shape_cast %30 : vector<1x1x256xf32> to vector<1x256xf32>
    %32 = vector.broadcast %31 : vector<1x256xf32> to vector<8x256xf32>
    %33 = arith.addf %29, %32 : vector<8x256xf32>
    %cst_21 = arith.constant 2.000000e-01 : f32
    %34 = vector.broadcast %cst_21 : f32 to vector<8x256xf32>
    %35 = arith.mulf %34, %33 : vector<8x256xf32>
    %36 = arith.maximumf %33, %35 : vector<8x256xf32>
    %37 = arith.truncf %36 : vector<8x256xf32> to vector<8x256xbf16>
    %c1 = arith.constant 1 : index
    %c0_22 = arith.constant 0 : index
    %c0_23 = arith.constant 0 : index
    %38 = vector.load %arg1[%c1, %c0_22, %c0_23] : memref<4x256x512xbf16, #tpu.memory_space<vmem>>, vector<1x256x512xbf16>
    %39 = vector.shape_cast %38 : vector<1x256x512xbf16> to vector<256x512xbf16>
    %cst_24 = arith.constant dense<0.000000e+00> : vector<8x512xf32>
    %40 = tpu.matmul %37, %39, %cst_24 {dimension_numbers = #tpu.dot_dimension_numbers<[1], [0], [0], [1], [0, 0, 1, 1], [], []>} : vector<8x256xbf16>, vector<256x512xbf16>, vector<8x512xf32> -> vector<8x512xf32>
    %41 = vector.extract_strided_slice %40 {offsets = [0, 0], sizes = [8, 256], strides = [1, 1]} : vector<8x512xf32> to vector<8x256xf32>
    %42 = vector.extract_strided_slice %40 {offsets = [0, 256], sizes = [8, 64], strides = [1, 1]} : vector<8x512xf32> to vector<8x64xf32>
    %43 = vector.extract_strided_slice %40 {offsets = [0, 384], sizes = [8, 64], strides = [1, 1]} : vector<8x512xf32> to vector<8x64xf32>
    %44 = arith.mulf %43, %1 : vector<8x64xf32>
    %cst_25 = arith.constant dense<0.000000e+00> : vector<8x64xf32>
    %45 = tpu.matmul %5, %44, %cst_25 {dimension_numbers = #tpu.dot_dimension_numbers<[1], [0], [0], [1], [0, 0, 1, 1], [], []>} : vector<8x8xf32>, vector<8x64xf32>, vector<8x64xf32> -> vector<8x64xf32>
    %46 = arith.addf %42, %45 : vector<8x64xf32>
    %cst_26 = arith.constant 2.000000e-01 : f32
    %47 = vector.broadcast %cst_26 : f32 to vector<8x64xf32>
    %48 = arith.mulf %47, %46 : vector<8x64xf32>
    %49 = arith.maximumf %46, %48 : vector<8x64xf32>
    %50 = arith.addf %49, %0 : vector<8x64xf32>
    %cst_27 = arith.constant dense<0xFF800000> : vector<8xf32>
    %51 = vector.multi_reduction <maximumf>, %50, %cst_27 [1] : vector<8x64xf32> to vector<8xf32>
    %52 = vector.shape_cast %51 : vector<8xf32> to vector<8x1xf32>
    %53 = vector.broadcast %52 : vector<8x1xf32> to vector<8x64xf32>
    %54 = arith.subf %50, %53 : vector<8x64xf32>
    %55 = math.exp %54 : vector<8x64xf32>
    %cst_28 = arith.constant dense<0.000000e+00> : vector<8x64xf32>
    %56 = tpu.matmul %55, %2, %cst_28 {dimension_numbers = #tpu.dot_dimension_numbers<[1], [0], [0], [1], [0, 0, 1, 1], [], []>} : vector<8x64xf32>, vector<64x64xf32>, vector<8x64xf32> -> vector<8x64xf32>
    %57 = arith.divf %55, %56 : vector<8x64xf32>
    %cst_29 = arith.constant dense<0.000000e+00> : vector<64x256xf32>
    %58 = tpu.matmul %3, %41, %cst_29 {dimension_numbers = #tpu.dot_dimension_numbers<[1], [0], [0], [1], [0, 0, 1, 1], [], []>} : vector<64x8xf32>, vector<8x256xf32>, vector<64x256xf32> -> vector<64x256xf32>
    %59 = arith.mulf %58, %4 : vector<64x256xf32>
    %cst_30 = arith.constant dense<0.000000e+00> : vector<8x256xf32>
    %60 = tpu.matmul %57, %59, %cst_30 {dimension_numbers = #tpu.dot_dimension_numbers<[1], [0], [0], [1], [0, 0, 1, 1], [], []>} : vector<8x64xf32>, vector<64x256xf32>, vector<8x256xf32> -> vector<8x256xf32>
    %c1_31 = arith.constant 1 : index
    %c0_32 = arith.constant 0 : index
    %c0_33 = arith.constant 0 : index
    %61 = vector.load %arg4[%c1_31, %c0_32, %c0_33] : memref<5x1x256xf32, #tpu.memory_space<vmem>>, vector<1x1x256xf32>
    %62 = vector.shape_cast %61 : vector<1x1x256xf32> to vector<1x256xf32>
    %63 = vector.broadcast %62 : vector<1x256xf32> to vector<8x256xf32>
    %64 = arith.addf %60, %63 : vector<8x256xf32>
    %cst_34 = arith.constant 2.000000e-01 : f32
    %65 = vector.broadcast %cst_34 : f32 to vector<8x256xf32>
    %66 = arith.mulf %65, %64 : vector<8x256xf32>
    %67 = arith.maximumf %64, %66 : vector<8x256xf32>
    %68 = arith.truncf %67 : vector<8x256xf32> to vector<8x256xbf16>
    %c2 = arith.constant 2 : index
    %c0_35 = arith.constant 0 : index
    %c0_36 = arith.constant 0 : index
    %69 = vector.load %arg1[%c2, %c0_35, %c0_36] : memref<4x256x512xbf16, #tpu.memory_space<vmem>>, vector<1x256x512xbf16>
    %70 = vector.shape_cast %69 : vector<1x256x512xbf16> to vector<256x512xbf16>
    %cst_37 = arith.constant dense<0.000000e+00> : vector<8x512xf32>
    %71 = tpu.matmul %68, %70, %cst_37 {dimension_numbers = #tpu.dot_dimension_numbers<[1], [0], [0], [1], [0, 0, 1, 1], [], []>} : vector<8x256xbf16>, vector<256x512xbf16>, vector<8x512xf32> -> vector<8x512xf32>
    %72 = vector.extract_strided_slice %71 {offsets = [0, 0], sizes = [8, 256], strides = [1, 1]} : vector<8x512xf32> to vector<8x256xf32>
    %73 = vector.extract_strided_slice %71 {offsets = [0, 256], sizes = [8, 64], strides = [1, 1]} : vector<8x512xf32> to vector<8x64xf32>
    %74 = vector.extract_strided_slice %71 {offsets = [0, 384], sizes = [8, 64], strides = [1, 1]} : vector<8x512xf32> to vector<8x64xf32>
    %75 = arith.mulf %74, %1 : vector<8x64xf32>
    %cst_38 = arith.constant dense<0.000000e+00> : vector<8x64xf32>
    %76 = tpu.matmul %5, %75, %cst_38 {dimension_numbers = #tpu.dot_dimension_numbers<[1], [0], [0], [1], [0, 0, 1, 1], [], []>} : vector<8x8xf32>, vector<8x64xf32>, vector<8x64xf32> -> vector<8x64xf32>
    %77 = arith.addf %73, %76 : vector<8x64xf32>
    %cst_39 = arith.constant 2.000000e-01 : f32
    %78 = vector.broadcast %cst_39 : f32 to vector<8x64xf32>
    %79 = arith.mulf %78, %77 : vector<8x64xf32>
    %80 = arith.maximumf %77, %79 : vector<8x64xf32>
    %81 = arith.addf %80, %0 : vector<8x64xf32>
    %cst_40 = arith.constant dense<0xFF800000> : vector<8xf32>
    %82 = vector.multi_reduction <maximumf>, %81, %cst_40 [1] : vector<8x64xf32> to vector<8xf32>
    %83 = vector.shape_cast %82 : vector<8xf32> to vector<8x1xf32>
    %84 = vector.broadcast %83 : vector<8x1xf32> to vector<8x64xf32>
    %85 = arith.subf %81, %84 : vector<8x64xf32>
    %86 = math.exp %85 : vector<8x64xf32>
    %cst_41 = arith.constant dense<0.000000e+00> : vector<8x64xf32>
    %87 = tpu.matmul %86, %2, %cst_41 {dimension_numbers = #tpu.dot_dimension_numbers<[1], [0], [0], [1], [0, 0, 1, 1], [], []>} : vector<8x64xf32>, vector<64x64xf32>, vector<8x64xf32> -> vector<8x64xf32>
    %88 = arith.divf %86, %87 : vector<8x64xf32>
    %cst_42 = arith.constant dense<0.000000e+00> : vector<64x256xf32>
    %89 = tpu.matmul %3, %72, %cst_42 {dimension_numbers = #tpu.dot_dimension_numbers<[1], [0], [0], [1], [0, 0, 1, 1], [], []>} : vector<64x8xf32>, vector<8x256xf32>, vector<64x256xf32> -> vector<64x256xf32>
    %90 = arith.mulf %89, %4 : vector<64x256xf32>
    %cst_43 = arith.constant dense<0.000000e+00> : vector<8x256xf32>
    %91 = tpu.matmul %88, %90, %cst_43 {dimension_numbers = #tpu.dot_dimension_numbers<[1], [0], [0], [1], [0, 0, 1, 1], [], []>} : vector<8x64xf32>, vector<64x256xf32>, vector<8x256xf32> -> vector<8x256xf32>
    %c2_44 = arith.constant 2 : index
    %c0_45 = arith.constant 0 : index
    %c0_46 = arith.constant 0 : index
    %92 = vector.load %arg4[%c2_44, %c0_45, %c0_46] : memref<5x1x256xf32, #tpu.memory_space<vmem>>, vector<1x1x256xf32>
    %93 = vector.shape_cast %92 : vector<1x1x256xf32> to vector<1x256xf32>
    %94 = vector.broadcast %93 : vector<1x256xf32> to vector<8x256xf32>
    %95 = arith.addf %91, %94 : vector<8x256xf32>
    %cst_47 = arith.constant 2.000000e-01 : f32
    %96 = vector.broadcast %cst_47 : f32 to vector<8x256xf32>
    %97 = arith.mulf %96, %95 : vector<8x256xf32>
    %98 = arith.maximumf %95, %97 : vector<8x256xf32>
    %99 = arith.truncf %98 : vector<8x256xf32> to vector<8x256xbf16>
    %c3 = arith.constant 3 : index
    %c0_48 = arith.constant 0 : index
    %c0_49 = arith.constant 0 : index
    %100 = vector.load %arg1[%c3, %c0_48, %c0_49] : memref<4x256x512xbf16, #tpu.memory_space<vmem>>, vector<1x256x512xbf16>
    %101 = vector.shape_cast %100 : vector<1x256x512xbf16> to vector<256x512xbf16>
    %cst_50 = arith.constant dense<0.000000e+00> : vector<8x512xf32>
    %102 = tpu.matmul %99, %101, %cst_50 {dimension_numbers = #tpu.dot_dimension_numbers<[1], [0], [0], [1], [0, 0, 1, 1], [], []>} : vector<8x256xbf16>, vector<256x512xbf16>, vector<8x512xf32> -> vector<8x512xf32>
    %103 = vector.extract_strided_slice %102 {offsets = [0, 0], sizes = [8, 256], strides = [1, 1]} : vector<8x512xf32> to vector<8x256xf32>
    %104 = vector.extract_strided_slice %102 {offsets = [0, 256], sizes = [8, 64], strides = [1, 1]} : vector<8x512xf32> to vector<8x64xf32>
    %105 = vector.extract_strided_slice %102 {offsets = [0, 384], sizes = [8, 64], strides = [1, 1]} : vector<8x512xf32> to vector<8x64xf32>
    %106 = arith.mulf %105, %1 : vector<8x64xf32>
    %cst_51 = arith.constant dense<0.000000e+00> : vector<8x64xf32>
    %107 = tpu.matmul %5, %106, %cst_51 {dimension_numbers = #tpu.dot_dimension_numbers<[1], [0], [0], [1], [0, 0, 1, 1], [], []>} : vector<8x8xf32>, vector<8x64xf32>, vector<8x64xf32> -> vector<8x64xf32>
    %108 = arith.addf %104, %107 : vector<8x64xf32>
    %cst_52 = arith.constant 2.000000e-01 : f32
    %109 = vector.broadcast %cst_52 : f32 to vector<8x64xf32>
    %110 = arith.mulf %109, %108 : vector<8x64xf32>
    %111 = arith.maximumf %108, %110 : vector<8x64xf32>
    %112 = arith.addf %111, %0 : vector<8x64xf32>
    %cst_53 = arith.constant dense<0xFF800000> : vector<8xf32>
    %113 = vector.multi_reduction <maximumf>, %112, %cst_53 [1] : vector<8x64xf32> to vector<8xf32>
    %114 = vector.shape_cast %113 : vector<8xf32> to vector<8x1xf32>
    %115 = vector.broadcast %114 : vector<8x1xf32> to vector<8x64xf32>
    %116 = arith.subf %112, %115 : vector<8x64xf32>
    %117 = math.exp %116 : vector<8x64xf32>
    %cst_54 = arith.constant dense<0.000000e+00> : vector<8x64xf32>
    %118 = tpu.matmul %117, %2, %cst_54 {dimension_numbers = #tpu.dot_dimension_numbers<[1], [0], [0], [1], [0, 0, 1, 1], [], []>} : vector<8x64xf32>, vector<64x64xf32>, vector<8x64xf32> -> vector<8x64xf32>
    %119 = arith.divf %117, %118 : vector<8x64xf32>
    %cst_55 = arith.constant dense<0.000000e+00> : vector<64x256xf32>
    %120 = tpu.matmul %3, %103, %cst_55 {dimension_numbers = #tpu.dot_dimension_numbers<[1], [0], [0], [1], [0, 0, 1, 1], [], []>} : vector<64x8xf32>, vector<8x256xf32>, vector<64x256xf32> -> vector<64x256xf32>
    %121 = arith.mulf %120, %4 : vector<64x256xf32>
    %cst_56 = arith.constant dense<0.000000e+00> : vector<8x256xf32>
    %122 = tpu.matmul %119, %121, %cst_56 {dimension_numbers = #tpu.dot_dimension_numbers<[1], [0], [0], [1], [0, 0, 1, 1], [], []>} : vector<8x64xf32>, vector<64x256xf32>, vector<8x256xf32> -> vector<8x256xf32>
    %c3_57 = arith.constant 3 : index
    %c0_58 = arith.constant 0 : index
    %c0_59 = arith.constant 0 : index
    %123 = vector.load %arg4[%c3_57, %c0_58, %c0_59] : memref<5x1x256xf32, #tpu.memory_space<vmem>>, vector<1x1x256xf32>
    %124 = vector.shape_cast %123 : vector<1x1x256xf32> to vector<1x256xf32>
    %125 = vector.broadcast %124 : vector<1x256xf32> to vector<8x256xf32>
    %126 = arith.addf %122, %125 : vector<8x256xf32>
    %cst_60 = arith.constant 2.000000e-01 : f32
    %127 = vector.broadcast %cst_60 : f32 to vector<8x256xf32>
    %128 = arith.mulf %127, %126 : vector<8x256xf32>
    %129 = arith.maximumf %126, %128 : vector<8x256xf32>
    %130 = arith.truncf %129 : vector<8x256xf32> to vector<8x256xbf16>
    %131 = vector.extract_strided_slice %130 {offsets = [0, 0], sizes = [1, 256], strides = [1, 1]} : vector<8x256xbf16> to vector<1x256xbf16>
    %132 = vector.extract_strided_slice %130 {offsets = [1, 0], sizes = [1, 256], strides = [1, 1]} : vector<8x256xbf16> to vector<1x256xbf16>
    %133 = vector.extract_strided_slice %130 {offsets = [2, 0], sizes = [1, 256], strides = [1, 1]} : vector<8x256xbf16> to vector<1x256xbf16>
    %134 = vector.extract_strided_slice %130 {offsets = [3, 0], sizes = [1, 256], strides = [1, 1]} : vector<8x256xbf16> to vector<1x256xbf16>
    %135 = vector.extract_strided_slice %130 {offsets = [4, 0], sizes = [1, 256], strides = [1, 1]} : vector<8x256xbf16> to vector<1x256xbf16>
    %136 = tpu.concatenate %131, %132, %133, %134, %135 in 1 : vector<1x256xbf16>, vector<1x256xbf16>, vector<1x256xbf16>, vector<1x256xbf16>, vector<1x256xbf16> -> vector<1x1280xbf16>
    %c0_61 = arith.constant 0 : index
    %c0_62 = arith.constant 0 : index
    %137 = vector.load %arg5[%c0_61, %c0_62] : memref<1280x4xbf16, #tpu.memory_space<vmem>>, vector<1280x4xbf16>
    %cst_63 = arith.constant dense<0.000000e+00> : vector<1x4xf32>
    %138 = tpu.matmul %136, %137, %cst_63 {dimension_numbers = #tpu.dot_dimension_numbers<[1], [0], [0], [1], [0, 0, 1, 1], [], []>} : vector<1x1280xbf16>, vector<1280x4xbf16>, vector<1x4xf32> -> vector<1x4xf32>
    %c4 = arith.constant 4 : index
    %c0_64 = arith.constant 0 : index
    %c0_65 = arith.constant 0 : index
    %139 = vector.load %arg4[%c4, %c0_64, %c0_65] : memref<5x1x256xf32, #tpu.memory_space<vmem>>, vector<1x1x256xf32>
    %140 = vector.shape_cast %139 : vector<1x1x256xf32> to vector<1x256xf32>
    %141 = vector.extract_strided_slice %140 {offsets = [0, 0], sizes = [1, 4], strides = [1, 1]} : vector<1x256xf32> to vector<1x4xf32>
    %142 = arith.addf %138, %141 : vector<1x4xf32>
    %c0_66 = arith.constant 0 : index
    %c0_67 = arith.constant 0 : index
    %143 = vector.load %arg6[%c0_66, %c0_67] : memref<1x4xf32, #tpu.memory_space<vmem>>, vector<1x4xf32>
    tpu.vector_store %arg6[%c0_66, %c0_67], %142 {strides = array<i32>} : memref<1x4xf32, #tpu.memory_space<vmem>>, vector<1x4xf32>,
    return
  }
}

</mosaic_0001>

<llo_original>
// kernel: tpu_custom_call.1
$region0: #{tpu_custom_call.1}
  #allocation0 [shape = 'u32[]', space=smem, size = 0x4, offset = 0x4, fixed_abs, tag = 'smem constant byte address 0x4 - core index']
  #allocation1 [shape = 'u32[72,128]{1,0:T(1,128)}', space=vmem, size = 0x9000, scoped, tag = 'internal scratch']
  %s0 = inlined_call_operand.vmem [shape: bf16[8,256], index: 0, kind: input, shape index: {}]
  %s1 = inlined_call_operand.hbm [shape: bf16[4,256,512], index: 1, kind: input, shape index: {}]
  %s2 = inlined_call_operand.vmem [shape: f32[144,64], index: 2, kind: input, shape index: {}]
  %s3 = inlined_call_operand.vmem [shape: f32[64,256], index: 3, kind: input, shape index: {}]
  %s4 = inlined_call_operand.vmem [shape: f32[5,1,256], index: 4, kind: input, shape index: {}]
  %s5 = inlined_call_operand.vmem [shape: bf16[1280,4], index: 5, kind: input, shape index: {}]
  %s6 = inlined_call_operand.hbm [shape: f32[1,4], index: 6, kind: output, shape index: {}]
  %s7 = sld [smem:[#allocation0]]
  $region38: #{tpu_custom_call.1} parent=0
    _
  %s9 = ssub.s32 1, %s7
  %s10 = scalar_select 0, %s9, %s7
  $region1: #{tpu_custom_call.1} parent=0
    #allocation2 [shape = 'u8[1048576]{0}', space=vmem, size = 0x100000, scoped, tag = 'input window, operand 1, single buffered']
    #allocation3 [shape = 's32[1]{0}', space=sflag, size = 0x4, scoped, tag = 'scoped memory for tpu_custom_call.1']
    #allocation4 [shape = 's32[1]{0}', space=sflag, size = 0x4, scoped, tag = 'scoped memory for tpu_custom_call.1']
    #allocation5 [shape = 'u8[512]{0}', space=vmem, size = 0x400, scoped, tag = 'output window, operand 0, single buffered']
    %11 = vsyncpa [#allocation3], 0
    %12 = vsyncpa [#allocation4], 0
    // Predicated region
    $region2: #{tpu_custom_call.1} parent=1 // pred_check
      _
    $region3: #{tpu_custom_call.1} parent=1 // pred_check_branch
      %14 = sbr.rel (0) target = $region5
    $region4: #{tpu_custom_call.1} parent=1 // pred_region
      _
    $region5: #{tpu_custom_call.1} parent=1 // pred_fallthru
      _
    // Predicated region
    $region6: #{tpu_custom_call.1} parent=1 // pred_check
      _
    $region7: #{tpu_custom_call.1} parent=1 // pred_check_branch
      %16 = sbr.rel (0) target = $region9
    $region8: #{tpu_custom_call.1} parent=1 // pred_region
      %18 = vsyncadd [#allocation3], 0
      %s19 = sshll.u32 %s1, 4
      %s20 = int_to_ptr.hbm [resolvable:$true] %s19
      %s21 = sshll.u32 [#allocation2], 4
      %s22 = int_to_ptr.vmem [resolvable:$true] %s21
      %27 = dma.hbm_to_vmem [thread:$0]  %s20, 32768, %s22, [#allocation3], 256, 256, 16
    $region9: #{tpu_custom_call.1} parent=1 // pred_fallthru
      _
    // Predicated region
    $region10: #{tpu_custom_call.1} parent=1 // pred_check
      _
    $region11: #{tpu_custom_call.1} parent=1 // pred_check_branch
      %29 = sbr.rel (0) target = $region13
    $region12: #{tpu_custom_call.1} parent=1 // pred_region
      _
    $region13: #{tpu_custom_call.1} parent=1 // pred_fallthru
      _
    // Predicated region
    $region14: #{tpu_custom_call.1} parent=1 // pred_check
      _
    $region15: #{tpu_custom_call.1} parent=1 // pred_check_branch
      %31 = sbr.rel (0) target = $region17
    $region16: #{tpu_custom_call.1} parent=1 // pred_region
      _
    $region17: #{tpu_custom_call.1} parent=1 // pred_fallthru
      _
    // Predicated region
    $region18: #{tpu_custom_call.1} parent=1 // pred_check
      _
    $region19: #{tpu_custom_call.1} parent=1 // pred_check_branch
      %33 = sbr.rel (0) target = $region21
    $region20: #{tpu_custom_call.1} parent=1 // pred_region
      _
    $region21: #{tpu_custom_call.1} parent=1 // pred_fallthru
      _
    // Predicated region
    $region22: #{tpu_custom_call.1} parent=1 // pred_check
      _
    $region23: #{tpu_custom_call.1} parent=1 // pred_check_branch
      %35 = sbr.rel (0) target = $region25
    $region24: #{tpu_custom_call.1} parent=1 // pred_region
      _
    $region25: #{tpu_custom_call.1} parent=1 // pred_fallthru
      _
    // Predicated region
    $region26: #{tpu_custom_call.1} parent=1 // pred_check
      _
    $region27: #{tpu_custom_call.1} parent=1 // pred_check_branch
      %37 = sbr.rel (0) target = $region29
    $region28: #{tpu_custom_call.1} parent=1 // pred_region
      %39 = dma.done [#allocation3], 32768
    $region29: #{tpu_custom_call.1} parent=1 // pred_fallthru
      _
    %v40 = vld [vmem:[%s2] sm:$0xff]
    %v41 = vld [vmem:[%s2 + $0x8] sm:$0xff]
    %v42 = vld [vmem:[%s2 + $0x10] sm:$0xff]
    %v43 = vld [vmem:[%s2 + $0x18] sm:$0xff]
    %v44 = vld [vmem:[%s2 + $0x20] sm:$0xff]
    %v45 = vld [vmem:[%s2 + $0x28] sm:$0xff]
    %v46 = vld [vmem:[%s2 + $0x30] sm:$0xff]
    %v47 = vld [vmem:[%s2 + $0x38] sm:$0xff]
    %v48 = vld [vmem:[%s2 + $0x40] sm:$0xff]
    %v49 = vld [vmem:[%s2 + $0x48] sm:$0xff]
    %v50 = vld [vmem:[%s2 + $0x50] sm:$0xff]
    %v51 = vld [vmem:[%s2 + $0x58] sm:$0xff]
    %v52 = vld [vmem:[%s2 + $0x60] sm:$0xff]
    %v53 = vld [vmem:[%s2 + $0x68] sm:$0xff]
    %v54 = vld [vmem:[%s2 + $0x70] sm:$0xff]
    %v55 = vld [vmem:[%s2 + $0x78] sm:$0xff]
    %v56 = vld [vmem:[%s2 + $0x80] sm:$0xff]
    %v57 = vld [vmem:[%s2 + $0x88] sm:$0xff]
    %v58 = vld [vmem:[%s3] sm:$0xff]
    %v59 = vld [vmem:[%s3 + $0x8] sm:$0xff]
    %v60 = vld [vmem:[%s3 + $0x10] sm:$0xff]
    %v61 = vld [vmem:[%s3 + $0x18] sm:$0xff]
    %v62 = vld [vmem:[%s3 + $0x20] sm:$0xff]
    %v63 = vld [vmem:[%s3 + $0x28] sm:$0xff]
    %v64 = vld [vmem:[%s3 + $0x30] sm:$0xff]
    %v65 = vld [vmem:[%s3 + $0x38] sm:$0xff]
    %v66 = vld [vmem:[%s3 + $0x40] sm:$0xff]
    %v67 = vld [vmem:[%s3 + $0x48] sm:$0xff]
    %v68 = vld [vmem:[%s3 + $0x50] sm:$0xff]
    %v69 = vld [vmem:[%s3 + $0x58] sm:$0xff]
    %v70 = vld [vmem:[%s3 + $0x60] sm:$0xff]
    %v71 = vld [vmem:[%s3 + $0x68] sm:$0xff]
    %v72 = vld [vmem:[%s3 + $0x70] sm:$0xff]
    %v73 = vld [vmem:[%s3 + $0x78] sm:$0xff]
    %v74 = vld [vmem:[%s0] sm:$0xff]
    %v75 = vld [vmem:[#allocation2] sm:$0xff]
    %v76 = vld [vmem:[#allocation2 + $0x8] sm:$0xff]
    %v77 = vld [vmem:[#allocation2 + $0x10] sm:$0xff]
    %v78 = vld [vmem:[#allocation2 + $0x18] sm:$0xff]
    %v79 = vld [vmem:[#allocation2 + $0x20] sm:$0xff]
    %v80 = vld [vmem:[#allocation2 + $0x28] sm:$0xff]
    %v81 = vld [vmem:[#allocation2 + $0x30] sm:$0xff]
    %v82 = vld [vmem:[#allocation2 + $0x38] sm:$0xff]
    %v83 = vld [vmem:[#allocation2 + $0x40] sm:$0xff]
    %v84 = vld [vmem:[#allocation2 + $0x48] sm:$0xff]
    %v85 = vld [vmem:[#allocation2 + $0x50] sm:$0xff]
    %v86 = vld [vmem:[#allocation2 + $0x58] sm:$0xff]
    %v87 = vld [vmem:[#allocation2 + $0x60] sm:$0xff]
    %v88 = vld [vmem:[#allocation2 + $0x68] sm:$0xff]
    %v89 = vld [vmem:[#allocation2 + $0x70] sm:$0xff]
    %v90 = vld [vmem:[#allocation2 + $0x78] sm:$0xff]
    %v91 = vld [vmem:[#allocation2 + $0x80] sm:$0xff]
    %v92 = vld [vmem:[#allocation2 + $0x88] sm:$0xff]
    %v93 = vld [vmem:[#allocation2 + $0x90] sm:$0xff]
    %v94 = vld [vmem:[#allocation2 + $0x98] sm:$0xff]
    %v95 = vld [vmem:[#allocation2 + $0xa0] sm:$0xff]
    %v96 = vld [vmem:[#allocation2 + $0xa8] sm:$0xff]
    %v97 = vld [vmem:[#allocation2 + $0xb0] sm:$0xff]
    %v98 = vld [vmem:[#allocation2 + $0xb8] sm:$0xff]
    %v99 = vld [vmem:[#allocation2 + $0xc0] sm:$0xff]
    %v100 = vld [vmem:[#allocation2 + $0xc8] sm:$0xff]
    %v101 = vld [vmem:[#allocation2 + $0xd0] sm:$0xff]
    %v102 = vld [vmem:[#allocation2 + $0xd8] sm:$0xff]
    %v103 = vld [vmem:[#allocation2 + $0xe0] sm:$0xff]
    %v104 = vld [vmem:[#allocation2 + $0xe8] sm:$0xff]
    %v105 = vld [vmem:[#allocation2 + $0xf0] sm:$0xff]
    %v106 = vld [vmem:[#allocation2 + $0xf8] sm:$0xff]
    %v107 = vld [vmem:[#allocation2 + $0x100] sm:$0xff]
    %v108 = vld [vmem:[#allocation2 + $0x108] sm:$0xff]
    %v109 = vld [vmem:[#allocation2 + $0x110] sm:$0xff]
    %v110 = vld [vmem:[#allocation2 + $0x118] sm:$0xff]
    %v111 = vld [vmem:[#allocation2 + $0x120] sm:$0xff]
    %v112 = vld [vmem:[#allocation2 + $0x128] sm:$0xff]
    %v113 = vld [vmem:[#allocation2 + $0x130] sm:$0xff]
    %v114 = vld [vmem:[#allocation2 + $0x138] sm:$0xff]
    %v115 = vld [vmem:[#allocation2 + $0x140] sm:$0xff]
    %v116 = vld [vmem:[#allocation2 + $0x148] sm:$0xff]
    %v117 = vld [vmem:[#allocation2 + $0x150] sm:$0xff]
    %v118 = vld [vmem:[#allocation2 + $0x158] sm:$0xff]
    %v119 = vld [vmem:[#allocation2 + $0x160] sm:$0xff]
    %v120 = vld [vmem:[#allocation2 + $0x168] sm:$0xff]
    %v121 = vld [vmem:[#allocation2 + $0x170] sm:$0xff]
    %v122 = vld [vmem:[#allocation2 + $0x178] sm:$0xff]
    %v123 = vld [vmem:[#allocation2 + $0x180] sm:$0xff]
    %v124 = vld [vmem:[#allocation2 + $0x188] sm:$0xff]
    %v125 = vld [vmem:[#allocation2 + $0x190] sm:$0xff]
    %v126 = vld [vmem:[#allocation2 + $0x198] sm:$0xff]
    %v127 = vld [vmem:[#allocation2 + $0x1a0] sm:$0xff]
    %v128 = vld [vmem:[#allocation2 + $0x1a8] sm:$0xff]
    %v129 = vld [vmem:[#allocation2 + $0x1b0] sm:$0xff]
    %v130 = vld [vmem:[#allocation2 + $0x1b8] sm:$0xff]
    %v131 = vld [vmem:[#allocation2 + $0x1c0] sm:$0xff]
    %v132 = vld [vmem:[#allocation2 + $0x1c8] sm:$0xff]
    %v133 = vld [vmem:[#allocation2 + $0x1d0] sm:$0xff]
    %v134 = vld [vmem:[#allocation2 + $0x1d8] sm:$0xff]
    %v135 = vld [vmem:[#allocation2 + $0x1e0] sm:$0xff]
    %v136 = vld [vmem:[#allocation2 + $0x1e8] sm:$0xff]
    %v137 = vld [vmem:[#allocation2 + $0x1f0] sm:$0xff]
    %v138 = vld [vmem:[#allocation2 + $0x1f8] sm:$0xff]
    %v140 = vunpack.c.l.b16 %v74
    %v141 = vunpack.c.h.b16 %v74
    %v142 = vpack.c.b16 %v140, %v140
    %v143 = vpack.c.b16 %v141, %v141
    %v210 = vunpack.c.l.b16 %v75
    %v211 = vunpack.c.h.b16 %v75
    %v212 = vunpack.c.l.b16 %v76
    %v213 = vunpack.c.h.b16 %v76
    %v214 = vunpack.c.l.b16 %v77
    %v215 = vunpack.c.h.b16 %v77
    %v216 = vunpack.c.l.b16 %v78
    %v217 = vunpack.c.h.b16 %v78
    %v218 = vunpack.c.l.b16 %v79
    %v219 = vunpack.c.h.b16 %v79
    %v220 = vunpack.c.l.b16 %v80
    %v221 = vunpack.c.h.b16 %v80
    %v222 = vunpack.c.l.b16 %v81
    %v223 = vunpack.c.h.b16 %v81
    %v224 = vunpack.c.l.b16 %v82
    %v225 = vunpack.c.h.b16 %v82
    %v226 = vunpack.c.l.b16 %v83
    %v227 = vunpack.c.h.b16 %v83
    %v228 = vunpack.c.l.b16 %v84
    %v229 = vunpack.c.h.b16 %v84
    %v230 = vunpack.c.l.b16 %v85
    %v231 = vunpack.c.h.b16 %v85
    %v232 = vunpack.c.l.b16 %v86
    %v233 = vunpack.c.h.b16 %v86
    %v234 = vunpack.c.l.b16 %v87
    %v235 = vunpack.c.h.b16 %v87
    %v236 = vunpack.c.l.b16 %v88
    %v237 = vunpack.c.h.b16 %v88
    %v238 = vunpack.c.l.b16 %v89
    %v239 = vunpack.c.h.b16 %v89
    %v240 = vunpack.c.l.b16 %v90
    %v241 = vunpack.c.h.b16 %v90
    %v242 = vunpack.c.l.b16 %v91
    %v243 = vunpack.c.h.b16 %v91
    %v244 = vunpack.c.l.b16 %v92
    %v245 = vunpack.c.h.b16 %v92
    %v246 = vunpack.c.l.b16 %v93
    %v247 = vunpack.c.h.b16 %v93
    %v248 = vunpack.c.l.b16 %v94
    %v249 = vunpack.c.h.b16 %v94
    %v250 = vunpack.c.l.b16 %v95
    %v251 = vunpack.c.h.b16 %v95
    %v252 = vunpack.c.l.b16 %v96
    %v253 = vunpack.c.h.b16 %v96
    %v254 = vunpack.c.l.b16 %v97
    %v255 = vunpack.c.h.b16 %v97
    %v256 = vunpack.c.l.b16 %v98
    %v257 = vunpack.c.h.b16 %v98
    %v258 = vunpack.c.l.b16 %v99
    %v259 = vunpack.c.h.b16 %v99
    %v260 = vunpack.c.l.b16 %v100
    %v261 = vunpack.c.h.b16 %v100
    %v262 = vunpack.c.l.b16 %v101
    %v263 = vunpack.c.h.b16 %v101
    %v264 = vunpack.c.l.b16 %v102
    %v265 = vunpack.c.h.b16 %v102
    %v266 = vunpack.c.l.b16 %v103
    %v267 = vunpack.c.h.b16 %v103
    %v268 = vunpack.c.l.b16 %v104
    %v269 = vunpack.c.h.b16 %v104
    %v270 = vunpack.c.l.b16 %v105
    %v271 = vunpack.c.h.b16 %v105
    %v272 = vunpack.c.l.b16 %v106
    %v273 = vunpack.c.h.b16 %v106
    %v274 = vunpack.c.l.b16 %v107
    %v275 = vunpack.c.h.b16 %v107
    %v276 = vunpack.c.l.b16 %v108
    %v277 = vunpack.c.h.b16 %v108
    %v278 = vunpack.c.l.b16 %v109
    %v279 = vunpack.c.h.b16 %v109
    %v280 = vunpack.c.l.b16 %v110
    %v281 = vunpack.c.h.b16 %v110
    %v282 = vunpack.c.l.b16 %v111
    %v283 = vunpack.c.h.b16 %v111
    %v284 = vunpack.c.l.b16 %v112
    %v285 = vunpack.c.h.b16 %v112
    %v286 = vunpack.c.l.b16 %v113
    %v287 = vunpack.c.h.b16 %v113
    %v288 = vunpack.c.l.b16 %v114
    %v289 = vunpack.c.h.b16 %v114
    %v290 = vunpack.c.l.b16 %v115
    %v291 = vunpack.c.h.b16 %v115
    %v292 = vunpack.c.l.b16 %v116
    %v293 = vunpack.c.h.b16 %v116
    %v294 = vunpack.c.l.b16 %v117
    %v295 = vunpack.c.h.b16 %v117
    %v296 = vunpack.c.l.b16 %v118
    %v297 = vunpack.c.h.b16 %v118
    %v298 = vunpack.c.l.b16 %v119
    %v299 = vunpack.c.h.b16 %v119
    %v300 = vunpack.c.l.b16 %v120
    %v301 = vunpack.c.h.b16 %v120
    %v302 = vunpack.c.l.b16 %v121
    %v303 = vunpack.c.h.b16 %v121
    %v304 = vunpack.c.l.b16 %v122
    %v305 = vunpack.c.h.b16 %v122
    %v306 = vunpack.c.l.b16 %v123
    %v307 = vunpack.c.h.b16 %v123
    %v308 = vunpack.c.l.b16 %v124
    %v309 = vunpack.c.h.b16 %v124
    %v310 = vunpack.c.l.b16 %v125
    %v311 = vunpack.c.h.b16 %v125
    %v312 = vunpack.c.l.b16 %v126
    %v313 = vunpack.c.h.b16 %v126
    %v314 = vunpack.c.l.b16 %v127
    %v315 = vunpack.c.h.b16 %v127
    %v316 = vunpack.c.l.b16 %v128
    %v317 = vunpack.c.h.b16 %v128
    %v318 = vunpack.c.l.b16 %v129
    %v319 = vunpack.c.h.b16 %v129
    %v320 = vunpack.c.l.b16 %v130
    %v321 = vunpack.c.h.b16 %v130
    %v322 = vunpack.c.l.b16 %v131
    %v323 = vunpack.c.h.b16 %v131
    %v324 = vunpack.c.l.b16 %v132
    %v325 = vunpack.c.h.b16 %v132
    %v326 = vunpack.c.l.b16 %v133
    %v327 = vunpack.c.h.b16 %v133
    %v328 = vunpack.c.l.b16 %v134
    %v329 = vunpack.c.h.b16 %v134
    %v330 = vunpack.c.l.b16 %v135
    %v331 = vunpack.c.h.b16 %v135
    %v332 = vunpack.c.l.b16 %v136
    %v333 = vunpack.c.h.b16 %v136
    %v334 = vunpack.c.l.b16 %v137
    %v335 = vunpack.c.h.b16 %v137
    %v336 = vunpack.c.l.b16 %v138
    %v337 = vunpack.c.h.b16 %v138
    %v338 = vpack.c.b16 %v214, %v210
    %v339 = vpack.c.b16 %v215, %v211
    %v340 = vpack.c.b16 %v216, %v212
    %v341 = vpack.c.b16 %v217, %v213
    %v342 = vpack.c.b16 %v222, %v218
    %v343 = vpack.c.b16 %v223, %v219
    %v344 = vpack.c.b16 %v224, %v220
    %v345 = vpack.c.b16 %v225, %v221
    %v346 = vpack.c.b16 %v230, %v226
    %v347 = vpack.c.b16 %v231, %v227
    %v348 = vpack.c.b16 %v232, %v228
    %v349 = vpack.c.b16 %v233, %v229
    %v350 = vpack.c.b16 %v238, %v234
    %v351 = vpack.c.b16 %v239, %v235
    %v352 = vpack.c.b16 %v240, %v236
    %v353 = vpack.c.b16 %v241, %v237
    %v354 = vpack.c.b16 %v246, %v242
    %v355 = vpack.c.b16 %v247, %v243
    %v356 = vpack.c.b16 %v248, %v244
    %v357 = vpack.c.b16 %v249, %v245
    %v358 = vpack.c.b16 %v254, %v250
    %v359 = vpack.c.b16 %v255, %v251
    %v360 = vpack.c.b16 %v256, %v252
    %v361 = vpack.c.b16 %v257, %v253
    %v362 = vpack.c.b16 %v262, %v258
    %v363 = vpack.c.b16 %v263, %v259
    %v364 = vpack.c.b16 %v264, %v260
    %v365 = vpack.c.b16 %v265, %v261
    %v366 = vpack.c.b16 %v270, %v266
    %v367 = vpack.c.b16 %v271, %v267
    %v368 = vpack.c.b16 %v272, %v268
    %v369 = vpack.c.b16 %v273, %v269
    %v370 = vpack.c.b16 %v278, %v274
    %v371 = vpack.c.b16 %v279, %v275
    %v372 = vpack.c.b16 %v280, %v276
    %v373 = vpack.c.b16 %v281, %v277
    %v374 = vpack.c.b16 %v286, %v282
    %v375 = vpack.c.b16 %v287, %v283
    %v376 = vpack.c.b16 %v288, %v284
    %v377 = vpack.c.b16 %v289, %v285
    %v378 = vpack.c.b16 %v294, %v290
    %v379 = vpack.c.b16 %v295, %v291
    %v380 = vpack.c.b16 %v296, %v292
    %v381 = vpack.c.b16 %v297, %v293
    %v382 = vpack.c.b16 %v302, %v298
    %v383 = vpack.c.b16 %v303, %v299
    %v384 = vpack.c.b16 %v304, %v300
    %v385 = vpack.c.b16 %v305, %v301
    %v386 = vpack.c.b16 %v310, %v306
    %v387 = vpack.c.b16 %v311, %v307
    %v388 = vpack.c.b16 %v312, %v308
    %v389 = vpack.c.b16 %v313, %v309
    %v390 = vpack.c.b16 %v318, %v314
    %v391 = vpack.c.b16 %v319, %v315
    %v392 = vpack.c.b16 %v320, %v316
    %v393 = vpack.c.b16 %v321, %v317
    %v394 = vpack.c.b16 %v326, %v322
    %v395 = vpack.c.b16 %v327, %v323
    %v396 = vpack.c.b16 %v328, %v324
    %v397 = vpack.c.b16 %v329, %v325
    %v398 = vpack.c.b16 %v334, %v330
    %v399 = vpack.c.b16 %v335, %v331
    %v400 = vpack.c.b16 %v336, %v332
    %v401 = vpack.c.b16 %v337, %v333
    %466 = vmatpush.bf16.msra.mxu0 %v366
    %467 = vmatpush.bf16.msra.mxu0 %v362
    %468 = vmatpush.bf16.msra.mxu0 %v358
    %469 = vmatpush.bf16.msra.mxu0 %v354
    %470 = vmatpush.bf16.msra.mxu0 %v350
    %471 = vmatpush.bf16.msra.mxu0 %v346
    %472 = vmatpush.bf16.msra.mxu0 %v342
    %473 = vmatpush.bf16.msra.mxu0 %v338
    %474 = vmatmul.bf16.gmra.mxu0 %v142
    %v475 = vpop.f32.mrf.mxu0
    %v476 = vadd.f32 0.0, %v475
    %v477 = vpop.f32.mrf.mxu0
    %478 = vdwg.mxu0
    %479 = vmatpush.bf16.msra.mxu0 %v398
    %480 = vmatpush.bf16.msra.mxu0 %v394
    %481 = vmatpush.bf16.msra.mxu0 %v390
    %482 = vmatpush.bf16.msra.mxu0 %v386
    %483 = vmatpush.bf16.msra.mxu0 %v382
    %484 = vmatpush.bf16.msra.mxu0 %v378
    %485 = vmatpush.bf16.msra.mxu0 %v374
    %486 = vmatpush.bf16.msra.mxu0 %v370
    %487 = vmatmul.bf16.gmra.mxu0 %v143
    %v488 = vpop.f32.mrf.mxu0
    %v489 = vadd.f32 %v476, %v488
    %v490 = vpop.f32.mrf.mxu0
    %491 = vdwg.mxu0
    %492 = vmatpush.bf16.msra.mxu0 %v367
    %493 = vmatpush.bf16.msra.mxu0 %v363
    %494 = vmatpush.bf16.msra.mxu0 %v359
    %495 = vmatpush.bf16.msra.mxu0 %v355
    %496 = vmatpush.bf16.msra.mxu0 %v351
    %497 = vmatpush.bf16.msra.mxu0 %v347
    %498 = vmatpush.bf16.msra.mxu0 %v343
    %499 = vmatpush.bf16.msra.mxu0 %v339
    %500 = vmatmul.bf16.gmra.mxu0 %v142
    %v501 = vpop.f32.mrf.mxu0
    %v502 = vadd.f32 0.0, %v501
    %v503 = vpop.f32.mrf.mxu0
    %504 = vdwg.mxu0
    %505 = vmatpush.bf16.msra.mxu0 %v399
    %506 = vmatpush.bf16.msra.mxu0 %v395
    %507 = vmatpush.bf16.msra.mxu0 %v391
    %508 = vmatpush.bf16.msra.mxu0 %v387
    %509 = vmatpush.bf16.msra.mxu0 %v383
    %510 = vmatpush.bf16.msra.mxu0 %v379
    %511 = vmatpush.bf16.msra.mxu0 %v375
    %512 = vmatpush.bf16.msra.mxu0 %v371
    %513 = vmatmul.bf16.gmra.mxu0 %v143
    %v514 = vpop.f32.mrf.mxu0
    %v515 = vadd.f32 %v502, %v514
    %v516 = vpop.f32.mrf.mxu0
    %517 = vdwg.mxu0
    %518 = vmatpush.bf16.msra.mxu0 %v368
    %519 = vmatpush.bf16.msra.mxu0 %v364
    %520 = vmatpush.bf16.msra.mxu0 %v360
    %521 = vmatpush.bf16.msra.mxu0 %v356
    %522 = vmatpush.bf16.msra.mxu0 %v352
    %523 = vmatpush.bf16.msra.mxu0 %v348
    %524 = vmatpush.bf16.msra.mxu0 %v344
    %525 = vmatpush.bf16.msra.mxu0 %v340
    %526 = vmatmul.bf16.gmra.mxu0 %v142
    %v527 = vpop.f32.mrf.mxu0
    %v528 = vadd.f32 0.0, %v527
    %v529 = vpop.f32.mrf.mxu0
    %530 = vdwg.mxu0
    %531 = vmatpush.bf16.msra.mxu0 %v400
    %532 = vmatpush.bf16.msra.mxu0 %v396
    %533 = vmatpush.bf16.msra.mxu0 %v392
    %534 = vmatpush.bf16.msra.mxu0 %v388
    %535 = vmatpush.bf16.msra.mxu0 %v384
    %536 = vmatpush.bf16.msra.mxu0 %v380
    %537 = vmatpush.bf16.msra.mxu0 %v376
    %538 = vmatpush.bf16.msra.mxu0 %v372
    %539 = vmatmul.bf16.gmra.mxu0 %v143
    %v540 = vpop.f32.mrf.mxu0
    %v541 = vadd.f32 %v528, %v540
    %v542 = vpop.f32.mrf.mxu0
    %543 = vdwg.mxu0
    %544 = vmatpush.bf16.msra.mxu0 %v369
    %545 = vmatpush.bf16.msra.mxu0 %v365
    %546 = vmatpush.bf16.msra.mxu0 %v361
    %547 = vmatpush.bf16.msra.mxu0 %v357
    %548 = vmatpush.bf16.msra.mxu0 %v353
    %549 = vmatpush.bf16.msra.mxu0 %v349
    %550 = vmatpush.bf16.msra.mxu0 %v345
    %551 = vmatpush.bf16.msra.mxu0 %v341
    %552 = vmatmul.bf16.gmra.mxu0 %v142
    %v553 = vpop.f32.mrf.mxu0
    %v554 = vadd.f32 0.0, %v553
    %v555 = vpop.f32.mrf.mxu0
    %556 = vdwg.mxu0
    %557 = vmatpush.bf16.msra.mxu0 %v401
    %558 = vmatpush.bf16.msra.mxu0 %v397
    %559 = vmatpush.bf16.msra.mxu0 %v393
    %560 = vmatpush.bf16.msra.mxu0 %v389
    %561 = vmatpush.bf16.msra.mxu0 %v385
    %562 = vmatpush.bf16.msra.mxu0 %v381
    %563 = vmatpush.bf16.msra.mxu0 %v377
    %564 = vmatpush.bf16.msra.mxu0 %v373
    %565 = vmatmul.bf16.gmra.mxu0 %v143
    %v566 = vpop.f32.mrf.mxu0
    %v567 = vadd.f32 %v554, %v566
    %v568 = vpop.f32.mrf.mxu0
    %569 = vdwg.mxu0
    %v570 = vmul.f32 %v567, %v41
    %vm571 = vcmask 64512
    %v573 = vsel %vm571, 1.0, 0
    %575 = vmatpush.msra.mxu0 0.0
    %576 = vmatpush.msra.mxu0 0.0
    %577 = vmatpush.msra.mxu0 0.0
    %578 = vmatpush.msra.mxu0 0.0
    %579 = vmatpush.msra.mxu0 0.0
    %580 = vmatpush.msra.mxu0 0.0
    %581 = vmatpush.msra.mxu0 0.0
    %582 = vmatpush.msra.mxu0 0.0
    %583 = vmatpush.msra.mxu0 0.0
    %584 = vmatpush.msra.mxu0 0.0
    %585 = vmatpush.msra.mxu0 0.0
    %586 = vmatpush.msra.mxu0 0.0
    %587 = vmatpush.msra.mxu0 0.0
    %588 = vmatpush.msra.mxu0 0.0
    %589 = vmatpush.msra.mxu0 0.0
    %590 = vmatpush.msra.mxu0 %v570
    %591 = vmatmul.f32.gmra.mxu0 %v573
    %v592 = vpop.f32.mrf.mxu0
    %v593 = vadd.f32 0.0, %v592
    %594 = vdwg.mxu0
    %v595 = vadd.f32 %v541, %v593
    %v596 = vmul.f32 %v595, 0.2
    %v597 = vmax.f32 %v595, %v596
    %v598 = vadd.f32 %v597, %v40
    %vm599 = vcmask 523264
    %v600 = vsel %vm599, %v598, -inf
    %601 = vmax.xlane.f32.xlu0 %v600
    %v602 = vpop.xlane.xlu0 %601
    %v603 = vsub.f32 %v598, %v602
    %v604 = vmul.f32 %v603, 1.442695
    %v605 = vpow.pop %v604
    %v607 = vsel %vm599, %v605, 0
    %609 = vmatpush.msra.mxu0 0.0
    %610 = vmatpush.msra.mxu0 0.0
    %611 = vmatpush.msra.mxu0 0.0
    %612 = vmatpush.msra.mxu0 0.0
    %613 = vmatpush.msra.mxu0 0.0
    %614 = vmatpush.msra.mxu0 0.0
    %615 = vmatpush.msra.mxu0 0.0
    %616 = vmatpush.msra.mxu0 0.0
    %617 = vmatpush.msra.mxu0 %v49
    %618 = vmatpush.msra.mxu0 %v48
    %619 = vmatpush.msra.mxu0 %v47
    %620 = vmatpush.msra.mxu0 %v46
    %621 = vmatpush.msra.mxu0 %v45
    %622 = vmatpush.msra.mxu0 %v44
    %623 = vmatpush.msra.mxu0 %v43
    %624 = vmatpush.msra.mxu0 %v42
    %625 = vmatmul.f32.gmra.mxu0 %v607
    %v626 = vpop.f32.mrf.mxu0
    %v627 = vadd.f32 0.0, %v626
    %628 = vdwg.mxu0
    %v629 = vrcp.pop %v627
    %v630 = vmul.f32 %v627, %v629
    %v631 = vsub.f32 1.0, %v630
    %v632 = vmul.f32 %v629, %v631
    %v633 = vadd.f32 %v629, %v632
    %vm634 = vweird.f32 %v627
    %vm635 = vweird.f32 %v629
    %vm636 = vmor %vm634, %vm635
    %v637 = vsel %vm636, %v629, %v633
    %v638 = vand.u32 2147483647, %v627
    %vm639 = vcmp.eq.f32.partialorder %v638, 8.507059e+37
    %v640 = vand.u32 %v627, 2147483648
    %v641 = vor.u32 1.1754944e-38, %v640
    %v642 = vsel %vm639, %v641, %v637
    %v643 = vmul.f32 %v605, %v642
    %v645 = vsel %vm571, %v50, 0
    %v648 = vsel %vm571, %v51, 0
    %v651 = vsel %vm571, %v52, 0
    %v654 = vsel %vm571, %v53, 0
    %v657 = vsel %vm571, %v54, 0
    %v660 = vsel %vm571, %v55, 0
    %v663 = vsel %vm571, %v56, 0
    %v666 = vsel %vm571, %v57, 0
    %668 = vmatpush.msra.mxu0 0.0
    %669 = vmatpush.msra.mxu0 0.0
    %670 = vmatpush.msra.mxu0 0.0
    %671 = vmatpush.msra.mxu0 0.0
    %672 = vmatpush.msra.mxu0 0.0
    %673 = vmatpush.msra.mxu0 0.0
    %674 = vmatpush.msra.mxu0 0.0
    %675 = vmatpush.msra.mxu0 0.0
    %676 = vmatpush.msra.mxu0 0.0
    %677 = vmatpush.msra.mxu0 0.0
    %678 = vmatpush.msra.mxu0 0.0
    %679 = vmatpush.msra.mxu0 0.0
    %680 = vmatpush.msra.mxu0 0.0
    %681 = vmatpush.msra.mxu0 0.0
    %682 = vmatpush.msra.mxu0 0.0
    %683 = vmatpush.msra.mxu0 %v489
    %684 = vmatmul.f32.gmra.mxu0 %v645
    %v685 = vpop.f32.mrf.mxu0
    %v686 = vadd.f32 0.0, %v685
    %687 = vmatmul.f32.gmra.mxu0 %v648
    %v688 = vpop.f32.mrf.mxu0
    %v689 = vadd.f32 0.0, %v688
    %690 = vmatmul.f32.gmra.mxu0 %v651
    %v691 = vpop.f32.mrf.mxu0
    %v692 = vadd.f32 0.0, %v691
    %693 = vmatmul.f32.gmra.mxu0 %v654
    %v694 = vpop.f32.mrf.mxu0
    %v695 = vadd.f32 0.0, %v694
    %696 = vmatmul.f32.gmra.mxu0 %v657
    %v697 = vpop.f32.mrf.mxu0
    %v698 = vadd.f32 0.0, %v697
    %699 = vmatmul.f32.gmra.mxu0 %v660
    %v700 = vpop.f32.mrf.mxu0
    %v701 = vadd.f32 0.0, %v700
    %702 = vmatmul.f32.gmra.mxu0 %v663
    %v703 = vpop.f32.mrf.mxu0
    %v704 = vadd.f32 0.0, %v703
    %705 = vmatmul.f32.gmra.mxu0 %v666
    %v706 = vpop.f32.mrf.mxu0
    %v707 = vadd.f32 0.0, %v706
    %708 = vdwg.mxu0
    %709 = vmatpush.msra.mxu0 0.0
    %710 = vmatpush.msra.mxu0 0.0
    %711 = vmatpush.msra.mxu0 0.0
    %712 = vmatpush.msra.mxu0 0.0
    %713 = vmatpush.msra.mxu0 0.0
    %714 = vmatpush.msra.mxu0 0.0
    %715 = vmatpush.msra.mxu0 0.0
    %716 = vmatpush.msra.mxu0 0.0
    %717 = vmatpush.msra.mxu0 0.0
    %718 = vmatpush.msra.mxu0 0.0
    %719 = vmatpush.msra.mxu0 0.0
    %720 = vmatpush.msra.mxu0 0.0
    %721 = vmatpush.msra.mxu0 0.0
    %722 = vmatpush.msra.mxu0 0.0
    %723 = vmatpush.msra.mxu0 0.0
    %724 = vmatpush.msra.mxu0 %v515
    %725 = vmatmul.f32.gmra.mxu0 %v645
    %v726 = vpop.f32.mrf.mxu0
    %v727 = vadd.f32 0.0, %v726
    %728 = vmatmul.f32.gmra.mxu0 %v648
    %v729 = vpop.f32.mrf.mxu0
    %v730 = vadd.f32 0.0, %v729
    %731 = vmatmul.f32.gmra.mxu0 %v651
    %v732 = vpop.f32.mrf.mxu0
    %v733 = vadd.f32 0.0, %v732
    %734 = vmatmul.f32.gmra.mxu0 %v654
    %v735 = vpop.f32.mrf.mxu0
    %v736 = vadd.f32 0.0, %v735
    %737 = vmatmul.f32.gmra.mxu0 %v657
    %v738 = vpop.f32.mrf.mxu0
    %v739 = vadd.f32 0.0, %v738
    %740 = vmatmul.f32.gmra.mxu0 %v660
    %v741 = vpop.f32.mrf.mxu0
    %v742 = vadd.f32 0.0, %v741
    %743 = vmatmul.f32.gmra.mxu0 %v663
    %v744 = vpop.f32.mrf.mxu0
    %v745 = vadd.f32 0.0, %v744
    %746 = vmatmul.f32.gmra.mxu0 %v666
    %v747 = vpop.f32.mrf.mxu0
    %v748 = vadd.f32 0.0, %v747
    %749 = vdwg.mxu0
    %v750 = vmul.f32 %v686, %v58
    %v751 = vmul.f32 %v727, %v59
    %v752 = vmul.f32 %v689, %v60
    %v753 = vmul.f32 %v730, %v61
    %v754 = vmul.f32 %v692, %v62
    %v755 = vmul.f32 %v733, %v63
    %v756 = vmul.f32 %v695, %v64
    %v757 = vmul.f32 %v736, %v65
    %v758 = vmul.f32 %v698, %v66
    %v759 = vmul.f32 %v739, %v67
    %v760 = vmul.f32 %v701, %v68
    %v761 = vmul.f32 %v742, %v69
    %v762 = vmul.f32 %v704, %v70
    %v763 = vmul.f32 %v745, %v71
    %v764 = vmul.f32 %v707, %v72
    %v765 = vmul.f32 %v748, %v73
    %v766 = vld [vmem:[%s4] sm:$0x3]
    %v768 = vperm.slane %v766, 0
    %v769 = vperm.slane %v766, 1
    %v773 = vsel %vm599, %v643, 0
    %775 = vmatpush.msra.mxu0 0.0
    %776 = vmatpush.msra.mxu0 0.0
    %777 = vmatpush.msra.mxu0 0.0
    %778 = vmatpush.msra.mxu0 0.0
    %779 = vmatpush.msra.mxu0 0.0
    %780 = vmatpush.msra.mxu0 0.0
    %781 = vmatpush.msra.mxu0 0.0
    %782 = vmatpush.msra.mxu0 0.0
    %783 = vmatpush.msra.mxu0 %v764
    %784 = vmatpush.msra.mxu0 %v762
    %785 = vmatpush.msra.mxu0 %v760
    %786 = vmatpush.msra.mxu0 %v758
    %787 = vmatpush.msra.mxu0 %v756
    %788 = vmatpush.msra.mxu0 %v754
    %789 = vmatpush.msra.mxu0 %v752
    %790 = vmatpush.msra.mxu0 %v750
    %791 = vmatmul.f32.gmra.mxu0 %v773
    %v792 = vpop.f32.mrf.mxu0
    %v793 = vadd.f32 %v768, %v792
    %794 = vdwg.mxu0
    %795 = vmatpush.msra.mxu0 0.0
    %796 = vmatpush.msra.mxu0 0.0
    %797 = vmatpush.msra.mxu0 0.0
    %798 = vmatpush.msra.mxu0 0.0
    %799 = vmatpush.msra.mxu0 0.0
    %800 = vmatpush.msra.mxu0 0.0
    %801 = vmatpush.msra.mxu0 0.0
    %802 = vmatpush.msra.mxu0 0.0
    %803 = vmatpush.msra.mxu0 %v765
    %804 = vmatpush.msra.mxu0 %v763
    %805 = vmatpush.msra.mxu0 %v761
    %806 = vmatpush.msra.mxu0 %v759
    %807 = vmatpush.msra.mxu0 %v757
    %808 = vmatpush.msra.mxu0 %v755
    %809 = vmatpush.msra.mxu0 %v753
    %810 = vmatpush.msra.mxu0 %v751
    %811 = vmatmul.f32.gmra.mxu0 %v773
    %v812 = vpop.f32.mrf.mxu0
    %v813 = vadd.f32 %v769, %v812
    %814 = vdwg.mxu0
    %v815 = vmul.f32 %v793, 0.2
    %v816 = vmul.f32 %v813, 0.2
    %v817 = vmax.f32 %v793, %v815
    %v818 = vmax.f32 %v813, %v816
    %v819 = vpack.c.bf16 %v817, %v817
    %v820 = vpack.c.bf16 %v818, %v818
    %s821 = scalar_lea.vmem [#allocation2], 512
    %v822 = vld [vmem:[%s821] sm:$0xff]
    %v823 = vld [vmem:[%s821 + $0x8] sm:$0xff]
    %v824 = vld [vmem:[%s821 + $0x10] sm:$0xff]
    %v825 = vld [vmem:[%s821 + $0x18] sm:$0xff]
    %v826 = vld [vmem:[%s821 + $0x20] sm:$0xff]
    %v827 = vld [vmem:[%s821 + $0x28] sm:$0xff]
    %v828 = vld [vmem:[%s821 + $0x30] sm:$0xff]
    %v829 = vld [vmem:[%s821 + $0x38] sm:$0xff]
    %v830 = vld [vmem:[%s821 + $0x40] sm:$0xff]
    %v831 = vld [vmem:[%s821 + $0x48] sm:$0xff]
    %v832 = vld [vmem:[%s821 + $0x50] sm:$0xff]
    %v833 = vld [vmem:[%s821 + $0x58] sm:$0xff]
    %v834 = vld [vmem:[%s821 + $0x60] sm:$0xff]
    %v835 = vld [vmem:[%s821 + $0x68] sm:$0xff]
    %v836 = vld [vmem:[%s821 + $0x70] sm:$0xff]
    %v837 = vld [vmem:[%s821 + $0x78] sm:$0xff]
    %v838 = vld [vmem:[%s821 + $0x80] sm:$0xff]
    %v839 = vld [vmem:[%s821 + $0x88] sm:$0xff]
    %v840 = vld [vmem:[%s821 + $0x90] sm:$0xff]
    %v841 = vld [vmem:[%s821 + $0x98] sm:$0xff]
    %v842 = vld [vmem:[%s821 + $0xa0] sm:$0xff]
    %v843 = vld [vmem:[%s821 + $0xa8] sm:$0xff]
    %v844 = vld [vmem:[%s821 + $0xb0] sm:$0xff]
    %v845 = vld [vmem:[%s821 + $0xb8] sm:$0xff]
    %v846 = vld [vmem:[%s821 + $0xc0] sm:$0xff]
    %v847 = vld [vmem:[%s821 + $0xc8] sm:$0xff]
    %v848 = vld [vmem:[%s821 + $0xd0] sm:$0xff]
    %v849 = vld [vmem:[%s821 + $0xd8] sm:$0xff]
    %v850 = vld [vmem:[%s821 + $0xe0] sm:$0xff]
    %v851 = vld [vmem:[%s821 + $0xe8] sm:$0xff]
    %v852 = vld [vmem:[%s821 + $0xf0] sm:$0xff]
    %v853 = vld [vmem:[%s821 + $0xf8] sm:$0xff]
    %v854 = vld [vmem:[%s821 + $0x100] sm:$0xff]
    %v855 = vld [vmem:[%s821 + $0x108] sm:$0xff]
    %v856 = vld [vmem:[%s821 + $0x110] sm:$0xff]
    %v857 = vld [vmem:[%s821 + $0x118] sm:$0xff]
    %v858 = vld [vmem:[%s821 + $0x120] sm:$0xff]
    %v859 = vld [vmem:[%s821 + $0x128] sm:$0xff]
    %v860 = vld [vmem:[%s821 + $0x130] sm:$0xff]
    %v861 = vld [vmem:[%s821 + $0x138] sm:$0xff]
    %v862 = vld [vmem:[%s821 + $0x140] sm:$0xff]
    %v863 = vld [vmem:[%s821 + $0x148] sm:$0xff]
    %v864 = vld [vmem:[%s821 + $0x150] sm:$0xff]
    %v865 = vld [vmem:[%s821 + $0x158] sm:$0xff]
    %v866 = vld [vmem:[%s821 + $0x160] sm:$0xff]
    %v867 = vld [vmem:[%s821 + $0x168] sm:$0xff]
    %v868 = vld [vmem:[%s821 + $0x170] sm:$0xff]
    %v869 = vld [vmem:[%s821 + $0x178] sm:$0xff]
    %v870 = vld [vmem:[%s821 + $0x180] sm:$0xff]
    %v871 = vld [vmem:[%s821 + $0x188] sm:$0xff]
    %v872 = vld [vmem:[%s821 + $0x190] sm:$0xff]
    %v873 = vld [vmem:[%s821 + $0x198] sm:$0xff]
    %v874 = vld [vmem:[%s821 + $0x1a0] sm:$0xff]
    %v875 = vld [vmem:[%s821 + $0x1a8] sm:$0xff]
    %v876 = vld [vmem:[%s821 + $0x1b0] sm:$0xff]
    %v877 = vld [vmem:[%s821 + $0x1b8] sm:$0xff]
    %v878 = vld [vmem:[%s821 + $0x1c0] sm:$0xff]
    %v879 = vld [vmem:[%s821 + $0x1c8] sm:$0xff]
    %v880 = vld [vmem:[%s821 + $0x1d0] sm:$0xff]
    %v881 = vld [vmem:[%s821 + $0x1d8] sm:$0xff]
    %v882 = vld [vmem:[%s821 + $0x1e0] sm:$0xff]
    %v883 = vld [vmem:[%s821 + $0x1e8] sm:$0xff]
    %v884 = vld [vmem:[%s821 + $0x1f0] sm:$0xff]
    %v885 = vld [vmem:[%s821 + $0x1f8] sm:$0xff]
    %v950 = vunpack.c.l.b16 %v822
    %v951 = vunpack.c.h.b16 %v822
    %v952 = vunpack.c.l.b16 %v823
    %v953 = vunpack.c.h.b16 %v823
    %v954 = vunpack.c.l.b16 %v824
    %v955 = vunpack.c.h.b16 %v824
    %v956 = vunpack.c.l.b16 %v825
    %v957 = vunpack.c.h.b16 %v825
    %v958 = vunpack.c.l.b16 %v826
    %v959 = vunpack.c.h.b16 %v826
    %v960 = vunpack.c.l.b16 %v827
    %v961 = vunpack.c.h.b16 %v827
    %v962 = vunpack.c.l.b16 %v828
    %v963 = vunpack.c.h.b16 %v828
    %v964 = vunpack.c.l.b16 %v829
    %v965 = vunpack.c.h.b16 %v829
    %v966 = vunpack.c.l.b16 %v830
    %v967 = vunpack.c.h.b16 %v830
    %v968 = vunpack.c.l.b16 %v831
    %v969 = vunpack.c.h.b16 %v831
    %v970 = vunpack.c.l.b16 %v832
    %v971 = vunpack.c.h.b16 %v832
    %v972 = vunpack.c.l.b16 %v833
    %v973 = vunpack.c.h.b16 %v833
    %v974 = vunpack.c.l.b16 %v834
    %v975 = vunpack.c.h.b16 %v834
    %v976 = vunpack.c.l.b16 %v835
    %v977 = vunpack.c.h.b16 %v835
    %v978 = vunpack.c.l.b16 %v836
    %v979 = vunpack.c.h.b16 %v836
    %v980 = vunpack.c.l.b16 %v837
    %v981 = vunpack.c.h.b16 %v837
    %v982 = vunpack.c.l.b16 %v838
    %v983 = vunpack.c.h.b16 %v838
    %v984 = vunpack.c.l.b16 %v839
    %v985 = vunpack.c.h.b16 %v839
    %v986 = vunpack.c.l.b16 %v840
    %v987 = vunpack.c.h.b16 %v840
    %v988 = vunpack.c.l.b16 %v841
    %v989 = vunpack.c.h.b16 %v841
    %v990 = vunpack.c.l.b16 %v842
    %v991 = vunpack.c.h.b16 %v842
    %v992 = vunpack.c.l.b16 %v843
    %v993 = vunpack.c.h.b16 %v843
    %v994 = vunpack.c.l.b16 %v844
    %v995 = vunpack.c.h.b16 %v844
    %v996 = vunpack.c.l.b16 %v845
    %v997 = vunpack.c.h.b16 %v845
    %v998 = vunpack.c.l.b16 %v846
    %v999 = vunpack.c.h.b16 %v846
    %v1000 = vunpack.c.l.b16 %v847
    %v1001 = vunpack.c.h.b16 %v847
    %v1002 = vunpack.c.l.b16 %v848
    %v1003 = vunpack.c.h.b16 %v848
    %v1004 = vunpack.c.l.b16 %v849
    %v1005 = vunpack.c.h.b16 %v849
    %v1006 = vunpack.c.l.b16 %v850
    %v1007 = vunpack.c.h.b16 %v850
    %v1008 = vunpack.c.l.b16 %v851
    %v1009 = vunpack.c.h.b16 %v851
    %v1010 = vunpack.c.l.b16 %v852
    %v1011 = vunpack.c.h.b16 %v852
    %v1012 = vunpack.c.l.b16 %v853
    %v1013 = vunpack.c.h.b16 %v853
    %v1014 = vunpack.c.l.b16 %v854
    %v1015 = vunpack.c.h.b16 %v854
    %v1016 = vunpack.c.l.b16 %v855
    %v1017 = vunpack.c.h.b16 %v855
    %v1018 = vunpack.c.l.b16 %v856
    %v1019 = vunpack.c.h.b16 %v856
    %v1020 = vunpack.c.l.b16 %v857
    %v1021 = vunpack.c.h.b16 %v857
    %v1022 = vunpack.c.l.b16 %v858
    %v1023 = vunpack.c.h.b16 %v858
    %v1024 = vunpack.c.l.b16 %v859
    %v1025 = vunpack.c.h.b16 %v859
    %v1026 = vunpack.c.l.b16 %v860
    %v1027 = vunpack.c.h.b16 %v860
    %v1028 = vunpack.c.l.b16 %v861
    %v1029 = vunpack.c.h.b16 %v861
    %v1030 = vunpack.c.l.b16 %v862
    %v1031 = vunpack.c.h.b16 %v862
    %v1032 = vunpack.c.l.b16 %v863
    %v1033 = vunpack.c.h.b16 %v863
    %v1034 = vunpack.c.l.b16 %v864
    %v1035 = vunpack.c.h.b16 %v864
    %v1036 = vunpack.c.l.b16 %v865
    %v1037 = vunpack.c.h.b16 %v865
    %v1038 = vunpack.c.l.b16 %v866
    %v1039 = vunpack.c.h.b16 %v866
    %v1040 = vunpack.c.l.b16 %v867
    %v1041 = vunpack.c.h.b16 %v867
    %v1042 = vunpack.c.l.b16 %v868
    %v1043 = vunpack.c.h.b16 %v868
    %v1044 = vunpack.c.l.b16 %v869
    %v1045 = vunpack.c.h.b16 %v869
    %v1046 = vunpack.c.l.b16 %v870
    %v1047 = vunpack.c.h.b16 %v870
    %v1048 = vunpack.c.l.b16 %v871
    %v1049 = vunpack.c.h.b16 %v871
    %v1050 = vunpack.c.l.b16 %v872
    %v1051 = vunpack.c.h.b16 %v872
    %v1052 = vunpack.c.l.b16 %v873
    %v1053 = vunpack.c.h.b16 %v873
    %v1054 = vunpack.c.l.b16 %v874
    %v1055 = vunpack.c.h.b16 %v874
    %v1056 = vunpack.c.l.b16 %v875
    %v1057 = vunpack.c.h.b16 %v875
    %v1058 = vunpack.c.l.b16 %v876
    %v1059 = vunpack.c.h.b16 %v876
    %v1060 = vunpack.c.l.b16 %v877
    %v1061 = vunpack.c.h.b16 %v877
    %v1062 = vunpack.c.l.b16 %v878
    %v1063 = vunpack.c.h.b16 %v878
    %v1064 = vunpack.c.l.b16 %v879
    %v1065 = vunpack.c.h.b16 %v879
    %v1066 = vunpack.c.l.b16 %v880
    %v1067 = vunpack.c.h.b16 %v880
    %v1068 = vunpack.c.l.b16 %v881
    %v1069 = vunpack.c.h.b16 %v881
    %v1070 = vunpack.c.l.b16 %v882
    %v1071 = vunpack.c.h.b16 %v882
    %v1072 = vunpack.c.l.b16 %v883
    %v1073 = vunpack.c.h.b16 %v883
    %v1074 = vunpack.c.l.b16 %v884
    %v1075 = vunpack.c.h.b16 %v884
    %v1076 = vunpack.c.l.b16 %v885
    %v1077 = vunpack.c.h.b16 %v885
    %v1078 = vpack.c.b16 %v954, %v950
    %v1079 = vpack.c.b16 %v955, %v951
    %v1080 = vpack.c.b16 %v956, %v952
    %v1081 = vpack.c.b16 %v957, %v953
    %v1082 = vpack.c.b16 %v962, %v958
    %v1083 = vpack.c.b16 %v963, %v959
    %v1084 = vpack.c.b16 %v964, %v960
    %v1085 = vpack.c.b16 %v965, %v961
    %v1086 = vpack.c.b16 %v970, %v966
    %v1087 = vpack.c.b16 %v971, %v967
    %v1088 = vpack.c.b16 %v972, %v968
    %v1089 = vpack.c.b16 %v973, %v969
    %v1090 = vpack.c.b16 %v978, %v974
    %v1091 = vpack.c.b16 %v979, %v975
    %v1092 = vpack.c.b16 %v980, %v976
    %v1093 = vpack.c.b16 %v981, %v977
    %v1094 = vpack.c.b16 %v986, %v982
    %v1095 = vpack.c.b16 %v987, %v983
    %v1096 = vpack.c.b16 %v988, %v984
    %v1097 = vpack.c.b16 %v989, %v985
    %v1098 = vpack.c.b16 %v994, %v990
    %v1099 = vpack.c.b16 %v995, %v991
    %v1100 = vpack.c.b16 %v996, %v992
    %v1101 = vpack.c.b16 %v997, %v993
    %v1102 = vpack.c.b16 %v1002, %v998
    %v1103 = vpack.c.b16 %v1003, %v999
    %v1104 = vpack.c.b16 %v1004, %v1000
    %v1105 = vpack.c.b16 %v1005, %v1001
    %v1106 = vpack.c.b16 %v1010, %v1006
    %v1107 = vpack.c.b16 %v1011, %v1007
    %v1108 = vpack.c.b16 %v1012, %v1008
    %v1109 = vpack.c.b16 %v1013, %v1009
    %v1110 = vpack.c.b16 %v1018, %v1014
    %v1111 = vpack.c.b16 %v1019, %v1015
    %v1112 = vpack.c.b16 %v1020, %v1016
    %v1113 = vpack.c.b16 %v1021, %v1017
    %v1114 = vpack.c.b16 %v1026, %v1022
    %v1115 = vpack.c.b16 %v1027, %v1023
    %v1116 = vpack.c.b16 %v1028, %v1024
    %v1117 = vpack.c.b16 %v1029, %v1025
    %v1118 = vpack.c.b16 %v1034, %v1030
    %v1119 = vpack.c.b16 %v1035, %v1031
    %v1120 = vpack.c.b16 %v1036, %v1032
    %v1121 = vpack.c.b16 %v1037, %v1033
    %v1122 = vpack.c.b16 %v1042, %v1038
    %v1123 = vpack.c.b16 %v1043, %v1039
    %v1124 = vpack.c.b16 %v1044, %v1040
    %v1125 = vpack.c.b16 %v1045, %v1041
    %v1126 = vpack.c.b16 %v1050, %v1046
    %v1127 = vpack.c.b16 %v1051, %v1047
    %v1128 = vpack.c.b16 %v1052, %v1048
    %v1129 = vpack.c.b16 %v1053, %v1049
    %v1130 = vpack.c.b16 %v1058, %v1054
    %v1131 = vpack.c.b16 %v1059, %v1055
    %v1132 = vpack.c.b16 %v1060, %v1056
    %v1133 = vpack.c.b16 %v1061, %v1057
    %v1134 = vpack.c.b16 %v1066, %v1062
    %v1135 = vpack.c.b16 %v1067, %v1063
    %v1136 = vpack.c.b16 %v1068, %v1064
    %v1137 = vpack.c.b16 %v1069, %v1065
    %v1138 = vpack.c.b16 %v1074, %v1070
    %v1139 = vpack.c.b16 %v1075, %v1071
    %v1140 = vpack.c.b16 %v1076, %v1072
    %v1141 = vpack.c.b16 %v1077, %v1073
    %1206 = vmatpush.bf16.msra.mxu0 %v1106
    %1207 = vmatpush.bf16.msra.mxu0 %v1102
    %1208 = vmatpush.bf16.msra.mxu0 %v1098
    %1209 = vmatpush.bf16.msra.mxu0 %v1094
    %1210 = vmatpush.bf16.msra.mxu0 %v1090
    %1211 = vmatpush.bf16.msra.mxu0 %v1086
    %1212 = vmatpush.bf16.msra.mxu0 %v1082
    %1213 = vmatpush.bf16.msra.mxu0 %v1078
    %1214 = vmatmul.bf16.gmra.mxu0 %v819
    %v1215 = vpop.f32.mrf.mxu0
    %v1216 = vadd.f32 0.0, %v1215
    %v1217 = vpop.f32.mrf.mxu0
    %1218 = vdwg.mxu0
    %1219 = vmatpush.bf16.msra.mxu0 %v1138
    %1220 = vmatpush.bf16.msra.mxu0 %v1134
    %1221 = vmatpush.bf16.msra.mxu0 %v1130
    %1222 = vmatpush.bf16.msra.mxu0 %v1126
    %1223 = vmatpush.bf16.msra.mxu0 %v1122
    %1224 = vmatpush.bf16.msra.mxu0 %v1118
    %1225 = vmatpush.bf16.msra.mxu0 %v1114
    %1226 = vmatpush.bf16.msra.mxu0 %v1110
    %1227 = vmatmul.bf16.gmra.mxu0 %v820
    %v1228 = vpop.f32.mrf.mxu0
    %v1229 = vadd.f32 %v1216, %v1228
    %v1230 = vpop.f32.mrf.mxu0
    %1231 = vdwg.mxu0
    %1232 = vmatpush.bf16.msra.mxu0 %v1107
    %1233 = vmatpush.bf16.msra.mxu0 %v1103
    %1234 = vmatpush.bf16.msra.mxu0 %v1099
    %1235 = vmatpush.bf16.msra.mxu0 %v1095
    %1236 = vmatpush.bf16.msra.mxu0 %v1091
    %1237 = vmatpush.bf16.msra.mxu0 %v1087
    %1238 = vmatpush.bf16.msra.mxu0 %v1083
    %1239 = vmatpush.bf16.msra.mxu0 %v1079
    %1240 = vmatmul.bf16.gmra.mxu0 %v819
    %v1241 = vpop.f32.mrf.mxu0
    %v1242 = vadd.f32 0.0, %v1241
    %v1243 = vpop.f32.mrf.mxu0
    %1244 = vdwg.mxu0
    %1245 = vmatpush.bf16.msra.mxu0 %v1139
    %1246 = vmatpush.bf16.msra.mxu0 %v1135
    %1247 = vmatpush.bf16.msra.mxu0 %v1131
    %1248 = vmatpush.bf16.msra.mxu0 %v1127
    %1249 = vmatpush.bf16.msra.mxu0 %v1123
    %1250 = vmatpush.bf16.msra.mxu0 %v1119
    %1251 = vmatpush.bf16.msra.mxu0 %v1115
    %1252 = vmatpush.bf16.msra.mxu0 %v1111
    %1253 = vmatmul.bf16.gmra.mxu0 %v820
    %v1254 = vpop.f32.mrf.mxu0
    %v1255 = vadd.f32 %v1242, %v1254
    %v1256 = vpop.f32.mrf.mxu0
    %1257 = vdwg.mxu0
    %1258 = vmatpush.bf16.msra.mxu0 %v1108
    %1259 = vmatpush.bf16.msra.mxu0 %v1104
    %1260 = vmatpush.bf16.msra.mxu0 %v1100
    %1261 = vmatpush.bf16.msra.mxu0 %v1096
    %1262 = vmatpush.bf16.msra.mxu0 %v1092
    %1263 = vmatpush.bf16.msra.mxu0 %v1088
    %1264 = vmatpush.bf16.msra.mxu0 %v1084
    %1265 = vmatpush.bf16.msra.mxu0 %v1080
    %1266 = vmatmul.bf16.gmra.mxu0 %v819
    %v1267 = vpop.f32.mrf.mxu0
    %v1268 = vadd.f32 0.0, %v1267
    %v1269 = vpop.f32.mrf.mxu0
    %1270 = vdwg.mxu0
    %1271 = vmatpush.bf16.msra.mxu0 %v1140
    %1272 = vmatpush.bf16.msra.mxu0 %v1136
    %1273 = vmatpush.bf16.msra.mxu0 %v1132
    %1274 = vmatpush.bf16.msra.mxu0 %v1128
    %1275 = vmatpush.bf16.msra.mxu0 %v1124
    %1276 = vmatpush.bf16.msra.mxu0 %v1120
    %1277 = vmatpush.bf16.msra.mxu0 %v1116
    %1278 = vmatpush.bf16.msra.mxu0 %v1112
    %1279 = vmatmul.bf16.gmra.mxu0 %v820
    %v1280 = vpop.f32.mrf.mxu0
    %v1281 = vadd.f32 %v1268, %v1280
    %v1282 = vpop.f32.mrf.mxu0
    %1283 = vdwg.mxu0
    %1284 = vmatpush.bf16.msra.mxu0 %v1109
    %1285 = vmatpush.bf16.msra.mxu0 %v1105
    %1286 = vmatpush.bf16.msra.mxu0 %v1101
    %1287 = vmatpush.bf16.msra.mxu0 %v1097
    %1288 = vmatpush.bf16.msra.mxu0 %v1093
    %1289 = vmatpush.bf16.msra.mxu0 %v1089
    %1290 = vmatpush.bf16.msra.mxu0 %v1085
    %1291 = vmatpush.bf16.msra.mxu0 %v1081
    %1292 = vmatmul.bf16.gmra.mxu0 %v819
    %v1293 = vpop.f32.mrf.mxu0
    %v1294 = vadd.f32 0.0, %v1293
    %v1295 = vpop.f32.mrf.mxu0
    %1296 = vdwg.mxu0
    %1297 = vmatpush.bf16.msra.mxu0 %v1141
    %1298 = vmatpush.bf16.msra.mxu0 %v1137
    %1299 = vmatpush.bf16.msra.mxu0 %v1133
    %1300 = vmatpush.bf16.msra.mxu0 %v1129
    %1301 = vmatpush.bf16.msra.mxu0 %v1125
    %1302 = vmatpush.bf16.msra.mxu0 %v1121
    %1303 = vmatpush.bf16.msra.mxu0 %v1117
    %1304 = vmatpush.bf16.msra.mxu0 %v1113
    %1305 = vmatmul.bf16.gmra.mxu0 %v820
    %v1306 = vpop.f32.mrf.mxu0
    %v1307 = vadd.f32 %v1294, %v1306
    %v1308 = vpop.f32.mrf.mxu0
    %1309 = vdwg.mxu0
    %v1310 = vmul.f32 %v1307, %v41
    %1311 = vmatpush.msra.mxu0 0.0
    %1312 = vmatpush.msra.mxu0 0.0
    %1313 = vmatpush.msra.mxu0 0.0
    %1314 = vmatpush.msra.mxu0 0.0
    %1315 = vmatpush.msra.mxu0 0.0
    %1316 = vmatpush.msra.mxu0 0.0
    %1317 = vmatpush.msra.mxu0 0.0
    %1318 = vmatpush.msra.mxu0 0.0
    %1319 = vmatpush.msra.mxu0 0.0
    %1320 = vmatpush.msra.mxu0 0.0
    %1321 = vmatpush.msra.mxu0 0.0
    %1322 = vmatpush.msra.mxu0 0.0
    %1323 = vmatpush.msra.mxu0 0.0
    %1324 = vmatpush.msra.mxu0 0.0
    %1325 = vmatpush.msra.mxu0 0.0
    %1326 = vmatpush.msra.mxu0 %v1310
    %1327 = vmatmul.f32.gmra.mxu0 %v573
    %v1328 = vpop.f32.mrf.mxu0
    %v1329 = vadd.f32 0.0, %v1328
    %1330 = vdwg.mxu0
    %v1331 = vadd.f32 %v1281, %v1329
    %v1332 = vmul.f32 %v1331, 0.2
    %v1333 = vmax.f32 %v1331, %v1332
    %v1334 = vadd.f32 %v1333, %v40
    %v1335 = vsel %vm599, %v1334, -inf
    %1336 = vmax.xlane.f32.xlu0 %v1335
    %v1337 = vpop.xlane.xlu0 %1336
    %v1338 = vsub.f32 %v1334, %v1337
    %v1339 = vmul.f32 %v1338, 1.442695
    %v1340 = vpow.pop %v1339
    %v1342 = vsel %vm599, %v1340, 0
    %1344 = vmatpush.msra.mxu0 0.0
    %1345 = vmatpush.msra.mxu0 0.0
    %1346 = vmatpush.msra.mxu0 0.0
    %1347 = vmatpush.msra.mxu0 0.0
    %1348 = vmatpush.msra.mxu0 0.0
    %1349 = vmatpush.msra.mxu0 0.0
    %1350 = vmatpush.msra.mxu0 0.0
    %1351 = vmatpush.msra.mxu0 0.0
    %1352 = vmatpush.msra.mxu0 %v49
    %1353 = vmatpush.msra.mxu0 %v48
    %1354 = vmatpush.msra.mxu0 %v47
    %1355 = vmatpush.msra.mxu0 %v46
    %1356 = vmatpush.msra.mxu0 %v45
    %1357 = vmatpush.msra.mxu0 %v44
    %1358 = vmatpush.msra.mxu0 %v43
    %1359 = vmatpush.msra.mxu0 %v42
    %1360 = vmatmul.f32.gmra.mxu0 %v1342
    %v1361 = vpop.f32.mrf.mxu0
    %v1362 = vadd.f32 0.0, %v1361
    %1363 = vdwg.mxu0
    %v1364 = vrcp.pop %v1362
    %v1365 = vmul.f32 %v1362, %v1364
    %v1366 = vsub.f32 1.0, %v1365
    %v1367 = vmul.f32 %v1364, %v1366
    %v1368 = vadd.f32 %v1364, %v1367
    %vm1369 = vweird.f32 %v1362
    %vm1370 = vweird.f32 %v1364
    %vm1371 = vmor %vm1369, %vm1370
    %v1372 = vsel %vm1371, %v1364, %v1368
    %v1373 = vand.u32 2147483647, %v1362
    %vm1374 = vcmp.eq.f32.partialorder %v1373, 8.507059e+37
    %v1375 = vand.u32 %v1362, 2147483648
    %v1376 = vor.u32 1.1754944e-38, %v1375
    %v1377 = vsel %vm1374, %v1376, %v1372
    %v1378 = vmul.f32 %v1340, %v1377
    %1379 = vmatpush.msra.mxu0 0.0
    %1380 = vmatpush.msra.mxu0 0.0
    %1381 = vmatpush.msra.mxu0 0.0
    %1382 = vmatpush.msra.mxu0 0.0
    %1383 = vmatpush.msra.mxu0 0.0
    %1384 = vmatpush.msra.mxu0 0.0
    %1385 = vmatpush.msra.mxu0 0.0
    %1386 = vmatpush.msra.mxu0 0.0
    %1387 = vmatpush.msra.mxu0 0.0
    %1388 = vmatpush.msra.mxu0 0.0
    %1389 = vmatpush.msra.mxu0 0.0
    %1390 = vmatpush.msra.mxu0 0.0
    %1391 = vmatpush.msra.mxu0 0.0
    %1392 = vmatpush.msra.mxu0 0.0
    %1393 = vmatpush.msra.mxu0 0.0
    %1394 = vmatpush.msra.mxu0 %v1229
    %1395 = vmatmul.f32.gmra.mxu0 %v645
    %v1396 = vpop.f32.mrf.mxu0
    %v1397 = vadd.f32 0.0, %v1396
    %1398 = vmatmul.f32.gmra.mxu0 %v648
    %v1399 = vpop.f32.mrf.mxu0
    %v1400 = vadd.f32 0.0, %v1399
    %1401 = vmatmul.f32.gmra.mxu0 %v651
    %v1402 = vpop.f32.mrf.mxu0
    %v1403 = vadd.f32 0.0, %v1402
    %1404 = vmatmul.f32.gmra.mxu0 %v654
    %v1405 = vpop.f32.mrf.mxu0
    %v1406 = vadd.f32 0.0, %v1405
    %1407 = vmatmul.f32.gmra.mxu0 %v657
    %v1408 = vpop.f32.mrf.mxu0
    %v1409 = vadd.f32 0.0, %v1408
    %1410 = vmatmul.f32.gmra.mxu0 %v660
    %v1411 = vpop.f32.mrf.mxu0
    %v1412 = vadd.f32 0.0, %v1411
    %1413 = vmatmul.f32.gmra.mxu0 %v663
    %v1414 = vpop.f32.mrf.mxu0
    %v1415 = vadd.f32 0.0, %v1414
    %1416 = vmatmul.f32.gmra.mxu0 %v666
    %v1417 = vpop.f32.mrf.mxu0
    %v1418 = vadd.f32 0.0, %v1417
    %1419 = vdwg.mxu0
    %1420 = vmatpush.msra.mxu0 0.0
    %1421 = vmatpush.msra.mxu0 0.0
    %1422 = vmatpush.msra.mxu0 0.0
    %1423 = vmatpush.msra.mxu0 0.0
    %1424 = vmatpush.msra.mxu0 0.0
    %1425 = vmatpush.msra.mxu0 0.0
    %1426 = vmatpush.msra.mxu0 0.0
    %1427 = vmatpush.msra.mxu0 0.0
    %1428 = vmatpush.msra.mxu0 0.0
    %1429 = vmatpush.msra.mxu0 0.0
    %1430 = vmatpush.msra.mxu0 0.0
    %1431 = vmatpush.msra.mxu0 0.0
    %1432 = vmatpush.msra.mxu0 0.0
    %1433 = vmatpush.msra.mxu0 0.0
    %1434 = vmatpush.msra.mxu0 0.0
    %1435 = vmatpush.msra.mxu0 %v1255
    %1436 = vmatmul.f32.gmra.mxu0 %v645
    %v1437 = vpop.f32.mrf.mxu0
    %v1438 = vadd.f32 0.0, %v1437
    %1439 = vmatmul.f32.gmra.mxu0 %v648
    %v1440 = vpop.f32.mrf.mxu0
    %v1441 = vadd.f32 0.0, %v1440
    %1442 = vmatmul.f32.gmra.mxu0 %v651
    %v1443 = vpop.f32.mrf.mxu0
    %v1444 = vadd.f32 0.0, %v1443
    %1445 = vmatmul.f32.gmra.mxu0 %v654
    %v1446 = vpop.f32.mrf.mxu0
    %v1447 = vadd.f32 0.0, %v1446
    %1448 = vmatmul.f32.gmra.mxu0 %v657
    %v1449 = vpop.f32.mrf.mxu0
    %v1450 = vadd.f32 0.0, %v1449
    %1451 = vmatmul.f32.gmra.mxu0 %v660
    %v1452 = vpop.f32.mrf.mxu0
    %v1453 = vadd.f32 0.0, %v1452
    %1454 = vmatmul.f32.gmra.mxu0 %v663
    %v1455 = vpop.f32.mrf.mxu0
    %v1456 = vadd.f32 0.0, %v1455
    %1457 = vmatmul.f32.gmra.mxu0 %v666
    %v1458 = vpop.f32.mrf.mxu0
    %v1459 = vadd.f32 0.0, %v1458
    %1460 = vdwg.mxu0
    %v1461 = vmul.f32 %v1397, %v58
    %v1462 = vmul.f32 %v1438, %v59
    %v1463 = vmul.f32 %v1400, %v60
    %v1464 = vmul.f32 %v1441, %v61
    %v1465 = vmul.f32 %v1403, %v62
    %v1466 = vmul.f32 %v1444, %v63
    %v1467 = vmul.f32 %v1406, %v64
    %v1468 = vmul.f32 %v1447, %v65
    %v1469 = vmul.f32 %v1409, %v66
    %v1470 = vmul.f32 %v1450, %v67
    %v1471 = vmul.f32 %v1412, %v68
    %v1472 = vmul.f32 %v1453, %v69
    %v1473 = vmul.f32 %v1415, %v70
    %v1474 = vmul.f32 %v1456, %v71
    %v1475 = vmul.f32 %v1418, %v72
    %v1476 = vmul.f32 %v1459, %v73
    %s1477 = scalar_lea.vmem %s4, 2
    %v1478 = vld [vmem:[%s1477] sm:$0x3]
    %v1480 = vperm.slane %v1478, 0
    %v1481 = vperm.slane %v1478, 1
    %v1485 = vsel %vm599, %v1378, 0
    %1487 = vmatpush.msra.mxu0 0.0
    %1488 = vmatpush.msra.mxu0 0.0
    %1489 = vmatpush.msra.mxu0 0.0
    %1490 = vmatpush.msra.mxu0 0.0
    %1491 = vmatpush.msra.mxu0 0.0
    %1492 = vmatpush.msra.mxu0 0.0
    %1493 = vmatpush.msra.mxu0 0.0
    %1494 = vmatpush.msra.mxu0 0.0
    %1495 = vmatpush.msra.mxu0 %v1475
    %1496 = vmatpush.msra.mxu0 %v1473
    %1497 = vmatpush.msra.mxu0 %v1471
    %1498 = vmatpush.msra.mxu0 %v1469
    %1499 = vmatpush.msra.mxu0 %v1467
    %1500 = vmatpush.msra.mxu0 %v1465
    %1501 = vmatpush.msra.mxu0 %v1463
    %1502 = vmatpush.msra.mxu0 %v1461
    %1503 = vmatmul.f32.gmra.mxu0 %v1485
    %v1504 = vpop.f32.mrf.mxu0
    %v1505 = vadd.f32 %v1480, %v1504
    %1506 = vdwg.mxu0
    %1507 = vmatpush.msra.mxu0 0.0
    %1508 = vmatpush.msra.mxu0 0.0
    %1509 = vmatpush.msra.mxu0 0.0
    %1510 = vmatpush.msra.mxu0 0.0
    %1511 = vmatpush.msra.mxu0 0.0
    %1512 = vmatpush.msra.mxu0 0.0
    %1513 = vmatpush.msra.mxu0 0.0
    %1514 = vmatpush.msra.mxu0 0.0
    %1515 = vmatpush.msra.mxu0 %v1476
    %1516 = vmatpush.msra.mxu0 %v1474
    %1517 = vmatpush.msra.mxu0 %v1472
    %1518 = vmatpush.msra.mxu0 %v1470
    %1519 = vmatpush.msra.mxu0 %v1468
    %1520 = vmatpush.msra.mxu0 %v1466
    %1521 = vmatpush.msra.mxu0 %v1464
    %1522 = vmatpush.msra.mxu0 %v1462
    %1523 = vmatmul.f32.gmra.mxu0 %v1485
    %v1524 = vpop.f32.mrf.mxu0
    %v1525 = vadd.f32 %v1481, %v1524
    %1526 = vdwg.mxu0
    %v1527 = vmul.f32 %v1505, 0.2
    %v1528 = vmul.f32 %v1525, 0.2
    %v1529 = vmax.f32 %v1505, %v1527
    %v1530 = vmax.f32 %v1525, %v1528
    %v1531 = vpack.c.bf16 %v1529, %v1529
    %v1532 = vpack.c.bf16 %v1530, %v1530
    %s1533 = scalar_lea.vmem [#allocation2], 1024
    %v1534 = vld [vmem:[%s1533] sm:$0xff]
    %v1535 = vld [vmem:[%s1533 + $0x8] sm:$0xff]
    %v1536 = vld [vmem:[%s1533 + $0x10] sm:$0xff]
    %v1537 = vld [vmem:[%s1533 + $0x18] sm:$0xff]
    %v1538 = vld [vmem:[%s1533 + $0x20] sm:$0xff]
    %v1539 = vld [vmem:[%s1533 + $0x28] sm:$0xff]
    %v1540 = vld [vmem:[%s1533 + $0x30] sm:$0xff]
    %v1541 = vld [vmem:[%s1533 + $0x38] sm:$0xff]
    %v1542 = vld [vmem:[%s1533 + $0x40] sm:$0xff]
    %v1543 = vld [vmem:[%s1533 + $0x48] sm:$0xff]
    %v1544 = vld [vmem:[%s1533 + $0x50] sm:$0xff]
    %v1545 = vld [vmem:[%s1533 + $0x58] sm:$0xff]
    %v1546 = vld [vmem:[%s1533 + $0x60] sm:$0xff]
    %v1547 = vld [vmem:[%s1533 + $0x68] sm:$0xff]
    %v1548 = vld [vmem:[%s1533 + $0x70] sm:$0xff]
    %v1549 = vld [vmem:[%s1533 + $0x78] sm:$0xff]
    %v1550 = vld [vmem:[%s1533 + $0x80] sm:$0xff]
    %v1551 = vld [vmem:[%s1533 + $0x88] sm:$0xff]
    %v1552 = vld [vmem:[%s1533 + $0x90] sm:$0xff]
    %v1553 = vld [vmem:[%s1533 + $0x98] sm:$0xff]
    %v1554 = vld [vmem:[%s1533 + $0xa0] sm:$0xff]
    %v1555 = vld [vmem:[%s1533 + $0xa8] sm:$0xff]
    %v1556 = vld [vmem:[%s1533 + $0xb0] sm:$0xff]
    %v1557 = vld [vmem:[%s1533 + $0xb8] sm:$0xff]
    %v1558 = vld [vmem:[%s1533 + $0xc0] sm:$0xff]
    %v1559 = vld [vmem:[%s1533 + $0xc8] sm:$0xff]
    %v1560 = vld [vmem:[%s1533 + $0xd0] sm:$0xff]
    %v1561 = vld [vmem:[%s1533 + $0xd8] sm:$0xff]
    %v1562 = vld [vmem:[%s1533 + $0xe0] sm:$0xff]
    %v1563 = vld [vmem:[%s1533 + $0xe8] sm:$0xff]
    %v1564 = vld [vmem:[%s1533 + $0xf0] sm:$0xff]
    %v1565 = vld [vmem:[%s1533 + $0xf8] sm:$0xff]
    %v1566 = vld [vmem:[%s1533 + $0x100] sm:$0xff]
    %v1567 = vld [vmem:[%s1533 + $0x108] sm:$0xff]
    %v1568 = vld [vmem:[%s1533 + $0x110] sm:$0xff]
    %v1569 = vld [vmem:[%s1533 + $0x118] sm:$0xff]
    %v1570 = vld [vmem:[%s1533 + $0x120] sm:$0xff]
    %v1571 = vld [vmem:[%s1533 + $0x128] sm:$0xff]
    %v1572 = vld [vmem:[%s1533 + $0x130] sm:$0xff]
    %v1573 = vld [vmem:[%s1533 + $0x138] sm:$0xff]
    %v1574 = vld [vmem:[%s1533 + $0x140] sm:$0xff]
    %v1575 = vld [vmem:[%s1533 + $0x148] sm:$0xff]
    %v1576 = vld [vmem:[%s1533 + $0x150] sm:$0xff]
    %v1577 = vld [vmem:[%s1533 + $0x158] sm:$0xff]
    %v1578 = vld [vmem:[%s1533 + $0x160] sm:$0xff]
    %v1579 = vld [vmem:[%s1533 + $0x168] sm:$0xff]
    %v1580 = vld [vmem:[%s1533 + $0x170] sm:$0xff]
    %v1581 = vld [vmem:[%s1533 + $0x178] sm:$0xff]
    %v1582 = vld [vmem:[%s1533 + $0x180] sm:$0xff]
    %v1583 = vld [vmem:[%s1533 + $0x188] sm:$0xff]
    %v1584 = vld [vmem:[%s1533 + $0x190] sm:$0xff]
    %v1585 = vld [vmem:[%s1533 + $0x198] sm:$0xff]
    %v1586 = vld [vmem:[%s1533 + $0x1a0] sm:$0xff]
    %v1587 = vld [vmem:[%s1533 + $0x1a8] sm:$0xff]
    %v1588 = vld [vmem:[%s1533 + $0x1b0] sm:$0xff]
    %v1589 = vld [vmem:[%s1533 + $0x1b8] sm:$0xff]
    %v1590 = vld [vmem:[%s1533 + $0x1c0] sm:$0xff]
    %v1591 = vld [vmem:[%s1533 + $0x1c8] sm:$0xff]
    %v1592 = vld [vmem:[%s1533 + $0x1d0] sm:$0xff]
    %v1593 = vld [vmem:[%s1533 + $0x1d8] sm:$0xff]
    %v1594 = vld [vmem:[%s1533 + $0x1e0] sm:$0xff]
    %v1595 = vld [vmem:[%s1533 + $0x1e8] sm:$0xff]
    %v1596 = vld [vmem:[%s1533 + $0x1f0] sm:$0xff]
    %v1597 = vld [vmem:[%s1533 + $0x1f8] sm:$0xff]
    %v1662 = vunpack.c.l.b16 %v1534
    %v1663 = vunpack.c.h.b16 %v1534
    %v1664 = vunpack.c.l.b16 %v1535
    %v1665 = vunpack.c.h.b16 %v1535
    %v1666 = vunpack.c.l.b16 %v1536
    %v1667 = vunpack.c.h.b16 %v1536
    %v1668 = vunpack.c.l.b16 %v1537
    %v1669 = vunpack.c.h.b16 %v1537
    %v1670 = vunpack.c.l.b16 %v1538
    %v1671 = vunpack.c.h.b16 %v1538
    %v1672 = vunpack.c.l.b16 %v1539
    %v1673 = vunpack.c.h.b16 %v1539
    %v1674 = vunpack.c.l.b16 %v1540
    %v1675 = vunpack.c.h.b16 %v1540
    %v1676 = vunpack.c.l.b16 %v1541
    %v1677 = vunpack.c.h.b16 %v1541
    %v1678 = vunpack.c.l.b16 %v1542
    %v1679 = vunpack.c.h.b16 %v1542
    %v1680 = vunpack.c.l.b16 %v1543
    %v1681 = vunpack.c.h.b16 %v1543
    %v1682 = vunpack.c.l.b16 %v1544
    %v1683 = vunpack.c.h.b16 %v1544
    %v1684 = vunpack.c.l.b16 %v1545
    %v1685 = vunpack.c.h.b16 %v1545
    %v1686 = vunpack.c.l.b16 %v1546
    %v1687 = vunpack.c.h.b16 %v1546
    %v1688 = vunpack.c.l.b16 %v1547
    %v1689 = vunpack.c.h.b16 %v1547
    %v1690 = vunpack.c.l.b16 %v1548
    %v1691 = vunpack.c.h.b16 %v1548
    %v1692 = vunpack.c.l.b16 %v1549
    %v1693 = vunpack.c.h.b16 %v1549
    %v1694 = vunpack.c.l.b16 %v1550
    %v1695 = vunpack.c.h.b16 %v1550
    %v1696 = vunpack.c.l.b16 %v1551
    %v1697 = vunpack.c.h.b16 %v1551
    %v1698 = vunpack.c.l.b16 %v1552
    %v1699 = vunpack.c.h.b16 %v1552
    %v1700 = vunpack.c.l.b16 %v1553
    %v1701 = vunpack.c.h.b16 %v1553
    %v1702 = vunpack.c.l.b16 %v1554
    %v1703 = vunpack.c.h.b16 %v1554
    %v1704 = vunpack.c.l.b16 %v1555
    %v1705 = vunpack.c.h.b16 %v1555
    %v1706 = vunpack.c.l.b16 %v1556
    %v1707 = vunpack.c.h.b16 %v1556
    %v1708 = vunpack.c.l.b16 %v1557
    %v1709 = vunpack.c.h.b16 %v1557
    %v1710 = vunpack.c.l.b16 %v1558
    %v1711 = vunpack.c.h.b16 %v1558
    %v1712 = vunpack.c.l.b16 %v1559
    %v1713 = vunpack.c.h.b16 %v1559
    %v1714 = vunpack.c.l.b16 %v1560
    %v1715 = vunpack.c.h.b16 %v1560
    %v1716 = vunpack.c.l.b16 %v1561
    %v1717 = vunpack.c.h.b16 %v1561
    %v1718 = vunpack.c.l.b16 %v1562
    %v1719 = vunpack.c.h.b16 %v1562
    %v1720 = vunpack.c.l.b16 %v1563
    %v1721 = vunpack.c.h.b16 %v1563
    %v1722 = vunpack.c.l.b16 %v1564
    %v1723 = vunpack.c.h.b16 %v1564
    %v1724 = vunpack.c.l.b16 %v1565
    %v1725 = vunpack.c.h.b16 %v1565
    %v1726 = vunpack.c.l.b16 %v1566
    %v1727 = vunpack.c.h.b16 %v1566
    %v1728 = vunpack.c.l.b16 %v1567
    %v1729 = vunpack.c.h.b16 %v1567
    %v1730 = vunpack.c.l.b16 %v1568
    %v1731 = vunpack.c.h.b16 %v1568
    %v1732 = vunpack.c.l.b16 %v1569
    %v1733 = vunpack.c.h.b16 %v1569
    %v1734 = vunpack.c.l.b16 %v1570
    %v1735 = vunpack.c.h.b16 %v1570
    %v1736 = vunpack.c.l.b16 %v1571
    %v1737 = vunpack.c.h.b16 %v1571
    %v1738 = vunpack.c.l.b16 %v1572
    %v1739 = vunpack.c.h.b16 %v1572
    %v1740 = vunpack.c.l.b16 %v1573
    %v1741 = vunpack.c.h.b16 %v1573
    %v1742 = vunpack.c.l.b16 %v1574
    %v1743 = vunpack.c.h.b16 %v1574
    %v1744 = vunpack.c.l.b16 %v1575
    %v1745 = vunpack.c.h.b16 %v1575
    %v1746 = vunpack.c.l.b16 %v1576
    %v1747 = vunpack.c.h.b16 %v1576
    %v1748 = vunpack.c.l.b16 %v1577
    %v1749 = vunpack.c.h.b16 %v1577
    %v1750 = vunpack.c.l.b16 %v1578
    %v1751 = vunpack.c.h.b16 %v1578
    %v1752 = vunpack.c.l.b16 %v1579
    %v1753 = vunpack.c.h.b16 %v1579
    %v1754 = vunpack.c.l.b16 %v1580
    %v1755 = vunpack.c.h.b16 %v1580
    %v1756 = vunpack.c.l.b16 %v1581
    %v1757 = vunpack.c.h.b16 %v1581
    %v1758 = vunpack.c.l.b16 %v1582
    %v1759 = vunpack.c.h.b16 %v1582
    %v1760 = vunpack.c.l.b16 %v1583
    %v1761 = vunpack.c.h.b16 %v1583
    %v1762 = vunpack.c.l.b16 %v1584
    %v1763 = vunpack.c.h.b16 %v1584
    %v1764 = vunpack.c.l.b16 %v1585
    %v1765 = vunpack.c.h.b16 %v1585
    %v1766 = vunpack.c.l.b16 %v1586
    %v1767 = vunpack.c.h.b16 %v1586
    %v1768 = vunpack.c.l.b16 %v1587
    %v1769 = vunpack.c.h.b16 %v1587
    %v1770 = vunpack.c.l.b16 %v1588
    %v1771 = vunpack.c.h.b16 %v1588
    %v1772 = vunpack.c.l.b16 %v1589
    %v1773 = vunpack.c.h.b16 %v1589
    %v1774 = vunpack.c.l.b16 %v1590
    %v1775 = vunpack.c.h.b16 %v1590
    %v1776 = vunpack.c.l.b16 %v1591
    %v1777 = vunpack.c.h.b16 %v1591
    %v1778 = vunpack.c.l.b16 %v1592
    %v1779 = vunpack.c.h.b16 %v1592
    %v1780 = vunpack.c.l.b16 %v1593
    %v1781 = vunpack.c.h.b16 %v1593
    %v1782 = vunpack.c.l.b16 %v1594
    %v1783 = vunpack.c.h.b16 %v1594
    %v1784 = vunpack.c.l.b16 %v1595
    %v1785 = vunpack.c.h.b16 %v1595
    %v1786 = vunpack.c.l.b16 %v1596
    %v1787 = vunpack.c.h.b16 %v1596
    %v1788 = vunpack.c.l.b16 %v1597
    %v1789 = vunpack.c.h.b16 %v1597
    %v1790 = vpack.c.b16 %v1666, %v1662
    %v1791 = vpack.c.b16 %v1667, %v1663
    %v1792 = vpack.c.b16 %v1668, %v1664
    %v1793 = vpack.c.b16 %v1669, %v1665
    %v1794 = vpack.c.b16 %v1674, %v1670
    %v1795 = vpack.c.b16 %v1675, %v1671
    %v1796 = vpack.c.b16 %v1676, %v1672
    %v1797 = vpack.c.b16 %v1677, %v1673
    %v1798 = vpack.c.b16 %v1682, %v1678
    %v1799 = vpack.c.b16 %v1683, %v1679
    %v1800 = vpack.c.b16 %v1684, %v1680
    %v1801 = vpack.c.b16 %v1685, %v1681
    %v1802 = vpack.c.b16 %v1690, %v1686
    %v1803 = vpack.c.b16 %v1691, %v1687
    %v1804 = vpack.c.b16 %v1692, %v1688
    %v1805 = vpack.c.b16 %v1693, %v1689
    %v1806 = vpack.c.b16 %v1698, %v1694
    %v1807 = vpack.c.b16 %v1699, %v1695
    %v1808 = vpack.c.b16 %v1700, %v1696
    %v1809 = vpack.c.b16 %v1701, %v1697
    %v1810 = vpack.c.b16 %v1706, %v1702
    %v1811 = vpack.c.b16 %v1707, %v1703
    %v1812 = vpack.c.b16 %v1708, %v1704
    %v1813 = vpack.c.b16 %v1709, %v1705
    %v1814 = vpack.c.b16 %v1714, %v1710
    %v1815 = vpack.c.b16 %v1715, %v1711
    %v1816 = vpack.c.b16 %v1716, %v1712
    %v1817 = vpack.c.b16 %v1717, %v1713
    %v1818 = vpack.c.b16 %v1722, %v1718
    %v1819 = vpack.c.b16 %v1723, %v1719
    %v1820 = vpack.c.b16 %v1724, %v1720
    %v1821 = vpack.c.b16 %v1725, %v1721
    %v1822 = vpack.c.b16 %v1730, %v1726
    %v1823 = vpack.c.b16 %v1731, %v1727
    %v1824 = vpack.c.b16 %v1732, %v1728
    %v1825 = vpack.c.b16 %v1733, %v1729
    %v1826 = vpack.c.b16 %v1738, %v1734
    %v1827 = vpack.c.b16 %v1739, %v1735
    %v1828 = vpack.c.b16 %v1740, %v1736
    %v1829 = vpack.c.b16 %v1741, %v1737
    %v1830 = vpack.c.b16 %v1746, %v1742
    %v1831 = vpack.c.b16 %v1747, %v1743
    %v1832 = vpack.c.b16 %v1748, %v1744
    %v1833 = vpack.c.b16 %v1749, %v1745
    %v1834 = vpack.c.b16 %v1754, %v1750
    %v1835 = vpack.c.b16 %v1755, %v1751
    %v1836 = vpack.c.b16 %v1756, %v1752
    %v1837 = vpack.c.b16 %v1757, %v1753
    %v1838 = vpack.c.b16 %v1762, %v1758
    %v1839 = vpack.c.b16 %v1763, %v1759
    %v1840 = vpack.c.b16 %v1764, %v1760
    %v1841 = vpack.c.b16 %v1765, %v1761
    %v1842 = vpack.c.b16 %v1770, %v1766
    %v1843 = vpack.c.b16 %v1771, %v1767
    %v1844 = vpack.c.b16 %v1772, %v1768
    %v1845 = vpack.c.b16 %v1773, %v1769
    %v1846 = vpack.c.b16 %v1778, %v1774
    %v1847 = vpack.c.b16 %v1779, %v1775
    %v1848 = vpack.c.b16 %v1780, %v1776
    %v1849 = vpack.c.b16 %v1781, %v1777
    %v1850 = vpack.c.b16 %v1786, %v1782
    %v1851 = vpack.c.b16 %v1787, %v1783
    %v1852 = vpack.c.b16 %v1788, %v1784
    %v1853 = vpack.c.b16 %v1789, %v1785
    %1918 = vmatpush.bf16.msra.mxu0 %v1818
    %1919 = vmatpush.bf16.msra.mxu0 %v1814
    %1920 = vmatpush.bf16.msra.mxu0 %v1810
    %1921 = vmatpush.bf16.msra.mxu0 %v1806
    %1922 = vmatpush.bf16.msra.mxu0 %v1802
    %1923 = vmatpush.bf16.msra.mxu0 %v1798
    %1924 = vmatpush.bf16.msra.mxu0 %v1794
    %1925 = vmatpush.bf16.msra.mxu0 %v1790
    %1926 = vmatmul.bf16.gmra.mxu0 %v1531
    %v1927 = vpop.f32.mrf.mxu0
    %v1928 = vadd.f32 0.0, %v1927
    %v1929 = vpop.f32.mrf.mxu0
    %1930 = vdwg.mxu0
    %1931 = vmatpush.bf16.msra.mxu0 %v1850
    %1932 = vmatpush.bf16.msra.mxu0 %v1846
    %1933 = vmatpush.bf16.msra.mxu0 %v1842
    %1934 = vmatpush.bf16.msra.mxu0 %v1838
    %1935 = vmatpush.bf16.msra.mxu0 %v1834
    %1936 = vmatpush.bf16.msra.mxu0 %v1830
    %1937 = vmatpush.bf16.msra.mxu0 %v1826
    %1938 = vmatpush.bf16.msra.mxu0 %v1822
    %1939 = vmatmul.bf16.gmra.mxu0 %v1532
    %v1940 = vpop.f32.mrf.mxu0
    %v1941 = vadd.f32 %v1928, %v1940
    %v1942 = vpop.f32.mrf.mxu0
    %1943 = vdwg.mxu0
    %1944 = vmatpush.bf16.msra.mxu0 %v1819
    %1945 = vmatpush.bf16.msra.mxu0 %v1815
    %1946 = vmatpush.bf16.msra.mxu0 %v1811
    %1947 = vmatpush.bf16.msra.mxu0 %v1807
    %1948 = vmatpush.bf16.msra.mxu0 %v1803
    %1949 = vmatpush.bf16.msra.mxu0 %v1799
    %1950 = vmatpush.bf16.msra.mxu0 %v1795
    %1951 = vmatpush.bf16.msra.mxu0 %v1791
    %1952 = vmatmul.bf16.gmra.mxu0 %v1531
    %v1953 = vpop.f32.mrf.mxu0
    %v1954 = vadd.f32 0.0, %v1953
    %v1955 = vpop.f32.mrf.mxu0
    %1956 = vdwg.mxu0
    %1957 = vmatpush.bf16.msra.mxu0 %v1851
    %1958 = vmatpush.bf16.msra.mxu0 %v1847
    %1959 = vmatpush.bf16.msra.mxu0 %v1843
    %1960 = vmatpush.bf16.msra.mxu0 %v1839
    %1961 = vmatpush.bf16.msra.mxu0 %v1835
    %1962 = vmatpush.bf16.msra.mxu0 %v1831
    %1963 = vmatpush.bf16.msra.mxu0 %v1827
    %1964 = vmatpush.bf16.msra.mxu0 %v1823
    %1965 = vmatmul.bf16.gmra.mxu0 %v1532
    %v1966 = vpop.f32.mrf.mxu0
    %v1967 = vadd.f32 %v1954, %v1966
    %v1968 = vpop.f32.mrf.mxu0
    %1969 = vdwg.mxu0
    %1970 = vmatpush.bf16.msra.mxu0 %v1820
    %1971 = vmatpush.bf16.msra.mxu0 %v1816
    %1972 = vmatpush.bf16.msra.mxu0 %v1812
    %1973 = vmatpush.bf16.msra.mxu0 %v1808
    %1974 = vmatpush.bf16.msra.mxu0 %v1804
    %1975 = vmatpush.bf16.msra.mxu0 %v1800
    %1976 = vmatpush.bf16.msra.mxu0 %v1796
    %1977 = vmatpush.bf16.msra.mxu0 %v1792
    %1978 = vmatmul.bf16.gmra.mxu0 %v1531
    %v1979 = vpop.f32.mrf.mxu0
    %v1980 = vadd.f32 0.0, %v1979
    %v1981 = vpop.f32.mrf.mxu0
    %1982 = vdwg.mxu0
    %1983 = vmatpush.bf16.msra.mxu0 %v1852
    %1984 = vmatpush.bf16.msra.mxu0 %v1848
    %1985 = vmatpush.bf16.msra.mxu0 %v1844
    %1986 = vmatpush.bf16.msra.mxu0 %v1840
    %1987 = vmatpush.bf16.msra.mxu0 %v1836
    %1988 = vmatpush.bf16.msra.mxu0 %v1832
    %1989 = vmatpush.bf16.msra.mxu0 %v1828
    %1990 = vmatpush.bf16.msra.mxu0 %v1824
    %1991 = vmatmul.bf16.gmra.mxu0 %v1532
    %v1992 = vpop.f32.mrf.mxu0
    %v1993 = vadd.f32 %v1980, %v1992
    %v1994 = vpop.f32.mrf.mxu0
    %1995 = vdwg.mxu0
    %1996 = vmatpush.bf16.msra.mxu0 %v1821
    %1997 = vmatpush.bf16.msra.mxu0 %v1817
    %1998 = vmatpush.bf16.msra.mxu0 %v1813
    %1999 = vmatpush.bf16.msra.mxu0 %v1809
    %2000 = vmatpush.bf16.msra.mxu0 %v1805
    %2001 = vmatpush.bf16.msra.mxu0 %v1801
    %2002 = vmatpush.bf16.msra.mxu0 %v1797
    %2003 = vmatpush.bf16.msra.mxu0 %v1793
    %2004 = vmatmul.bf16.gmra.mxu0 %v1531
    %v2005 = vpop.f32.mrf.mxu0
    %v2006 = vadd.f32 0.0, %v2005
    %v2007 = vpop.f32.mrf.mxu0
    %2008 = vdwg.mxu0
    %2009 = vmatpush.bf16.msra.mxu0 %v1853
    %2010 = vmatpush.bf16.msra.mxu0 %v1849
    %2011 = vmatpush.bf16.msra.mxu0 %v1845
    %2012 = vmatpush.bf16.msra.mxu0 %v1841
    %2013 = vmatpush.bf16.msra.mxu0 %v1837
    %2014 = vmatpush.bf16.msra.mxu0 %v1833
    %2015 = vmatpush.bf16.msra.mxu0 %v1829
    %2016 = vmatpush.bf16.msra.mxu0 %v1825
    %2017 = vmatmul.bf16.gmra.mxu0 %v1532
    %v2018 = vpop.f32.mrf.mxu0
    %v2019 = vadd.f32 %v2006, %v2018
    %v2020 = vpop.f32.mrf.mxu0
    %2021 = vdwg.mxu0
    %v2022 = vmul.f32 %v2019, %v41
    %2023 = vmatpush.msra.mxu0 0.0
    %2024 = vmatpush.msra.mxu0 0.0
    %2025 = vmatpush.msra.mxu0 0.0
    %2026 = vmatpush.msra.mxu0 0.0
    %2027 = vmatpush.msra.mxu0 0.0
    %2028 = vmatpush.msra.mxu0 0.0
    %2029 = vmatpush.msra.mxu0 0.0
    %2030 = vmatpush.msra.mxu0 0.0
    %2031 = vmatpush.msra.mxu0 0.0
    %2032 = vmatpush.msra.mxu0 0.0
    %2033 = vmatpush.msra.mxu0 0.0
    %2034 = vmatpush.msra.mxu0 0.0
    %2035 = vmatpush.msra.mxu0 0.0
    %2036 = vmatpush.msra.mxu0 0.0
    %2037 = vmatpush.msra.mxu0 0.0
    %2038 = vmatpush.msra.mxu0 %v2022
    %2039 = vmatmul.f32.gmra.mxu0 %v573
    %v2040 = vpop.f32.mrf.mxu0
    %v2041 = vadd.f32 0.0, %v2040
    %2042 = vdwg.mxu0
    %v2043 = vadd.f32 %v1993, %v2041
    %v2044 = vmul.f32 %v2043, 0.2
    %v2045 = vmax.f32 %v2043, %v2044
    %v2046 = vadd.f32 %v2045, %v40
    %v2047 = vsel %vm599, %v2046, -inf
    %2048 = vmax.xlane.f32.xlu0 %v2047
    %v2049 = vpop.xlane.xlu0 %2048
    %v2050 = vsub.f32 %v2046, %v2049
    %v2051 = vmul.f32 %v2050, 1.442695
    %v2052 = vpow.pop %v2051
    %v2054 = vsel %vm599, %v2052, 0
    %2056 = vmatpush.msra.mxu0 0.0
    %2057 = vmatpush.msra.mxu0 0.0
    %2058 = vmatpush.msra.mxu0 0.0
    %2059 = vmatpush.msra.mxu0 0.0
    %2060 = vmatpush.msra.mxu0 0.0
    %2061 = vmatpush.msra.mxu0 0.0
    %2062 = vmatpush.msra.mxu0 0.0
    %2063 = vmatpush.msra.mxu0 0.0
    %2064 = vmatpush.msra.mxu0 %v49
    %2065 = vmatpush.msra.mxu0 %v48
    %2066 = vmatpush.msra.mxu0 %v47
    %2067 = vmatpush.msra.mxu0 %v46
    %2068 = vmatpush.msra.mxu0 %v45
    %2069 = vmatpush.msra.mxu0 %v44
    %2070 = vmatpush.msra.mxu0 %v43
    %2071 = vmatpush.msra.mxu0 %v42
    %2072 = vmatmul.f32.gmra.mxu0 %v2054
    %v2073 = vpop.f32.mrf.mxu0
    %v2074 = vadd.f32 0.0, %v2073
    %2075 = vdwg.mxu0
    %v2076 = vrcp.pop %v2074
    %v2077 = vmul.f32 %v2074, %v2076
    %v2078 = vsub.f32 1.0, %v2077
    %v2079 = vmul.f32 %v2076, %v2078
    %v2080 = vadd.f32 %v2076, %v2079
    %vm2081 = vweird.f32 %v2074
    %vm2082 = vweird.f32 %v2076
    %vm2083 = vmor %vm2081, %vm2082
    %v2084 = vsel %vm2083, %v2076, %v2080
    %v2085 = vand.u32 2147483647, %v2074
    %vm2086 = vcmp.eq.f32.partialorder %v2085, 8.507059e+37
    %v2087 = vand.u32 %v2074, 2147483648
    %v2088 = vor.u32 1.1754944e-38, %v2087
    %v2089 = vsel %vm2086, %v2088, %v2084
    %v2090 = vmul.f32 %v2052, %v2089
    %2091 = vmatpush.msra.mxu0 0.0
    %2092 = vmatpush.msra.mxu0 0.0
    %2093 = vmatpush.msra.mxu0 0.0
    %2094 = vmatpush.msra.mxu0 0.0
    %2095 = vmatpush.msra.mxu0 0.0
    %2096 = vmatpush.msra.mxu0 0.0
    %2097 = vmatpush.msra.mxu0 0.0
    %2098 = vmatpush.msra.mxu0 0.0
    %2099 = vmatpush.msra.mxu0 0.0
    %2100 = vmatpush.msra.mxu0 0.0
    %2101 = vmatpush.msra.mxu0 0.0
    %2102 = vmatpush.msra.mxu0 0.0
    %2103 = vmatpush.msra.mxu0 0.0
    %2104 = vmatpush.msra.mxu0 0.0
    %2105 = vmatpush.msra.mxu0 0.0
    %2106 = vmatpush.msra.mxu0 %v1941
    %2107 = vmatmul.f32.gmra.mxu0 %v645
    %v2108 = vpop.f32.mrf.mxu0
    %v2109 = vadd.f32 0.0, %v2108
    %2110 = vmatmul.f32.gmra.mxu0 %v648
    %v2111 = vpop.f32.mrf.mxu0
    %v2112 = vadd.f32 0.0, %v2111
    %2113 = vmatmul.f32.gmra.mxu0 %v651
    %v2114 = vpop.f32.mrf.mxu0
    %v2115 = vadd.f32 0.0, %v2114
    %2116 = vmatmul.f32.gmra.mxu0 %v654
    %v2117 = vpop.f32.mrf.mxu0
    %v2118 = vadd.f32 0.0, %v2117
    %2119 = vmatmul.f32.gmra.mxu0 %v657
    %v2120 = vpop.f32.mrf.mxu0
    %v2121 = vadd.f32 0.0, %v2120
    %2122 = vmatmul.f32.gmra.mxu0 %v660
    %v2123 = vpop.f32.mrf.mxu0
    %v2124 = vadd.f32 0.0, %v2123
    %2125 = vmatmul.f32.gmra.mxu0 %v663
    %v2126 = vpop.f32.mrf.mxu0
    %v2127 = vadd.f32 0.0, %v2126
    %2128 = vmatmul.f32.gmra.mxu0 %v666
    %v2129 = vpop.f32.mrf.mxu0
    %v2130 = vadd.f32 0.0, %v2129
    %2131 = vdwg.mxu0
    %2132 = vmatpush.msra.mxu0 0.0
    %2133 = vmatpush.msra.mxu0 0.0
    %2134 = vmatpush.msra.mxu0 0.0
    %2135 = vmatpush.msra.mxu0 0.0
    %2136 = vmatpush.msra.mxu0 0.0
    %2137 = vmatpush.msra.mxu0 0.0
    %2138 = vmatpush.msra.mxu0 0.0
    %2139 = vmatpush.msra.mxu0 0.0
    %2140 = vmatpush.msra.mxu0 0.0
    %2141 = vmatpush.msra.mxu0 0.0
    %2142 = vmatpush.msra.mxu0 0.0
    %2143 = vmatpush.msra.mxu0 0.0
    %2144 = vmatpush.msra.mxu0 0.0
    %2145 = vmatpush.msra.mxu0 0.0
    %2146 = vmatpush.msra.mxu0 0.0
    %2147 = vmatpush.msra.mxu0 %v1967
    %2148 = vmatmul.f32.gmra.mxu0 %v645
    %v2149 = vpop.f32.mrf.mxu0
    %v2150 = vadd.f32 0.0, %v2149
    %2151 = vmatmul.f32.gmra.mxu0 %v648
    %v2152 = vpop.f32.mrf.mxu0
    %v2153 = vadd.f32 0.0, %v2152
    %2154 = vmatmul.f32.gmra.mxu0 %v651
    %v2155 = vpop.f32.mrf.mxu0
    %v2156 = vadd.f32 0.0, %v2155
    %2157 = vmatmul.f32.gmra.mxu0 %v654
    %v2158 = vpop.f32.mrf.mxu0
    %v2159 = vadd.f32 0.0, %v2158
    %2160 = vmatmul.f32.gmra.mxu0 %v657
    %v2161 = vpop.f32.mrf.mxu0
    %v2162 = vadd.f32 0.0, %v2161
    %2163 = vmatmul.f32.gmra.mxu0 %v660
    %v2164 = vpop.f32.mrf.mxu0
    %v2165 = vadd.f32 0.0, %v2164
    %2166 = vmatmul.f32.gmra.mxu0 %v663
    %v2167 = vpop.f32.mrf.mxu0
    %v2168 = vadd.f32 0.0, %v2167
    %2169 = vmatmul.f32.gmra.mxu0 %v666
    %v2170 = vpop.f32.mrf.mxu0
    %v2171 = vadd.f32 0.0, %v2170
    %2172 = vdwg.mxu0
    %v2173 = vmul.f32 %v2109, %v58
    %v2174 = vmul.f32 %v2150, %v59
    %v2175 = vmul.f32 %v2112, %v60
    %v2176 = vmul.f32 %v2153, %v61
    %v2177 = vmul.f32 %v2115, %v62
    %v2178 = vmul.f32 %v2156, %v63
    %v2179 = vmul.f32 %v2118, %v64
    %v2180 = vmul.f32 %v2159, %v65
    %v2181 = vmul.f32 %v2121, %v66
    %v2182 = vmul.f32 %v2162, %v67
    %v2183 = vmul.f32 %v2124, %v68
    %v2184 = vmul.f32 %v2165, %v69
    %v2185 = vmul.f32 %v2127, %v70
    %v2186 = vmul.f32 %v2168, %v71
    %v2187 = vmul.f32 %v2130, %v72
    %v2188 = vmul.f32 %v2171, %v73
    %s2189 = scalar_lea.vmem %s4, 4
    %v2190 = vld [vmem:[%s2189] sm:$0x3]
    %v2192 = vperm.slane %v2190, 0
    %v2193 = vperm.slane %v2190, 1
    %v2197 = vsel %vm599, %v2090, 0
    %2199 = vmatpush.msra.mxu0 0.0
    %2200 = vmatpush.msra.mxu0 0.0
    %2201 = vmatpush.msra.mxu0 0.0
    %2202 = vmatpush.msra.mxu0 0.0
    %2203 = vmatpush.msra.mxu0 0.0
    %2204 = vmatpush.msra.mxu0 0.0
    %2205 = vmatpush.msra.mxu0 0.0
    %2206 = vmatpush.msra.mxu0 0.0
    %2207 = vmatpush.msra.mxu0 %v2187
    %2208 = vmatpush.msra.mxu0 %v2185
    %2209 = vmatpush.msra.mxu0 %v2183
    %2210 = vmatpush.msra.mxu0 %v2181
    %2211 = vmatpush.msra.mxu0 %v2179
    %2212 = vmatpush.msra.mxu0 %v2177
    %2213 = vmatpush.msra.mxu0 %v2175
    %2214 = vmatpush.msra.mxu0 %v2173
    %2215 = vmatmul.f32.gmra.mxu0 %v2197
    %v2216 = vpop.f32.mrf.mxu0
    %v2217 = vadd.f32 %v2192, %v2216
    %2218 = vdwg.mxu0
    %2219 = vmatpush.msra.mxu0 0.0
    %2220 = vmatpush.msra.mxu0 0.0
    %2221 = vmatpush.msra.mxu0 0.0
    %2222 = vmatpush.msra.mxu0 0.0
    %2223 = vmatpush.msra.mxu0 0.0
    %2224 = vmatpush.msra.mxu0 0.0
    %2225 = vmatpush.msra.mxu0 0.0
    %2226 = vmatpush.msra.mxu0 0.0
    %2227 = vmatpush.msra.mxu0 %v2188
    %2228 = vmatpush.msra.mxu0 %v2186
    %2229 = vmatpush.msra.mxu0 %v2184
    %2230 = vmatpush.msra.mxu0 %v2182
    %2231 = vmatpush.msra.mxu0 %v2180
    %2232 = vmatpush.msra.mxu0 %v2178
    %2233 = vmatpush.msra.mxu0 %v2176
    %2234 = vmatpush.msra.mxu0 %v2174
    %2235 = vmatmul.f32.gmra.mxu0 %v2197
    %v2236 = vpop.f32.mrf.mxu0
    %v2237 = vadd.f32 %v2193, %v2236
    %2238 = vdwg.mxu0
    %v2239 = vmul.f32 %v2217, 0.2
    %v2240 = vmul.f32 %v2237, 0.2
    %v2241 = vmax.f32 %v2217, %v2239
    %v2242 = vmax.f32 %v2237, %v2240
    %v2243 = vpack.c.bf16 %v2241, %v2241
    %v2244 = vpack.c.bf16 %v2242, %v2242
    %s2245 = scalar_lea.vmem [#allocation2], 1536
    %v2246 = vld [vmem:[%s2245] sm:$0xff]
    %v2247 = vld [vmem:[%s2245 + $0x8] sm:$0xff]
    %v2248 = vld [vmem:[%s2245 + $0x10] sm:$0xff]
    %v2249 = vld [vmem:[%s2245 + $0x18] sm:$0xff]
    %v2250 = vld [vmem:[%s2245 + $0x20] sm:$0xff]
    %v2251 = vld [vmem:[%s2245 + $0x28] sm:$0xff]
    %v2252 = vld [vmem:[%s2245 + $0x30] sm:$0xff]
    %v2253 = vld [vmem:[%s2245 + $0x38] sm:$0xff]
    %v2254 = vld [vmem:[%s2245 + $0x40] sm:$0xff]
    %v2255 = vld [vmem:[%s2245 + $0x48] sm:$0xff]
    %v2256 = vld [vmem:[%s2245 + $0x50] sm:$0xff]
    %v2257 = vld [vmem:[%s2245 + $0x58] sm:$0xff]
    %v2258 = vld [vmem:[%s2245 + $0x60] sm:$0xff]
    %v2259 = vld [vmem:[%s2245 + $0x68] sm:$0xff]
    %v2260 = vld [vmem:[%s2245 + $0x70] sm:$0xff]
    %v2261 = vld [vmem:[%s2245 + $0x78] sm:$0xff]
    %v2262 = vld [vmem:[%s2245 + $0x80] sm:$0xff]
    %v2263 = vld [vmem:[%s2245 + $0x88] sm:$0xff]
    %v2264 = vld [vmem:[%s2245 + $0x90] sm:$0xff]
    %v2265 = vld [vmem:[%s2245 + $0x98] sm:$0xff]
    %v2266 = vld [vmem:[%s2245 + $0xa0] sm:$0xff]
    %v2267 = vld [vmem:[%s2245 + $0xa8] sm:$0xff]
    %v2268 = vld [vmem:[%s2245 + $0xb0] sm:$0xff]
    %v2269 = vld [vmem:[%s2245 + $0xb8] sm:$0xff]
    %v2270 = vld [vmem:[%s2245 + $0xc0] sm:$0xff]
    %v2271 = vld [vmem:[%s2245 + $0xc8] sm:$0xff]
    %v2272 = vld [vmem:[%s2245 + $0xd0] sm:$0xff]
    %v2273 = vld [vmem:[%s2245 + $0xd8] sm:$0xff]
    %v2274 = vld [vmem:[%s2245 + $0xe0] sm:$0xff]
    %v2275 = vld [vmem:[%s2245 + $0xe8] sm:$0xff]
    %v2276 = vld [vmem:[%s2245 + $0xf0] sm:$0xff]
    %v2277 = vld [vmem:[%s2245 + $0xf8] sm:$0xff]
    %v2278 = vld [vmem:[%s2245 + $0x100] sm:$0xff]
    %v2279 = vld [vmem:[%s2245 + $0x108] sm:$0xff]
    %v2280 = vld [vmem:[%s2245 + $0x110] sm:$0xff]
    %v2281 = vld [vmem:[%s2245 + $0x118] sm:$0xff]
    %v2282 = vld [vmem:[%s2245 + $0x120] sm:$0xff]
    %v2283 = vld [vmem:[%s2245 + $0x128] sm:$0xff]
    %v2284 = vld [vmem:[%s2245 + $0x130] sm:$0xff]
    %v2285 = vld [vmem:[%s2245 + $0x138] sm:$0xff]
    %v2286 = vld [vmem:[%s2245 + $0x140] sm:$0xff]
    %v2287 = vld [vmem:[%s2245 + $0x148] sm:$0xff]
    %v2288 = vld [vmem:[%s2245 + $0x150] sm:$0xff]
    %v2289 = vld [vmem:[%s2245 + $0x158] sm:$0xff]
    %v2290 = vld [vmem:[%s2245 + $0x160] sm:$0xff]
    %v2291 = vld [vmem:[%s2245 + $0x168] sm:$0xff]
    %v2292 = vld [vmem:[%s2245 + $0x170] sm:$0xff]
    %v2293 = vld [vmem:[%s2245 + $0x178] sm:$0xff]
    %v2294 = vld [vmem:[%s2245 + $0x180] sm:$0xff]
    %v2295 = vld [vmem:[%s2245 + $0x188] sm:$0xff]
    %v2296 = vld [vmem:[%s2245 + $0x190] sm:$0xff]
    %v2297 = vld [vmem:[%s2245 + $0x198] sm:$0xff]
    %v2298 = vld [vmem:[%s2245 + $0x1a0] sm:$0xff]
    %v2299 = vld [vmem:[%s2245 + $0x1a8] sm:$0xff]
    %v2300 = vld [vmem:[%s2245 + $0x1b0] sm:$0xff]
    %v2301 = vld [vmem:[%s2245 + $0x1b8] sm:$0xff]
    %v2302 = vld [vmem:[%s2245 + $0x1c0] sm:$0xff]
    %v2303 = vld [vmem:[%s2245 + $0x1c8] sm:$0xff]
    %v2304 = vld [vmem:[%s2245 + $0x1d0] sm:$0xff]
    %v2305 = vld [vmem:[%s2245 + $0x1d8] sm:$0xff]
    %v2306 = vld [vmem:[%s2245 + $0x1e0] sm:$0xff]
    %v2307 = vld [vmem:[%s2245 + $0x1e8] sm:$0xff]
    %v2308 = vld [vmem:[%s2245 + $0x1f0] sm:$0xff]
    %v2309 = vld [vmem:[%s2245 + $0x1f8] sm:$0xff]
    %v2374 = vunpack.c.l.b16 %v2246
    %v2375 = vunpack.c.h.b16 %v2246
    %v2376 = vunpack.c.l.b16 %v2247
    %v2377 = vunpack.c.h.b16 %v2247
    %v2378 = vunpack.c.l.b16 %v2248
    %v2379 = vunpack.c.h.b16 %v2248
    %v2380 = vunpack.c.l.b16 %v2249
    %v2381 = vunpack.c.h.b16 %v2249
    %v2382 = vunpack.c.l.b16 %v2250
    %v2383 = vunpack.c.h.b16 %v2250
    %v2384 = vunpack.c.l.b16 %v2251
    %v2385 = vunpack.c.h.b16 %v2251
    %v2386 = vunpack.c.l.b16 %v2252
    %v2387 = vunpack.c.h.b16 %v2252
    %v2388 = vunpack.c.l.b16 %v2253
    %v2389 = vunpack.c.h.b16 %v2253
    %v2390 = vunpack.c.l.b16 %v2254
    %v2391 = vunpack.c.h.b16 %v2254
    %v2392 = vunpack.c.l.b16 %v2255
    %v2393 = vunpack.c.h.b16 %v2255
    %v2394 = vunpack.c.l.b16 %v2256
    %v2395 = vunpack.c.h.b16 %v2256
    %v2396 = vunpack.c.l.b16 %v2257
    %v2397 = vunpack.c.h.b16 %v2257
    %v2398 = vunpack.c.l.b16 %v2258
    %v2399 = vunpack.c.h.b16 %v2258
    %v2400 = vunpack.c.l.b16 %v2259
    %v2401 = vunpack.c.h.b16 %v2259
    %v2402 = vunpack.c.l.b16 %v2260
    %v2403 = vunpack.c.h.b16 %v2260
    %v2404 = vunpack.c.l.b16 %v2261
    %v2405 = vunpack.c.h.b16 %v2261
    %v2406 = vunpack.c.l.b16 %v2262
    %v2407 = vunpack.c.h.b16 %v2262
    %v2408 = vunpack.c.l.b16 %v2263
    %v2409 = vunpack.c.h.b16 %v2263
    %v2410 = vunpack.c.l.b16 %v2264
    %v2411 = vunpack.c.h.b16 %v2264
    %v2412 = vunpack.c.l.b16 %v2265
    %v2413 = vunpack.c.h.b16 %v2265
    %v2414 = vunpack.c.l.b16 %v2266
    %v2415 = vunpack.c.h.b16 %v2266
    %v2416 = vunpack.c.l.b16 %v2267
    %v2417 = vunpack.c.h.b16 %v2267
    %v2418 = vunpack.c.l.b16 %v2268
    %v2419 = vunpack.c.h.b16 %v2268
    %v2420 = vunpack.c.l.b16 %v2269
    %v2421 = vunpack.c.h.b16 %v2269
    %v2422 = vunpack.c.l.b16 %v2270
    %v2423 = vunpack.c.h.b16 %v2270
    %v2424 = vunpack.c.l.b16 %v2271
    %v2425 = vunpack.c.h.b16 %v2271
    %v2426 = vunpack.c.l.b16 %v2272
    %v2427 = vunpack.c.h.b16 %v2272
    %v2428 = vunpack.c.l.b16 %v2273
    %v2429 = vunpack.c.h.b16 %v2273
    %v2430 = vunpack.c.l.b16 %v2274
    %v2431 = vunpack.c.h.b16 %v2274
    %v2432 = vunpack.c.l.b16 %v2275
    %v2433 = vunpack.c.h.b16 %v2275
    %v2434 = vunpack.c.l.b16 %v2276
    %v2435 = vunpack.c.h.b16 %v2276
    %v2436 = vunpack.c.l.b16 %v2277
    %v2437 = vunpack.c.h.b16 %v2277
    %v2438 = vunpack.c.l.b16 %v2278
    %v2439 = vunpack.c.h.b16 %v2278
    %v2440 = vunpack.c.l.b16 %v2279
    %v2441 = vunpack.c.h.b16 %v2279
    %v2442 = vunpack.c.l.b16 %v2280
    %v2443 = vunpack.c.h.b16 %v2280
    %v2444 = vunpack.c.l.b16 %v2281
    %v2445 = vunpack.c.h.b16 %v2281
    %v2446 = vunpack.c.l.b16 %v2282
    %v2447 = vunpack.c.h.b16 %v2282
    %v2448 = vunpack.c.l.b16 %v2283
    %v2449 = vunpack.c.h.b16 %v2283
    %v2450 = vunpack.c.l.b16 %v2284
    %v2451 = vunpack.c.h.b16 %v2284
    %v2452 = vunpack.c.l.b16 %v2285
    %v2453 = vunpack.c.h.b16 %v2285
    %v2454 = vunpack.c.l.b16 %v2286
    %v2455 = vunpack.c.h.b16 %v2286
    %v2456 = vunpack.c.l.b16 %v2287
    %v2457 = vunpack.c.h.b16 %v2287
    %v2458 = vunpack.c.l.b16 %v2288
    %v2459 = vunpack.c.h.b16 %v2288
    %v2460 = vunpack.c.l.b16 %v2289
    %v2461 = vunpack.c.h.b16 %v2289
    %v2462 = vunpack.c.l.b16 %v2290
    %v2463 = vunpack.c.h.b16 %v2290
    %v2464 = vunpack.c.l.b16 %v2291
    %v2465 = vunpack.c.h.b16 %v2291
    %v2466 = vunpack.c.l.b16 %v2292
    %v2467 = vunpack.c.h.b16 %v2292
    %v2468 = vunpack.c.l.b16 %v2293
    %v2469 = vunpack.c.h.b16 %v2293
    %v2470 = vunpack.c.l.b16 %v2294
    %v2471 = vunpack.c.h.b16 %v2294
    %v2472 = vunpack.c.l.b16 %v2295
    %v2473 = vunpack.c.h.b16 %v2295
    %v2474 = vunpack.c.l.b16 %v2296
    %v2475 = vunpack.c.h.b16 %v2296
    %v2476 = vunpack.c.l.b16 %v2297
    %v2477 = vunpack.c.h.b16 %v2297
    %v2478 = vunpack.c.l.b16 %v2298
    %v2479 = vunpack.c.h.b16 %v2298
    %v2480 = vunpack.c.l.b16 %v2299
    %v2481 = vunpack.c.h.b16 %v2299
    %v2482 = vunpack.c.l.b16 %v2300
    %v2483 = vunpack.c.h.b16 %v2300
    %v2484 = vunpack.c.l.b16 %v2301
    %v2485 = vunpack.c.h.b16 %v2301
    %v2486 = vunpack.c.l.b16 %v2302
    %v2487 = vunpack.c.h.b16 %v2302
    %v2488 = vunpack.c.l.b16 %v2303
    %v2489 = vunpack.c.h.b16 %v2303
    %v2490 = vunpack.c.l.b16 %v2304
    %v2491 = vunpack.c.h.b16 %v2304
    %v2492 = vunpack.c.l.b16 %v2305
    %v2493 = vunpack.c.h.b16 %v2305
    %v2494 = vunpack.c.l.b16 %v2306
    %v2495 = vunpack.c.h.b16 %v2306
    %v2496 = vunpack.c.l.b16 %v2307
    %v2497 = vunpack.c.h.b16 %v2307
    %v2498 = vunpack.c.l.b16 %v2308
    %v2499 = vunpack.c.h.b16 %v2308
    %v2500 = vunpack.c.l.b16 %v2309
    %v2501 = vunpack.c.h.b16 %v2309
    %v2502 = vpack.c.b16 %v2378, %v2374
    %v2503 = vpack.c.b16 %v2379, %v2375
    %v2504 = vpack.c.b16 %v2380, %v2376
    %v2505 = vpack.c.b16 %v2381, %v2377
    %v2506 = vpack.c.b16 %v2386, %v2382
    %v2507 = vpack.c.b16 %v2387, %v2383
    %v2508 = vpack.c.b16 %v2388, %v2384
    %v2509 = vpack.c.b16 %v2389, %v2385
    %v2510 = vpack.c.b16 %v2394, %v2390
    %v2511 = vpack.c.b16 %v2395, %v2391
    %v2512 = vpack.c.b16 %v2396, %v2392
    %v2513 = vpack.c.b16 %v2397, %v2393
    %v2514 = vpack.c.b16 %v2402, %v2398
    %v2515 = vpack.c.b16 %v2403, %v2399
    %v2516 = vpack.c.b16 %v2404, %v2400
    %v2517 = vpack.c.b16 %v2405, %v2401
    %v2518 = vpack.c.b16 %v2410, %v2406
    %v2519 = vpack.c.b16 %v2411, %v2407
    %v2520 = vpack.c.b16 %v2412, %v2408
    %v2521 = vpack.c.b16 %v2413, %v2409
    %v2522 = vpack.c.b16 %v2418, %v2414
    %v2523 = vpack.c.b16 %v2419, %v2415
    %v2524 = vpack.c.b16 %v2420, %v2416
    %v2525 = vpack.c.b16 %v2421, %v2417
    %v2526 = vpack.c.b16 %v2426, %v2422
    %v2527 = vpack.c.b16 %v2427, %v2423
    %v2528 = vpack.c.b16 %v2428, %v2424
    %v2529 = vpack.c.b16 %v2429, %v2425
    %v2530 = vpack.c.b16 %v2434, %v2430
    %v2531 = vpack.c.b16 %v2435, %v2431
    %v2532 = vpack.c.b16 %v2436, %v2432
    %v2533 = vpack.c.b16 %v2437, %v2433
    %v2534 = vpack.c.b16 %v2442, %v2438
    %v2535 = vpack.c.b16 %v2443, %v2439
    %v2536 = vpack.c.b16 %v2444, %v2440
    %v2537 = vpack.c.b16 %v2445, %v2441
    %v2538 = vpack.c.b16 %v2450, %v2446
    %v2539 = vpack.c.b16 %v2451, %v2447
    %v2540 = vpack.c.b16 %v2452, %v2448
    %v2541 = vpack.c.b16 %v2453, %v2449
    %v2542 = vpack.c.b16 %v2458, %v2454
    %v2543 = vpack.c.b16 %v2459, %v2455
    %v2544 = vpack.c.b16 %v2460, %v2456
    %v2545 = vpack.c.b16 %v2461, %v2457
    %v2546 = vpack.c.b16 %v2466, %v2462
    %v2547 = vpack.c.b16 %v2467, %v2463
    %v2548 = vpack.c.b16 %v2468, %v2464
    %v2549 = vpack.c.b16 %v2469, %v2465
    %v2550 = vpack.c.b16 %v2474, %v2470
    %v2551 = vpack.c.b16 %v2475, %v2471
    %v2552 = vpack.c.b16 %v2476, %v2472
    %v2553 = vpack.c.b16 %v2477, %v2473
    %v2554 = vpack.c.b16 %v2482, %v2478
    %v2555 = vpack.c.b16 %v2483, %v2479
    %v2556 = vpack.c.b16 %v2484, %v2480
    %v2557 = vpack.c.b16 %v2485, %v2481
    %v2558 = vpack.c.b16 %v2490, %v2486
    %v2559 = vpack.c.b16 %v2491, %v2487
    %v2560 = vpack.c.b16 %v2492, %v2488
    %v2561 = vpack.c.b16 %v2493, %v2489
    %v2562 = vpack.c.b16 %v2498, %v2494
    %v2563 = vpack.c.b16 %v2499, %v2495
    %v2564 = vpack.c.b16 %v2500, %v2496
    %v2565 = vpack.c.b16 %v2501, %v2497
    %2630 = vmatpush.bf16.msra.mxu0 %v2530
    %2631 = vmatpush.bf16.msra.mxu0 %v2526
    %2632 = vmatpush.bf16.msra.mxu0 %v2522
    %2633 = vmatpush.bf16.msra.mxu0 %v2518
    %2634 = vmatpush.bf16.msra.mxu0 %v2514
    %2635 = vmatpush.bf16.msra.mxu0 %v2510
    %2636 = vmatpush.bf16.msra.mxu0 %v2506
    %2637 = vmatpush.bf16.msra.mxu0 %v2502
    %2638 = vmatmul.bf16.gmra.mxu0 %v2243
    %v2639 = vpop.f32.mrf.mxu0
    %v2640 = vadd.f32 0.0, %v2639
    %v2641 = vpop.f32.mrf.mxu0
    %2642 = vdwg.mxu0
    %2643 = vmatpush.bf16.msra.mxu0 %v2562
    %2644 = vmatpush.bf16.msra.mxu0 %v2558
    %2645 = vmatpush.bf16.msra.mxu0 %v2554
    %2646 = vmatpush.bf16.msra.mxu0 %v2550
    %2647 = vmatpush.bf16.msra.mxu0 %v2546
    %2648 = vmatpush.bf16.msra.mxu0 %v2542
    %2649 = vmatpush.bf16.msra.mxu0 %v2538
    %2650 = vmatpush.bf16.msra.mxu0 %v2534
    %2651 = vmatmul.bf16.gmra.mxu0 %v2244
    %v2652 = vpop.f32.mrf.mxu0
    %v2653 = vadd.f32 %v2640, %v2652
    %v2654 = vpop.f32.mrf.mxu0
    %2655 = vdwg.mxu0
    %2656 = vmatpush.bf16.msra.mxu0 %v2531
    %2657 = vmatpush.bf16.msra.mxu0 %v2527
    %2658 = vmatpush.bf16.msra.mxu0 %v2523
    %2659 = vmatpush.bf16.msra.mxu0 %v2519
    %2660 = vmatpush.bf16.msra.mxu0 %v2515
    %2661 = vmatpush.bf16.msra.mxu0 %v2511
    %2662 = vmatpush.bf16.msra.mxu0 %v2507
    %2663 = vmatpush.bf16.msra.mxu0 %v2503
    %2664 = vmatmul.bf16.gmra.mxu0 %v2243
    %v2665 = vpop.f32.mrf.mxu0
    %v2666 = vadd.f32 0.0, %v2665
    %v2667 = vpop.f32.mrf.mxu0
    %2668 = vdwg.mxu0
    %2669 = vmatpush.bf16.msra.mxu0 %v2563
    %2670 = vmatpush.bf16.msra.mxu0 %v2559
    %2671 = vmatpush.bf16.msra.mxu0 %v2555
    %2672 = vmatpush.bf16.msra.mxu0 %v2551
    %2673 = vmatpush.bf16.msra.mxu0 %v2547
    %2674 = vmatpush.bf16.msra.mxu0 %v2543
    %2675 = vmatpush.bf16.msra.mxu0 %v2539
    %2676 = vmatpush.bf16.msra.mxu0 %v2535
    %2677 = vmatmul.bf16.gmra.mxu0 %v2244
    %v2678 = vpop.f32.mrf.mxu0
    %v2679 = vadd.f32 %v2666, %v2678
    %v2680 = vpop.f32.mrf.mxu0
    %2681 = vdwg.mxu0
    %2682 = vmatpush.bf16.msra.mxu0 %v2532
    %2683 = vmatpush.bf16.msra.mxu0 %v2528
    %2684 = vmatpush.bf16.msra.mxu0 %v2524
    %2685 = vmatpush.bf16.msra.mxu0 %v2520
    %2686 = vmatpush.bf16.msra.mxu0 %v2516
    %2687 = vmatpush.bf16.msra.mxu0 %v2512
    %2688 = vmatpush.bf16.msra.mxu0 %v2508
    %2689 = vmatpush.bf16.msra.mxu0 %v2504
    %2690 = vmatmul.bf16.gmra.mxu0 %v2243
    %v2691 = vpop.f32.mrf.mxu0
    %v2692 = vadd.f32 0.0, %v2691
    %v2693 = vpop.f32.mrf.mxu0
    %2694 = vdwg.mxu0
    %2695 = vmatpush.bf16.msra.mxu0 %v2564
    %2696 = vmatpush.bf16.msra.mxu0 %v2560
    %2697 = vmatpush.bf16.msra.mxu0 %v2556
    %2698 = vmatpush.bf16.msra.mxu0 %v2552
    %2699 = vmatpush.bf16.msra.mxu0 %v2548
    %2700 = vmatpush.bf16.msra.mxu0 %v2544
    %2701 = vmatpush.bf16.msra.mxu0 %v2540
    %2702 = vmatpush.bf16.msra.mxu0 %v2536
    %2703 = vmatmul.bf16.gmra.mxu0 %v2244
    %v2704 = vpop.f32.mrf.mxu0
    %v2705 = vadd.f32 %v2692, %v2704
    %v2706 = vpop.f32.mrf.mxu0
    %2707 = vdwg.mxu0
    %2708 = vmatpush.bf16.msra.mxu0 %v2533
    %2709 = vmatpush.bf16.msra.mxu0 %v2529
    %2710 = vmatpush.bf16.msra.mxu0 %v2525
    %2711 = vmatpush.bf16.msra.mxu0 %v2521
    %2712 = vmatpush.bf16.msra.mxu0 %v2517
    %2713 = vmatpush.bf16.msra.mxu0 %v2513
    %2714 = vmatpush.bf16.msra.mxu0 %v2509
    %2715 = vmatpush.bf16.msra.mxu0 %v2505
    %2716 = vmatmul.bf16.gmra.mxu0 %v2243
    %v2717 = vpop.f32.mrf.mxu0
    %v2718 = vadd.f32 0.0, %v2717
    %v2719 = vpop.f32.mrf.mxu0
    %2720 = vdwg.mxu0
    %2721 = vmatpush.bf16.msra.mxu0 %v2565
    %2722 = vmatpush.bf16.msra.mxu0 %v2561
    %2723 = vmatpush.bf16.msra.mxu0 %v2557
    %2724 = vmatpush.bf16.msra.mxu0 %v2553
    %2725 = vmatpush.bf16.msra.mxu0 %v2549
    %2726 = vmatpush.bf16.msra.mxu0 %v2545
    %2727 = vmatpush.bf16.msra.mxu0 %v2541
    %2728 = vmatpush.bf16.msra.mxu0 %v2537
    %2729 = vmatmul.bf16.gmra.mxu0 %v2244
    %v2730 = vpop.f32.mrf.mxu0
    %v2731 = vadd.f32 %v2718, %v2730
    %v2732 = vpop.f32.mrf.mxu0
    %2733 = vdwg.mxu0
    %v2734 = vmul.f32 %v2731, %v41
    %2735 = vmatpush.msra.mxu0 0.0
    %2736 = vmatpush.msra.mxu0 0.0
    %2737 = vmatpush.msra.mxu0 0.0
    %2738 = vmatpush.msra.mxu0 0.0
    %2739 = vmatpush.msra.mxu0 0.0
    %2740 = vmatpush.msra.mxu0 0.0
    %2741 = vmatpush.msra.mxu0 0.0
    %2742 = vmatpush.msra.mxu0 0.0
    %2743 = vmatpush.msra.mxu0 0.0
    %2744 = vmatpush.msra.mxu0 0.0
    %2745 = vmatpush.msra.mxu0 0.0
    %2746 = vmatpush.msra.mxu0 0.0
    %2747 = vmatpush.msra.mxu0 0.0
    %2748 = vmatpush.msra.mxu0 0.0
    %2749 = vmatpush.msra.mxu0 0.0
    %2750 = vmatpush.msra.mxu0 %v2734
    %2751 = vmatmul.f32.gmra.mxu0 %v573
    %v2752 = vpop.f32.mrf.mxu0
    %v2753 = vadd.f32 0.0, %v2752
    %2754 = vdwg.mxu0
    %v2755 = vadd.f32 %v2705, %v2753
    %v2756 = vmul.f32 %v2755, 0.2
    %v2757 = vmax.f32 %v2755, %v2756
    %v2758 = vadd.f32 %v2757, %v40
    %v2759 = vsel %vm599, %v2758, -inf
    %2760 = vmax.xlane.f32.xlu0 %v2759
    %v2761 = vpop.xlane.xlu0 %2760
    %v2762 = vsub.f32 %v2758, %v2761
    %v2763 = vmul.f32 %v2762, 1.442695
    %v2764 = vpow.pop %v2763
    %v2766 = vsel %vm599, %v2764, 0
    %2768 = vmatpush.msra.mxu0 0.0
    %2769 = vmatpush.msra.mxu0 0.0
    %2770 = vmatpush.msra.mxu0 0.0
    %2771 = vmatpush.msra.mxu0 0.0
    %2772 = vmatpush.msra.mxu0 0.0
    %2773 = vmatpush.msra.mxu0 0.0
    %2774 = vmatpush.msra.mxu0 0.0
    %2775 = vmatpush.msra.mxu0 0.0
    %2776 = vmatpush.msra.mxu0 %v49
    %2777 = vmatpush.msra.mxu0 %v48
    %2778 = vmatpush.msra.mxu0 %v47
    %2779 = vmatpush.msra.mxu0 %v46
    %2780 = vmatpush.msra.mxu0 %v45
    %2781 = vmatpush.msra.mxu0 %v44
    %2782 = vmatpush.msra.mxu0 %v43
    %2783 = vmatpush.msra.mxu0 %v42
    %2784 = vmatmul.f32.gmra.mxu0 %v2766
    %v2785 = vpop.f32.mrf.mxu0
    %v2786 = vadd.f32 0.0, %v2785
    %2787 = vdwg.mxu0
    %v2788 = vrcp.pop %v2786
    %v2789 = vmul.f32 %v2786, %v2788
    %v2790 = vsub.f32 1.0, %v2789
    %v2791 = vmul.f32 %v2788, %v2790
    %v2792 = vadd.f32 %v2788, %v2791
    %vm2793 = vweird.f32 %v2786
    %vm2794 = vweird.f32 %v2788
    %vm2795 = vmor %vm2793, %vm2794
    %v2796 = vsel %vm2795, %v2788, %v2792
    %v2797 = vand.u32 2147483647, %v2786
    %vm2798 = vcmp.eq.f32.partialorder %v2797, 8.507059e+37
    %v2799 = vand.u32 %v2786, 2147483648
    %v2800 = vor.u32 1.1754944e-38, %v2799
    %v2801 = vsel %vm2798, %v2800, %v2796
    %v2802 = vmul.f32 %v2764, %v2801
    %2803 = vmatpush.msra.mxu0 0.0
    %2804 = vmatpush.msra.mxu0 0.0
    %2805 = vmatpush.msra.mxu0 0.0
    %2806 = vmatpush.msra.mxu0 0.0
    %2807 = vmatpush.msra.mxu0 0.0
    %2808 = vmatpush.msra.mxu0 0.0
    %2809 = vmatpush.msra.mxu0 0.0
    %2810 = vmatpush.msra.mxu0 0.0
    %2811 = vmatpush.msra.mxu0 0.0
    %2812 = vmatpush.msra.mxu0 0.0
    %2813 = vmatpush.msra.mxu0 0.0
    %2814 = vmatpush.msra.mxu0 0.0
    %2815 = vmatpush.msra.mxu0 0.0
    %2816 = vmatpush.msra.mxu0 0.0
    %2817 = vmatpush.msra.mxu0 0.0
    %2818 = vmatpush.msra.mxu0 %v2653
    %2819 = vmatmul.f32.gmra.mxu0 %v645
    %v2820 = vpop.f32.mrf.mxu0
    %v2821 = vadd.f32 0.0, %v2820
    %2822 = vmatmul.f32.gmra.mxu0 %v648
    %v2823 = vpop.f32.mrf.mxu0
    %v2824 = vadd.f32 0.0, %v2823
    %2825 = vmatmul.f32.gmra.mxu0 %v651
    %v2826 = vpop.f32.mrf.mxu0
    %v2827 = vadd.f32 0.0, %v2826
    %2828 = vmatmul.f32.gmra.mxu0 %v654
    %v2829 = vpop.f32.mrf.mxu0
    %v2830 = vadd.f32 0.0, %v2829
    %2831 = vmatmul.f32.gmra.mxu0 %v657
    %v2832 = vpop.f32.mrf.mxu0
    %v2833 = vadd.f32 0.0, %v2832
    %2834 = vmatmul.f32.gmra.mxu0 %v660
    %v2835 = vpop.f32.mrf.mxu0
    %v2836 = vadd.f32 0.0, %v2835
    %2837 = vmatmul.f32.gmra.mxu0 %v663
    %v2838 = vpop.f32.mrf.mxu0
    %v2839 = vadd.f32 0.0, %v2838
    %2840 = vmatmul.f32.gmra.mxu0 %v666
    %v2841 = vpop.f32.mrf.mxu0
    %v2842 = vadd.f32 0.0, %v2841
    %2843 = vdwg.mxu0
    %2844 = vmatpush.msra.mxu0 0.0
    %2845 = vmatpush.msra.mxu0 0.0
    %2846 = vmatpush.msra.mxu0 0.0
    %2847 = vmatpush.msra.mxu0 0.0
    %2848 = vmatpush.msra.mxu0 0.0
    %2849 = vmatpush.msra.mxu0 0.0
    %2850 = vmatpush.msra.mxu0 0.0
    %2851 = vmatpush.msra.mxu0 0.0
    %2852 = vmatpush.msra.mxu0 0.0
    %2853 = vmatpush.msra.mxu0 0.0
    %2854 = vmatpush.msra.mxu0 0.0
    %2855 = vmatpush.msra.mxu0 0.0
    %2856 = vmatpush.msra.mxu0 0.0
    %2857 = vmatpush.msra.mxu0 0.0
    %2858 = vmatpush.msra.mxu0 0.0
    %2859 = vmatpush.msra.mxu0 %v2679
    %2860 = vmatmul.f32.gmra.mxu0 %v645
    %v2861 = vpop.f32.mrf.mxu0
    %v2862 = vadd.f32 0.0, %v2861
    %2863 = vmatmul.f32.gmra.mxu0 %v648
    %v2864 = vpop.f32.mrf.mxu0
    %v2865 = vadd.f32 0.0, %v2864
    %2866 = vmatmul.f32.gmra.mxu0 %v651
    %v2867 = vpop.f32.mrf.mxu0
    %v2868 = vadd.f32 0.0, %v2867
    %2869 = vmatmul.f32.gmra.mxu0 %v654
    %v2870 = vpop.f32.mrf.mxu0
    %v2871 = vadd.f32 0.0, %v2870
    %2872 = vmatmul.f32.gmra.mxu0 %v657
    %v2873 = vpop.f32.mrf.mxu0
    %v2874 = vadd.f32 0.0, %v2873
    %2875 = vmatmul.f32.gmra.mxu0 %v660
    %v2876 = vpop.f32.mrf.mxu0
    %v2877 = vadd.f32 0.0, %v2876
    %2878 = vmatmul.f32.gmra.mxu0 %v663
    %v2879 = vpop.f32.mrf.mxu0
    %v2880 = vadd.f32 0.0, %v2879
    %2881 = vmatmul.f32.gmra.mxu0 %v666
    %v2882 = vpop.f32.mrf.mxu0
    %v2883 = vadd.f32 0.0, %v2882
    %2884 = vdwg.mxu0
    %v2885 = vmul.f32 %v2821, %v58
    %v2886 = vmul.f32 %v2862, %v59
    %v2887 = vmul.f32 %v2824, %v60
    %v2888 = vmul.f32 %v2865, %v61
    %v2889 = vmul.f32 %v2827, %v62
    %v2890 = vmul.f32 %v2868, %v63
    %v2891 = vmul.f32 %v2830, %v64
    %v2892 = vmul.f32 %v2871, %v65
    %v2893 = vmul.f32 %v2833, %v66
    %v2894 = vmul.f32 %v2874, %v67
    %v2895 = vmul.f32 %v2836, %v68
    %v2896 = vmul.f32 %v2877, %v69
    %v2897 = vmul.f32 %v2839, %v70
    %v2898 = vmul.f32 %v2880, %v71
    %v2899 = vmul.f32 %v2842, %v72
    %v2900 = vmul.f32 %v2883, %v73
    %s2901 = scalar_lea.vmem %s4, 6
    %v2902 = vld [vmem:[%s2901] sm:$0x3]
    %v2904 = vperm.slane %v2902, 0
    %v2905 = vperm.slane %v2902, 1
    %v2909 = vsel %vm599, %v2802, 0
    %2911 = vmatpush.msra.mxu0 0.0
    %2912 = vmatpush.msra.mxu0 0.0
    %2913 = vmatpush.msra.mxu0 0.0
    %2914 = vmatpush.msra.mxu0 0.0
    %2915 = vmatpush.msra.mxu0 0.0
    %2916 = vmatpush.msra.mxu0 0.0
    %2917 = vmatpush.msra.mxu0 0.0
    %2918 = vmatpush.msra.mxu0 0.0
    %2919 = vmatpush.msra.mxu0 %v2899
    %2920 = vmatpush.msra.mxu0 %v2897
    %2921 = vmatpush.msra.mxu0 %v2895
    %2922 = vmatpush.msra.mxu0 %v2893
    %2923 = vmatpush.msra.mxu0 %v2891
    %2924 = vmatpush.msra.mxu0 %v2889
    %2925 = vmatpush.msra.mxu0 %v2887
    %2926 = vmatpush.msra.mxu0 %v2885
    %2927 = vmatmul.f32.gmra.mxu0 %v2909
    %v2928 = vpop.f32.mrf.mxu0
    %v2929 = vadd.f32 %v2904, %v2928
    %2930 = vdwg.mxu0
    %2931 = vmatpush.msra.mxu0 0.0
    %2932 = vmatpush.msra.mxu0 0.0
    %2933 = vmatpush.msra.mxu0 0.0
    %2934 = vmatpush.msra.mxu0 0.0
    %2935 = vmatpush.msra.mxu0 0.0
    %2936 = vmatpush.msra.mxu0 0.0
    %2937 = vmatpush.msra.mxu0 0.0
    %2938 = vmatpush.msra.mxu0 0.0
    %2939 = vmatpush.msra.mxu0 %v2900
    %2940 = vmatpush.msra.mxu0 %v2898
    %2941 = vmatpush.msra.mxu0 %v2896
    %2942 = vmatpush.msra.mxu0 %v2894
    %2943 = vmatpush.msra.mxu0 %v2892
    %2944 = vmatpush.msra.mxu0 %v2890
    %2945 = vmatpush.msra.mxu0 %v2888
    %2946 = vmatpush.msra.mxu0 %v2886
    %2947 = vmatmul.f32.gmra.mxu0 %v2909
    %v2948 = vpop.f32.mrf.mxu0
    %v2949 = vadd.f32 %v2905, %v2948
    %2950 = vdwg.mxu0
    %v2951 = vmul.f32 %v2929, 0.2
    %v2952 = vmul.f32 %v2949, 0.2
    %v2953 = vmax.f32 %v2929, %v2951
    %v2954 = vmax.f32 %v2949, %v2952
    %v2955 = vpack.c.bf16 %v2954, %v2953
    %v2957 = vunpack.c.l.b16 %v2955
    %v2958 = vunpack.c.h.b16 %v2955
    %v2959 = vpack.c.b16 %v2957, %v2957
    %v2960 = vpack.c.b16 %v2958, %v2958
    %v2964 = vshrl.u32 %v2959, 16
    %v2967 = vshrl.u32 %v2960, 16
    %v2971 = vrot.slane %v2959, 1
    %v2972 = vrot.slane %v2960, 1
    %v2975 = vrot.slane %v2964, 1
    %v2976 = vrot.slane %v2967, 1
    %v2979 = vrot.slane %v2959, 2
    %v2980 = vrot.slane %v2960, 2
    %v2983 = vld [vmem:[%s5] sm:$0xf]
    %v2984 = vld [vmem:[%s5 + $0x4] sm:$0xf]
    %v2985 = vld [vmem:[%s5 + $0x8] sm:$0xf]
    %v2986 = vld [vmem:[%s5 + $0xc] sm:$0xf]
    %v2987 = vld [vmem:[%s5 + $0x10] sm:$0xf]
    %v2988 = vld [vmem:[%s5 + $0x14] sm:$0xf]
    %v2989 = vld [vmem:[%s5 + $0x18] sm:$0xf]
    %v2990 = vld [vmem:[%s5 + $0x1c] sm:$0xf]
    %v2991 = vld [vmem:[%s5 + $0x20] sm:$0xf]
    %v2992 = vld [vmem:[%s5 + $0x24] sm:$0xf]
    %v2993 = vld [vmem:[%s5 + $0x28] sm:$0xf]
    %v2994 = vld [vmem:[%s5 + $0x2c] sm:$0xf]
    %v2995 = vld [vmem:[%s5 + $0x30] sm:$0xf]
    %v2996 = vld [vmem:[%s5 + $0x34] sm:$0xf]
    %v2997 = vld [vmem:[%s5 + $0x38] sm:$0xf]
    %v2998 = vld [vmem:[%s5 + $0x3c] sm:$0xf]
    %v2999 = vld [vmem:[%s5 + $0x40] sm:$0xf]
    %v3000 = vld [vmem:[%s5 + $0x44] sm:$0xf]
    %v3001 = vld [vmem:[%s5 + $0x48] sm:$0xf]
    %v3002 = vld [vmem:[%s5 + $0x4c] sm:$0xf]
    %v3003 = vld [vmem:[%s5 + $0x50] sm:$0xf]
    %v3004 = vld [vmem:[%s5 + $0x54] sm:$0xf]
    %v3005 = vld [vmem:[%s5 + $0x58] sm:$0xf]
    %v3006 = vld [vmem:[%s5 + $0x5c] sm:$0xf]
    %v3007 = vld [vmem:[%s5 + $0x60] sm:$0xf]
    %v3008 = vld [vmem:[%s5 + $0x64] sm:$0xf]
    %v3009 = vld [vmem:[%s5 + $0x68] sm:$0xf]
    %v3010 = vld [vmem:[%s5 + $0x6c] sm:$0xf]
    %v3011 = vld [vmem:[%s5 + $0x70] sm:$0xf]
    %v3012 = vld [vmem:[%s5 + $0x74] sm:$0xf]
    %v3013 = vld [vmem:[%s5 + $0x78] sm:$0xf]
    %v3014 = vld [vmem:[%s5 + $0x7c] sm:$0xf]
    %v3015 = vld [vmem:[%s5 + $0x80] sm:$0xf]
    %v3016 = vld [vmem:[%s5 + $0x84] sm:$0xf]
    %v3017 = vld [vmem:[%s5 + $0x88] sm:$0xf]
    %v3018 = vld [vmem:[%s5 + $0x8c] sm:$0xf]
    %v3019 = vld [vmem:[%s5 + $0x90] sm:$0xf]
    %v3020 = vld [vmem:[%s5 + $0x94] sm:$0xf]
    %v3021 = vld [vmem:[%s5 + $0x98] sm:$0xf]
    %v3022 = vld [vmem:[%s5 + $0x9c] sm:$0xf]
    %v3023 = vld [vmem:[%s5 + $0xa0] sm:$0xf]
    %v3024 = vld [vmem:[%s5 + $0xa4] sm:$0xf]
    %v3025 = vld [vmem:[%s5 + $0xa8] sm:$0xf]
    %v3026 = vld [vmem:[%s5 + $0xac] sm:$0xf]
    %v3027 = vld [vmem:[%s5 + $0xb0] sm:$0xf]
    %v3028 = vld [vmem:[%s5 + $0xb4] sm:$0xf]
    %v3029 = vld [vmem:[%s5 + $0xb8] sm:$0xf]
    %v3030 = vld [vmem:[%s5 + $0xbc] sm:$0xf]
    %v3031 = vld [vmem:[%s5 + $0xc0] sm:$0xf]
    %v3032 = vld [vmem:[%s5 + $0xc4] sm:$0xf]
    %v3033 = vld [vmem:[%s5 + $0xc8] sm:$0xf]
    %v3034 = vld [vmem:[%s5 + $0xcc] sm:$0xf]
    %v3035 = vld [vmem:[%s5 + $0xd0] sm:$0xf]
    %v3036 = vld [vmem:[%s5 + $0xd4] sm:$0xf]
    %v3037 = vld [vmem:[%s5 + $0xd8] sm:$0xf]
    %v3038 = vld [vmem:[%s5 + $0xdc] sm:$0xf]
    %v3039 = vld [vmem:[%s5 + $0xe0] sm:$0xf]
    %v3040 = vld [vmem:[%s5 + $0xe4] sm:$0xf]
    %v3041 = vld [vmem:[%s5 + $0xe8] sm:$0xf]
    %v3042 = vld [vmem:[%s5 + $0xec] sm:$0xf]
    %v3043 = vld [vmem:[%s5 + $0xf0] sm:$0xf]
    %v3044 = vld [vmem:[%s5 + $0xf4] sm:$0xf]
    %v3045 = vld [vmem:[%s5 + $0xf8] sm:$0xf]
    %v3046 = vld [vmem:[%s5 + $0xfc] sm:$0xf]
    %v3047 = vld [vmem:[%s5 + $0x100] sm:$0xf]
    %v3048 = vld [vmem:[%s5 + $0x104] sm:$0xf]
    %v3049 = vld [vmem:[%s5 + $0x108] sm:$0xf]
    %v3050 = vld [vmem:[%s5 + $0x10c] sm:$0xf]
    %v3051 = vld [vmem:[%s5 + $0x110] sm:$0xf]
    %v3052 = vld [vmem:[%s5 + $0x114] sm:$0xf]
    %v3053 = vld [vmem:[%s5 + $0x118] sm:$0xf]
    %v3054 = vld [vmem:[%s5 + $0x11c] sm:$0xf]
    %v3055 = vld [vmem:[%s5 + $0x120] sm:$0xf]
    %v3056 = vld [vmem:[%s5 + $0x124] sm:$0xf]
    %v3057 = vld [vmem:[%s5 + $0x128] sm:$0xf]
    %v3058 = vld [vmem:[%s5 + $0x12c] sm:$0xf]
    %v3059 = vld [vmem:[%s5 + $0x130] sm:$0xf]
    %v3060 = vld [vmem:[%s5 + $0x134] sm:$0xf]
    %v3061 = vld [vmem:[%s5 + $0x138] sm:$0xf]
    %v3062 = vld [vmem:[%s5 + $0x13c] sm:$0xf]
    %v3063 = vld [vmem:[%s5 + $0x140] sm:$0xf]
    %v3064 = vld [vmem:[%s5 + $0x144] sm:$0xf]
    %v3065 = vld [vmem:[%s5 + $0x148] sm:$0xf]
    %v3066 = vld [vmem:[%s5 + $0x14c] sm:$0xf]
    %v3067 = vld [vmem:[%s5 + $0x150] sm:$0xf]
    %v3068 = vld [vmem:[%s5 + $0x154] sm:$0xf]
    %v3069 = vld [vmem:[%s5 + $0x158] sm:$0xf]
    %v3070 = vld [vmem:[%s5 + $0x15c] sm:$0xf]
    %v3071 = vld [vmem:[%s5 + $0x160] sm:$0xf]
    %v3072 = vld [vmem:[%s5 + $0x164] sm:$0xf]
    %v3073 = vld [vmem:[%s5 + $0x168] sm:$0xf]
    %v3074 = vld [vmem:[%s5 + $0x16c] sm:$0xf]
    %v3075 = vld [vmem:[%s5 + $0x170] sm:$0xf]
    %v3076 = vld [vmem:[%s5 + $0x174] sm:$0xf]
    %v3077 = vld [vmem:[%s5 + $0x178] sm:$0xf]
    %v3078 = vld [vmem:[%s5 + $0x17c] sm:$0xf]
    %v3079 = vld [vmem:[%s5 + $0x180] sm:$0xf]
    %v3080 = vld [vmem:[%s5 + $0x184] sm:$0xf]
    %v3081 = vld [vmem:[%s5 + $0x188] sm:$0xf]
    %v3082 = vld [vmem:[%s5 + $0x18c] sm:$0xf]
    %v3083 = vld [vmem:[%s5 + $0x190] sm:$0xf]
    %v3084 = vld [vmem:[%s5 + $0x194] sm:$0xf]
    %v3085 = vld [vmem:[%s5 + $0x198] sm:$0xf]
    %v3086 = vld [vmem:[%s5 + $0x19c] sm:$0xf]
    %v3087 = vld [vmem:[%s5 + $0x1a0] sm:$0xf]
    %v3088 = vld [vmem:[%s5 + $0x1a4] sm:$0xf]
    %v3089 = vld [vmem:[%s5 + $0x1a8] sm:$0xf]
    %v3090 = vld [vmem:[%s5 + $0x1ac] sm:$0xf]
    %v3091 = vld [vmem:[%s5 + $0x1b0] sm:$0xf]
    %v3092 = vld [vmem:[%s5 + $0x1b4] sm:$0xf]
    %v3093 = vld [vmem:[%s5 + $0x1b8] sm:$0xf]
    %v3094 = vld [vmem:[%s5 + $0x1bc] sm:$0xf]
    %v3095 = vld [vmem:[%s5 + $0x1c0] sm:$0xf]
    %v3096 = vld [vmem:[%s5 + $0x1c4] sm:$0xf]
    %v3097 = vld [vmem:[%s5 + $0x1c8] sm:$0xf]
    %v3098 = vld [vmem:[%s5 + $0x1cc] sm:$0xf]
    %v3099 = vld [vmem:[%s5 + $0x1d0] sm:$0xf]
    %v3100 = vld [vmem:[%s5 + $0x1d4] sm:$0xf]
    %v3101 = vld [vmem:[%s5 + $0x1d8] sm:$0xf]
    %v3102 = vld [vmem:[%s5 + $0x1dc] sm:$0xf]
    %v3103 = vld [vmem:[%s5 + $0x1e0] sm:$0xf]
    %v3104 = vld [vmem:[%s5 + $0x1e4] sm:$0xf]
    %v3105 = vld [vmem:[%s5 + $0x1e8] sm:$0xf]
    %v3106 = vld [vmem:[%s5 + $0x1ec] sm:$0xf]
    %v3107 = vld [vmem:[%s5 + $0x1f0] sm:$0xf]
    %v3108 = vld [vmem:[%s5 + $0x1f4] sm:$0xf]
    %v3109 = vld [vmem:[%s5 + $0x1f8] sm:$0xf]
    %v3110 = vld [vmem:[%s5 + $0x1fc] sm:$0xf]
    %v3111 = vld [vmem:[%s5 + $0x200] sm:$0xf]
    %v3112 = vld [vmem:[%s5 + $0x204] sm:$0xf]
    %v3113 = vld [vmem:[%s5 + $0x208] sm:$0xf]
    %v3114 = vld [vmem:[%s5 + $0x20c] sm:$0xf]
    %v3115 = vld [vmem:[%s5 + $0x210] sm:$0xf]
    %v3116 = vld [vmem:[%s5 + $0x214] sm:$0xf]
    %v3117 = vld [vmem:[%s5 + $0x218] sm:$0xf]
    %v3118 = vld [vmem:[%s5 + $0x21c] sm:$0xf]
    %v3119 = vld [vmem:[%s5 + $0x220] sm:$0xf]
    %v3120 = vld [vmem:[%s5 + $0x224] sm:$0xf]
    %v3121 = vld [vmem:[%s5 + $0x228] sm:$0xf]
    %v3122 = vld [vmem:[%s5 + $0x22c] sm:$0xf]
    %v3123 = vld [vmem:[%s5 + $0x230] sm:$0xf]
    %v3124 = vld [vmem:[%s5 + $0x234] sm:$0xf]
    %v3125 = vld [vmem:[%s5 + $0x238] sm:$0xf]
    %v3126 = vld [vmem:[%s5 + $0x23c] sm:$0xf]
    %v3127 = vld [vmem:[%s5 + $0x240] sm:$0xf]
    %v3128 = vld [vmem:[%s5 + $0x244] sm:$0xf]
    %v3129 = vld [vmem:[%s5 + $0x248] sm:$0xf]
    %v3130 = vld [vmem:[%s5 + $0x24c] sm:$0xf]
    %v3131 = vld [vmem:[%s5 + $0x250] sm:$0xf]
    %v3132 = vld [vmem:[%s5 + $0x254] sm:$0xf]
    %v3133 = vld [vmem:[%s5 + $0x258] sm:$0xf]
    %v3134 = vld [vmem:[%s5 + $0x25c] sm:$0xf]
    %v3135 = vld [vmem:[%s5 + $0x260] sm:$0xf]
    %v3136 = vld [vmem:[%s5 + $0x264] sm:$0xf]
    %v3137 = vld [vmem:[%s5 + $0x268] sm:$0xf]
    %v3138 = vld [vmem:[%s5 + $0x26c] sm:$0xf]
    %v3139 = vld [vmem:[%s5 + $0x270] sm:$0xf]
    %v3140 = vld [vmem:[%s5 + $0x274] sm:$0xf]
    %v3141 = vld [vmem:[%s5 + $0x278] sm:$0xf]
    %v3142 = vld [vmem:[%s5 + $0x27c] sm:$0xf]
    %s3143 = scalar_lea.vmem %s4, 8
    %v3144 = vld [vmem:[%s3143] sm:$0x3]
    %v3305 = vunpack.c.l.b16 %v2983
    %v3306 = vunpack.c.l.b16 %v2984
    %v3307 = vunpack.c.l.b16 %v2985
    %v3308 = vunpack.c.l.b16 %v2986
    %v3309 = vunpack.c.l.b16 %v2987
    %v3310 = vunpack.c.l.b16 %v2988
    %v3311 = vunpack.c.l.b16 %v2989
    %v3312 = vunpack.c.l.b16 %v2990
    %v3313 = vunpack.c.l.b16 %v2991
    %v3314 = vunpack.c.l.b16 %v2992
    %v3315 = vunpack.c.l.b16 %v2993
    %v3316 = vunpack.c.l.b16 %v2994
    %v3317 = vunpack.c.l.b16 %v2995
    %v3318 = vunpack.c.l.b16 %v2996
    %v3319 = vunpack.c.l.b16 %v2997
    %v3320 = vunpack.c.l.b16 %v2998
    %v3321 = vunpack.c.l.b16 %v2999
    %v3322 = vunpack.c.l.b16 %v3000
    %v3323 = vunpack.c.l.b16 %v3001
    %v3324 = vunpack.c.l.b16 %v3002
    %v3325 = vunpack.c.l.b16 %v3003
    %v3326 = vunpack.c.l.b16 %v3004
    %v3327 = vunpack.c.l.b16 %v3005
    %v3328 = vunpack.c.l.b16 %v3006
    %v3329 = vunpack.c.l.b16 %v3007
    %v3330 = vunpack.c.l.b16 %v3008
    %v3331 = vunpack.c.l.b16 %v3009
    %v3332 = vunpack.c.l.b16 %v3010
    %v3333 = vunpack.c.l.b16 %v3011
    %v3334 = vunpack.c.l.b16 %v3012
    %v3335 = vunpack.c.l.b16 %v3013
    %v3336 = vunpack.c.l.b16 %v3014
    %v3337 = vunpack.c.l.b16 %v3015
    %v3338 = vunpack.c.l.b16 %v3016
    %v3339 = vunpack.c.l.b16 %v3017
    %v3340 = vunpack.c.l.b16 %v3018
    %v3341 = vunpack.c.l.b16 %v3019
    %v3342 = vunpack.c.l.b16 %v3020
    %v3343 = vunpack.c.l.b16 %v3021
    %v3344 = vunpack.c.l.b16 %v3022
    %v3345 = vunpack.c.l.b16 %v3023
    %v3346 = vunpack.c.l.b16 %v3024
    %v3347 = vunpack.c.l.b16 %v3025
    %v3348 = vunpack.c.l.b16 %v3026
    %v3349 = vunpack.c.l.b16 %v3027
    %v3350 = vunpack.c.l.b16 %v3028
    %v3351 = vunpack.c.l.b16 %v3029
    %v3352 = vunpack.c.l.b16 %v3030
    %v3353 = vunpack.c.l.b16 %v3031
    %v3354 = vunpack.c.l.b16 %v3032
    %v3355 = vunpack.c.l.b16 %v3033
    %v3356 = vunpack.c.l.b16 %v3034
    %v3357 = vunpack.c.l.b16 %v3035
    %v3358 = vunpack.c.l.b16 %v3036
    %v3359 = vunpack.c.l.b16 %v3037
    %v3360 = vunpack.c.l.b16 %v3038
    %v3361 = vunpack.c.l.b16 %v3039
    %v3362 = vunpack.c.l.b16 %v3040
    %v3363 = vunpack.c.l.b16 %v3041
    %v3364 = vunpack.c.l.b16 %v3042
    %v3365 = vunpack.c.l.b16 %v3043
    %v3366 = vunpack.c.l.b16 %v3044
    %v3367 = vunpack.c.l.b16 %v3045
    %v3368 = vunpack.c.l.b16 %v3046
    %v3369 = vunpack.c.l.b16 %v3047
    %v3370 = vunpack.c.l.b16 %v3048
    %v3371 = vunpack.c.l.b16 %v3049
    %v3372 = vunpack.c.l.b16 %v3050
    %v3373 = vunpack.c.l.b16 %v3051
    %v3374 = vunpack.c.l.b16 %v3052
    %v3375 = vunpack.c.l.b16 %v3053
    %v3376 = vunpack.c.l.b16 %v3054
    %v3377 = vunpack.c.l.b16 %v3055
    %v3378 = vunpack.c.l.b16 %v3056
    %v3379 = vunpack.c.l.b16 %v3057
    %v3380 = vunpack.c.l.b16 %v3058
    %v3381 = vunpack.c.l.b16 %v3059
    %v3382 = vunpack.c.l.b16 %v3060
    %v3383 = vunpack.c.l.b16 %v3061
    %v3384 = vunpack.c.l.b16 %v3062
    %v3385 = vunpack.c.l.b16 %v3063
    %v3386 = vunpack.c.l.b16 %v3064
    %v3387 = vunpack.c.l.b16 %v3065
    %v3388 = vunpack.c.l.b16 %v3066
    %v3389 = vunpack.c.l.b16 %v3067
    %v3390 = vunpack.c.l.b16 %v3068
    %v3391 = vunpack.c.l.b16 %v3069
    %v3392 = vunpack.c.l.b16 %v3070
    %v3393 = vunpack.c.l.b16 %v3071
    %v3394 = vunpack.c.l.b16 %v3072
    %v3395 = vunpack.c.l.b16 %v3073
    %v3396 = vunpack.c.l.b16 %v3074
    %v3397 = vunpack.c.l.b16 %v3075
    %v3398 = vunpack.c.l.b16 %v3076
    %v3399 = vunpack.c.l.b16 %v3077
    %v3400 = vunpack.c.l.b16 %v3078
    %v3401 = vunpack.c.l.b16 %v3079
    %v3402 = vunpack.c.l.b16 %v3080
    %v3403 = vunpack.c.l.b16 %v3081
    %v3404 = vunpack.c.l.b16 %v3082
    %v3405 = vunpack.c.l.b16 %v3083
    %v3406 = vunpack.c.l.b16 %v3084
    %v3407 = vunpack.c.l.b16 %v3085
    %v3408 = vunpack.c.l.b16 %v3086
    %v3409 = vunpack.c.l.b16 %v3087
    %v3410 = vunpack.c.l.b16 %v3088
    %v3411 = vunpack.c.l.b16 %v3089
    %v3412 = vunpack.c.l.b16 %v3090
    %v3413 = vunpack.c.l.b16 %v3091
    %v3414 = vunpack.c.l.b16 %v3092
    %v3415 = vunpack.c.l.b16 %v3093
    %v3416 = vunpack.c.l.b16 %v3094
    %v3417 = vunpack.c.l.b16 %v3095
    %v3418 = vunpack.c.l.b16 %v3096
    %v3419 = vunpack.c.l.b16 %v3097
    %v3420 = vunpack.c.l.b16 %v3098
    %v3421 = vunpack.c.l.b16 %v3099
    %v3422 = vunpack.c.l.b16 %v3100
    %v3423 = vunpack.c.l.b16 %v3101
    %v3424 = vunpack.c.l.b16 %v3102
    %v3425 = vunpack.c.l.b16 %v3103
    %v3426 = vunpack.c.l.b16 %v3104
    %v3427 = vunpack.c.l.b16 %v3105
    %v3428 = vunpack.c.l.b16 %v3106
    %v3429 = vunpack.c.l.b16 %v3107
    %v3430 = vunpack.c.l.b16 %v3108
    %v3431 = vunpack.c.l.b16 %v3109
    %v3432 = vunpack.c.l.b16 %v3110
    %v3433 = vunpack.c.l.b16 %v3111
    %v3434 = vunpack.c.l.b16 %v3112
    %v3435 = vunpack.c.l.b16 %v3113
    %v3436 = vunpack.c.l.b16 %v3114
    %v3437 = vunpack.c.l.b16 %v3115
    %v3438 = vunpack.c.l.b16 %v3116
    %v3439 = vunpack.c.l.b16 %v3117
    %v3440 = vunpack.c.l.b16 %v3118
    %v3441 = vunpack.c.l.b16 %v3119
    %v3442 = vunpack.c.l.b16 %v3120
    %v3443 = vunpack.c.l.b16 %v3121
    %v3444 = vunpack.c.l.b16 %v3122
    %v3445 = vunpack.c.l.b16 %v3123
    %v3446 = vunpack.c.l.b16 %v3124
    %v3447 = vunpack.c.l.b16 %v3125
    %v3448 = vunpack.c.l.b16 %v3126
    %v3449 = vunpack.c.l.b16 %v3127
    %v3450 = vunpack.c.l.b16 %v3128
    %v3451 = vunpack.c.l.b16 %v3129
    %v3452 = vunpack.c.l.b16 %v3130
    %v3453 = vunpack.c.l.b16 %v3131
    %v3454 = vunpack.c.l.b16 %v3132
    %v3455 = vunpack.c.l.b16 %v3133
    %v3456 = vunpack.c.l.b16 %v3134
    %v3457 = vunpack.c.l.b16 %v3135
    %v3458 = vunpack.c.l.b16 %v3136
    %v3459 = vunpack.c.l.b16 %v3137
    %v3460 = vunpack.c.l.b16 %v3138
    %v3461 = vunpack.c.l.b16 %v3139
    %v3462 = vunpack.c.l.b16 %v3140
    %v3463 = vunpack.c.l.b16 %v3141
    %v3464 = vunpack.c.l.b16 %v3142
    %v3465 = vpack.c.b16 %v3306, %v3305
    %v3466 = vpack.c.b16 %v3308, %v3307
    %v3467 = vpack.c.b16 %v3310, %v3309
    %v3468 = vpack.c.b16 %v3312, %v3311
    %v3469 = vpack.c.b16 %v3314, %v3313
    %v3470 = vpack.c.b16 %v3316, %v3315
    %v3471 = vpack.c.b16 %v3318, %v3317
    %v3472 = vpack.c.b16 %v3320, %v3319
    %v3473 = vpack.c.b16 %v3322, %v3321
    %v3474 = vpack.c.b16 %v3324, %v3323
    %v3475 = vpack.c.b16 %v3326, %v3325
    %v3476 = vpack.c.b16 %v3328, %v3327
    %v3477 = vpack.c.b16 %v3330, %v3329
    %v3478 = vpack.c.b16 %v3332, %v3331
    %v3479 = vpack.c.b16 %v3334, %v3333
    %v3480 = vpack.c.b16 %v3336, %v3335
    %v3481 = vpack.c.b16 %v3338, %v3337
    %v3482 = vpack.c.b16 %v3340, %v3339
    %v3483 = vpack.c.b16 %v3342, %v3341
    %v3484 = vpack.c.b16 %v3344, %v3343
    %v3485 = vpack.c.b16 %v3346, %v3345
    %v3486 = vpack.c.b16 %v3348, %v3347
    %v3487 = vpack.c.b16 %v3350, %v3349
    %v3488 = vpack.c.b16 %v3352, %v3351
    %v3489 = vpack.c.b16 %v3354, %v3353
    %v3490 = vpack.c.b16 %v3356, %v3355
    %v3491 = vpack.c.b16 %v3358, %v3357
    %v3492 = vpack.c.b16 %v3360, %v3359
    %v3493 = vpack.c.b16 %v3362, %v3361
    %v3494 = vpack.c.b16 %v3364, %v3363
    %v3495 = vpack.c.b16 %v3366, %v3365
    %v3496 = vpack.c.b16 %v3368, %v3367
    %v3497 = vpack.c.b16 %v3370, %v3369
    %v3498 = vpack.c.b16 %v3372, %v3371
    %v3499 = vpack.c.b16 %v3374, %v3373
    %v3500 = vpack.c.b16 %v3376, %v3375
    %v3501 = vpack.c.b16 %v3378, %v3377
    %v3502 = vpack.c.b16 %v3380, %v3379
    %v3503 = vpack.c.b16 %v3382, %v3381
    %v3504 = vpack.c.b16 %v3384, %v3383
    %v3505 = vpack.c.b16 %v3386, %v3385
    %v3506 = vpack.c.b16 %v3388, %v3387
    %v3507 = vpack.c.b16 %v3390, %v3389
    %v3508 = vpack.c.b16 %v3392, %v3391
    %v3509 = vpack.c.b16 %v3394, %v3393
    %v3510 = vpack.c.b16 %v3396, %v3395
    %v3511 = vpack.c.b16 %v3398, %v3397
    %v3512 = vpack.c.b16 %v3400, %v3399
    %v3513 = vpack.c.b16 %v3402, %v3401
    %v3514 = vpack.c.b16 %v3404, %v3403
    %v3515 = vpack.c.b16 %v3406, %v3405
    %v3516 = vpack.c.b16 %v3408, %v3407
    %v3517 = vpack.c.b16 %v3410, %v3409
    %v3518 = vpack.c.b16 %v3412, %v3411
    %v3519 = vpack.c.b16 %v3414, %v3413
    %v3520 = vpack.c.b16 %v3416, %v3415
    %v3521 = vpack.c.b16 %v3418, %v3417
    %v3522 = vpack.c.b16 %v3420, %v3419
    %v3523 = vpack.c.b16 %v3422, %v3421
    %v3524 = vpack.c.b16 %v3424, %v3423
    %v3525 = vpack.c.b16 %v3426, %v3425
    %v3526 = vpack.c.b16 %v3428, %v3427
    %v3527 = vpack.c.b16 %v3430, %v3429
    %v3528 = vpack.c.b16 %v3432, %v3431
    %v3529 = vpack.c.b16 %v3434, %v3433
    %v3530 = vpack.c.b16 %v3436, %v3435
    %v3531 = vpack.c.b16 %v3438, %v3437
    %v3532 = vpack.c.b16 %v3440, %v3439
    %v3533 = vpack.c.b16 %v3442, %v3441
    %v3534 = vpack.c.b16 %v3444, %v3443
    %v3535 = vpack.c.b16 %v3446, %v3445
    %v3536 = vpack.c.b16 %v3448, %v3447
    %v3537 = vpack.c.b16 %v3450, %v3449
    %v3538 = vpack.c.b16 %v3452, %v3451
    %v3539 = vpack.c.b16 %v3454, %v3453
    %v3540 = vpack.c.b16 %v3456, %v3455
    %v3541 = vpack.c.b16 %v3458, %v3457
    %v3542 = vpack.c.b16 %v3460, %v3459
    %v3543 = vpack.c.b16 %v3462, %v3461
    %v3544 = vpack.c.b16 %v3464, %v3463
    %3625 = vmatpush.bf16.msra.mxu0 %v3472
    %3626 = vmatpush.bf16.msra.mxu0 %v3471
    %3627 = vmatpush.bf16.msra.mxu0 %v3470
    %3628 = vmatpush.bf16.msra.mxu0 %v3469
    %3629 = vmatpush.bf16.msra.mxu0 %v3468
    %3630 = vmatpush.bf16.msra.mxu0 %v3467
    %3631 = vmatpush.bf16.msra.mxu0 %v3466
    %3632 = vmatpush.bf16.msra.mxu0 %v3465
    %3633 = vmatmul.bf16.gmra.mxu0 %v2959
    %v3634 = vpop.f32.mrf.mxu0
    %v3635 = vadd.f32 %v3144, %v3634
    %v3636 = vpop.f32.mrf.mxu0
    %3637 = vdwg.mxu0
    %3638 = vmatpush.bf16.msra.mxu0 %v3480
    %3639 = vmatpush.bf16.msra.mxu0 %v3479
    %3640 = vmatpush.bf16.msra.mxu0 %v3478
    %3641 = vmatpush.bf16.msra.mxu0 %v3477
    %3642 = vmatpush.bf16.msra.mxu0 %v3476
    %3643 = vmatpush.bf16.msra.mxu0 %v3475
    %3644 = vmatpush.bf16.msra.mxu0 %v3474
    %3645 = vmatpush.bf16.msra.mxu0 %v3473
    %3646 = vmatmul.bf16.gmra.mxu0 %v2960
    %v3647 = vpop.f32.mrf.mxu0
    %v3648 = vadd.f32 %v3635, %v3647
    %v3649 = vpop.f32.mrf.mxu0
    %3650 = vdwg.mxu0
    %3651 = vmatpush.bf16.msra.mxu0 %v3488
    %3652 = vmatpush.bf16.msra.mxu0 %v3487
    %3653 = vmatpush.bf16.msra.mxu0 %v3486
    %3654 = vmatpush.bf16.msra.mxu0 %v3485
    %3655 = vmatpush.bf16.msra.mxu0 %v3484
    %3656 = vmatpush.bf16.msra.mxu0 %v3483
    %3657 = vmatpush.bf16.msra.mxu0 %v3482
    %3658 = vmatpush.bf16.msra.mxu0 %v3481
    %3659 = vmatmul.bf16.gmra.mxu0 %v2964
    %v3660 = vpop.f32.mrf.mxu0
    %v3661 = vadd.f32 %v3648, %v3660
    %v3662 = vpop.f32.mrf.mxu0
    %3663 = vdwg.mxu0
    %3664 = vmatpush.bf16.msra.mxu0 %v3496
    %3665 = vmatpush.bf16.msra.mxu0 %v3495
    %3666 = vmatpush.bf16.msra.mxu0 %v3494
    %3667 = vmatpush.bf16.msra.mxu0 %v3493
    %3668 = vmatpush.bf16.msra.mxu0 %v3492
    %3669 = vmatpush.bf16.msra.mxu0 %v3491
    %3670 = vmatpush.bf16.msra.mxu0 %v3490
    %3671 = vmatpush.bf16.msra.mxu0 %v3489
    %3672 = vmatmul.bf16.gmra.mxu0 %v2967
    %v3673 = vpop.f32.mrf.mxu0
    %v3674 = vadd.f32 %v3661, %v3673
    %v3675 = vpop.f32.mrf.mxu0
    %3676 = vdwg.mxu0
    %3677 = vmatpush.bf16.msra.mxu0 %v3504
    %3678 = vmatpush.bf16.msra.mxu0 %v3503
    %3679 = vmatpush.bf16.msra.mxu0 %v3502
    %3680 = vmatpush.bf16.msra.mxu0 %v3501
    %3681 = vmatpush.bf16.msra.mxu0 %v3500
    %3682 = vmatpush.bf16.msra.mxu0 %v3499
    %3683 = vmatpush.bf16.msra.mxu0 %v3498
    %3684 = vmatpush.bf16.msra.mxu0 %v3497
    %3685 = vmatmul.bf16.gmra.mxu0 %v2971
    %v3686 = vpop.f32.mrf.mxu0
    %v3687 = vadd.f32 %v3674, %v3686
    %v3688 = vpop.f32.mrf.mxu0
    %3689 = vdwg.mxu0
    %3690 = vmatpush.bf16.msra.mxu0 %v3512
    %3691 = vmatpush.bf16.msra.mxu0 %v3511
    %3692 = vmatpush.bf16.msra.mxu0 %v3510
    %3693 = vmatpush.bf16.msra.mxu0 %v3509
    %3694 = vmatpush.bf16.msra.mxu0 %v3508
    %3695 = vmatpush.bf16.msra.mxu0 %v3507
    %3696 = vmatpush.bf16.msra.mxu0 %v3506
    %3697 = vmatpush.bf16.msra.mxu0 %v3505
    %3698 = vmatmul.bf16.gmra.mxu0 %v2972
    %v3699 = vpop.f32.mrf.mxu0
    %v3700 = vadd.f32 %v3687, %v3699
    %v3701 = vpop.f32.mrf.mxu0
    %3702 = vdwg.mxu0
    %3703 = vmatpush.bf16.msra.mxu0 %v3520
    %3704 = vmatpush.bf16.msra.mxu0 %v3519
    %3705 = vmatpush.bf16.msra.mxu0 %v3518
    %3706 = vmatpush.bf16.msra.mxu0 %v3517
    %3707 = vmatpush.bf16.msra.mxu0 %v3516
    %3708 = vmatpush.bf16.msra.mxu0 %v3515
    %3709 = vmatpush.bf16.msra.mxu0 %v3514
    %3710 = vmatpush.bf16.msra.mxu0 %v3513
    %3711 = vmatmul.bf16.gmra.mxu0 %v2975
    %v3712 = vpop.f32.mrf.mxu0
    %v3713 = vadd.f32 %v3700, %v3712
    %v3714 = vpop.f32.mrf.mxu0
    %3715 = vdwg.mxu0
    %3716 = vmatpush.bf16.msra.mxu0 %v3528
    %3717 = vmatpush.bf16.msra.mxu0 %v3527
    %3718 = vmatpush.bf16.msra.mxu0 %v3526
    %3719 = vmatpush.bf16.msra.mxu0 %v3525
    %3720 = vmatpush.bf16.msra.mxu0 %v3524
    %3721 = vmatpush.bf16.msra.mxu0 %v3523
    %3722 = vmatpush.bf16.msra.mxu0 %v3522
    %3723 = vmatpush.bf16.msra.mxu0 %v3521
    %3724 = vmatmul.bf16.gmra.mxu0 %v2976
    %v3725 = vpop.f32.mrf.mxu0
    %v3726 = vadd.f32 %v3713, %v3725
    %v3727 = vpop.f32.mrf.mxu0
    %3728 = vdwg.mxu0
    %3729 = vmatpush.bf16.msra.mxu0 %v3536
    %3730 = vmatpush.bf16.msra.mxu0 %v3535
    %3731 = vmatpush.bf16.msra.mxu0 %v3534
    %3732 = vmatpush.bf16.msra.mxu0 %v3533
    %3733 = vmatpush.bf16.msra.mxu0 %v3532
    %3734 = vmatpush.bf16.msra.mxu0 %v3531
    %3735 = vmatpush.bf16.msra.mxu0 %v3530
    %3736 = vmatpush.bf16.msra.mxu0 %v3529
    %3737 = vmatmul.bf16.gmra.mxu0 %v2979
    %v3738 = vpop.f32.mrf.mxu0
    %v3739 = vadd.f32 %v3726, %v3738
    %v3740 = vpop.f32.mrf.mxu0
    %3741 = vdwg.mxu0
    %3742 = vmatpush.bf16.msra.mxu0 %v3544
    %3743 = vmatpush.bf16.msra.mxu0 %v3543
    %3744 = vmatpush.bf16.msra.mxu0 %v3542
    %3745 = vmatpush.bf16.msra.mxu0 %v3541
    %3746 = vmatpush.bf16.msra.mxu0 %v3540
    %3747 = vmatpush.bf16.msra.mxu0 %v3539
    %3748 = vmatpush.bf16.msra.mxu0 %v3538
    %3749 = vmatpush.bf16.msra.mxu0 %v3537
    %3750 = vmatmul.bf16.gmra.mxu0 %v2980
    %v3751 = vpop.f32.mrf.mxu0
    %v3752 = vadd.f32 %v3739, %v3751
    %v3753 = vpop.f32.mrf.mxu0
    %3754 = vdwg.mxu0
    %vm3755 = vcmask 24576
    %3756 = vst.msk [vmem:[#allocation5] sm:$0x1] %vm3755, %v3752
    // Predicated region
    $region30: #{tpu_custom_call.1} parent=1 // pred_check
      _
    $region31: #{tpu_custom_call.1} parent=1 // pred_check_branch
      %3758 = sbr.rel (0) target = $region33
    $region32: #{tpu_custom_call.1} parent=1 // pred_region
      %3760 = vsyncadd [#allocation4], 0
      %s3762 = sshll.u32 [#allocation5], 4
      %s3763 = int_to_ptr.vmem [resolvable:$true] %s3762
      %s3764 = sshll.u32 %s6, 4
      %s3765 = int_to_ptr.hbm [resolvable:$true] %s3764
      %3767 = dma.vmem_to_hbm [thread:$0]  %s3763, 16, %s3765, [#allocation4]
    $region33: #{tpu_custom_call.1} parent=1 // pred_fallthru
      _
    // Predicated region
    $region34: #{tpu_custom_call.1} parent=1 // pred_check
      _
    $region35: #{tpu_custom_call.1} parent=1 // pred_check_branch
      %3769 = sbr.rel (0) target = $region37
    $region36: #{tpu_custom_call.1} parent=1 // pred_region
      %3771 = dma.done [#allocation4], 16
    $region37: #{tpu_custom_call.1} parent=1 // pred_fallthru
      _
    %3772 = vsyncpa [#allocation3], 1
    %3773 = vsyncpa [#allocation4], 1

</llo_original>
